<compile_context>
chip_gen: v6e
topology: v6e:2x2x1
jax: 0.10.0
libtpu: 0.0.40
codegen_flags: <defaults>
</compile_context>

<pallas_src>
import functools
import math

import jax
import jax.numpy as jnp
import numpy as np
from jax import lax
from jax.experimental import pallas as pl
from jax.experimental.pallas import tpu as pltpu


DEFAULT_KV_TILE = 256  # full MXU width on v6e/v7x; also fine on v5e


def _layernorm(v, g, b, eps=1e-5):
    mu = jnp.mean(v, axis=-1, keepdims=True)
    var = jnp.mean((v - mu) ** 2, axis=-1, keepdims=True)
    return (v - mu) * lax.rsqrt(var + eps) * g + b


def _attention_head(qh, kh, vh, *, causal, kv_tile, compute_dtype):
    """Online-softmax attention for one head.

    qh/kh/vh: (Bblk, T, hs) in compute_dtype.  Returns (Bblk, T, hs) f32.
    Normalization is deferred: the probability tile is never normalized; the
    running row-sum is divided into the (T, hs) output once at the end.
    """
    Bblk, T, hs = qh.shape
    n_tiles = T // kv_tile
    row = lax.broadcasted_iota(jnp.int32, (T, kv_tile), 0)

    m = jnp.full((Bblk, T, 1), -jnp.inf, jnp.float32)
    l = jnp.zeros((Bblk, T, 1), jnp.float32)
    acc = jnp.zeros((Bblk, T, hs), jnp.float32)
    # Static KV-tile loop: all slices are static; live scores are only
    # (Bblk, T, kv_tile) f32.  Causal rows always contain the diagonal, so the
    # -inf mask never produces a fully-masked first tile (no 0/0 NaN).
    for t in range(n_tiles):
        ksl = slice(t * kv_tile, (t + 1) * kv_tile)
        k_t = kh[:, ksl, :]
        v_t = vh[:, ksl, :]
        s = jnp.einsum("bqd,bkd->bqk", qh, k_t,
                       preferred_element_type=jnp.float32)      # f32 scores
        if causal:
            col = lax.broadcasted_iota(jnp.int32, (T, kv_tile), 1) + t * kv_tile
            s = jnp.where((col <= row)[None, :, :], s, -jnp.inf)
        m_new = jnp.maximum(m, jnp.max(s, axis=-1, keepdims=True))
        alpha = jnp.exp(m - m_new)
        p = jnp.exp(s - m_new)                                   # f32 exp (v5e-safe)
        l = alpha * l + jnp.sum(p, axis=-1, keepdims=True)
        acc = alpha * acc + jnp.einsum("bqk,bkd->bqd", p.astype(compute_dtype),
                                       v_t, preferred_element_type=jnp.float32)
        m = m_new
    # Deferred normalization: one multiply over (T, hs) instead of (T, T).
    return acc * pl.reciprocal(l, approx=True)


def block_kernel(num_heads, head_size, causal, kv_tile, compute_dtype,
                 x_ref, state_ref,
                 ln1_g_ref, ln1_b_ref,
                 wq_ref, wk_ref, wv_ref,
                 wproj_ref, bproj_ref,
                 ln2_g_ref, ln2_b_ref,
                 w1_ref, b1_ref,
                 w3_ref, b3_ref,
                 xout_ref, stateout_ref):
    Bblk, T, E = x_ref.shape
    H = state_ref.shape[-1]
    R = Bblk * T

    x2d = x_ref[...].reshape(R, E)            # f32 rows
    state2d = state_ref[...].reshape(R, H)    # f32 rows

    # ---- self-attention on ln1(x); 1/sqrt(hs) pre-folded into Wq ----------
    xn1 = _layernorm(x2d, ln1_g_ref[0], ln1_b_ref[0])
    xn1c = xn1.astype(compute_dtype)
    q = jnp.dot(xn1c, wq_ref[...],
                preferred_element_type=jnp.float32).astype(compute_dtype)
    k = jnp.dot(xn1c, wk_ref[...],
                preferred_element_type=jnp.float32).astype(compute_dtype)
    v = jnp.dot(xn1c, wv_ref[...],
                preferred_element_type=jnp.float32).astype(compute_dtype)

    wproj = wproj_ref[...]
    attn = jnp.zeros((R, E), jnp.float32)
    # Heads accumulate directly into the output projection: no per-head
    # lane-masked stores into a scratch slab and no separate concat matmul.
    # TODO(synk): for 16+ heads convert this to lax.fori_loop over pl.ds head
    # slices to bound live ranges; a handful of heads is fine unrolled.
    for h in range(num_heads):
        sl = slice(h * head_size, (h + 1) * head_size)
        qh = q[:, sl].reshape(Bblk, T, head_size)
        kh = k[:, sl].reshape(Bblk, T, head_size)
        vh = v[:, sl].reshape(Bblk, T, head_size)
        o = _attention_head(qh, kh, vh, causal=causal, kv_tile=kv_tile,
                            compute_dtype=compute_dtype)
        attn = attn + jnp.dot(o.reshape(R, head_size).astype(compute_dtype),
                              wproj[sl, :], preferred_element_type=jnp.float32)
    x2 = x2d + attn + bproj_ref[0]

    # ---- feed-forward with compression state ------------------------------
    xn2 = _layernorm(x2, ln2_g_ref[0], ln2_b_ref[0])
    h_pre = (jnp.dot(xn2.astype(compute_dtype), w1_ref[...],
                     preferred_element_type=jnp.float32)
             + b1_ref[0] + state2d)
    h_act = jnp.tanh(h_pre)                                     # f32 tanh
    y = (jnp.dot(h_act.astype(compute_dtype), w3_ref[...],
                 preferred_element_type=jnp.float32) + b3_ref[0])

    xout_ref[...] = (x2 + y).reshape(Bblk, T, E)
    stateout_ref[...] = h_act.reshape(Bblk, T, H)
    # TODO(synk): dropout layers are identity here (eval mode / dropout=0).


def _vmem_limit_bytes():
    """Generation-aware scoped VMEM limit: ~100 MiB on v5e/v6e, ~56 MiB on v7x."""
    cap = 64 * 1024 * 1024  # conservative default if the query fails (v7x size)
    try:
        info = pltpu.get_tpu_info()
        cap = int(getattr(info, "vmem_capacity_bytes", cap))
    except Exception:
        pass
    return int(min(max(cap - 8 * 1024 * 1024, 16 * 1024 * 1024),
                   100 * 1024 * 1024))


def _pick_kv_tile(T, kv_tile=DEFAULT_KV_TILE):
    if T <= kv_tile:
        return T
    if T % kv_tile == 0:
        return kv_tile
    return T  # awkward sequence lengths fall back to full scores


def _pick_block_b(B, T, E, H, kv_tile, vmem_limit, target_rows=512):
    """Largest divisor of B with block_b*T near target_rows and within a rough
    VMEM budget for the live f32 intermediates (scores tile + row slabs)."""
    per_b = 4 * T * (kv_tile        # live score/probability tile (one head)
                     + 6 * E        # x, xn1, q, k, v, attn accumulator
                     + 3 * H)       # state, h_pre/h_act, FFN intermediates
    budget = max(vmem_limit // 2, 1)   # leave room for weights + pipelined IO
    cap_rows = max(1, target_rows // max(T, 1))
    cap_mem = max(1, budget // max(per_b, 1))
    cap = max(1, min(B, cap_rows, cap_mem))
    for d in range(cap, 0, -1):
        if B % d == 0:
            return d
    return 1


def prepare_params(params, *, num_heads, compute_dtype=jnp.bfloat16):
    """One-time parameter prep (hoisted out of the per-step call): fold the
    1/sqrt(head_size) attention scale into Wq and cast all MXU weight operands
    to the compute dtype.  Biases / LayerNorm params stay f32."""
    (ln1_g, ln1_b, wq, wk, wv, wproj, bproj,
     ln2_g, ln2_b, w1, b1, w3, b3) = params
    E = wq.shape[0]
    head_size = E // num_heads
    scale = 1.0 / math.sqrt(head_size)
    return (ln1_g.astype(jnp.float32), ln1_b.astype(jnp.float32),
            (wq.astype(jnp.float32) * scale).astype(compute_dtype),
            wk.astype(compute_dtype), wv.astype(compute_dtype),
            wproj.astype(compute_dtype), bproj.astype(jnp.float32),
            ln2_g.astype(jnp.float32), ln2_b.astype(jnp.float32),
            w1.astype(compute_dtype), b1.astype(jnp.float32),
            w3.astype(compute_dtype), b3.astype(jnp.float32))


def block_with_compression_state(x, state, prepped_params, *, num_heads,
                                 causal, compute_dtype=jnp.bfloat16,
                                 block_b=None, kv_tile=None,
                                 single_buffer_weights=True):
    (ln1_g, ln1_b, wq, wk, wv, wproj, bproj,
     ln2_g, ln2_b, w1, b1, w3, b3) = prepped_params
    B, T, E = x.shape
    H = state.shape[-1]
    head_size = E // num_heads
    vmem_limit = _vmem_limit_bytes()
    if kv_tile is None:
        kv_tile = _pick_kv_tile(T)
    if block_b is None:
        block_b = _pick_block_b(B, T, E, H, kv_tile, vmem_limit)
    assert B % block_b == 0
    nb = B // block_b

    kernel = functools.partial(block_kernel, num_heads, head_size, causal,
                               kv_tile, compute_dtype)
    args = (x, state, ln1_g, ln1_b, wq, wk, wv, wproj, bproj,
            ln2_g, ln2_b, w1, b1, w3, b3)

    def build(use_single_buffer):
        def const_spec(shp):
            idx = lambda i: tuple(0 for _ in shp)
            if use_single_buffer:
                # Block index never changes across the grid -> single-buffer
                # the resident weights/biases instead of double-buffering.
                return pl.BlockSpec(shp, idx, pipeline_mode=pl.Buffered(1))
            return pl.BlockSpec(shp, idx)

        in_specs = [
            pl.BlockSpec((block_b, T, E), lambda i: (i, 0, 0)),          # x
            pl.BlockSpec((block_b, T, H), lambda i: (i, 0, 0)),          # state
            const_spec((1, E)), const_spec((1, E)),                      # ln1 g,b
            const_spec((E, E)), const_spec((E, E)), const_spec((E, E)),  # Wq*scale, Wk, Wv
            const_spec((E, E)), const_spec((1, E)),                      # Wproj^T, bproj
            const_spec((1, E)), const_spec((1, E)),                      # ln2 g,b
            const_spec((E, H)), const_spec((1, H)),                      # W1^T, b1
            const_spec((H, E)), const_spec((1, E)),                      # W3^T, b3
        ]
        out_specs = [
            pl.BlockSpec((block_b, T, E), lambda i: (i, 0, 0)),
            pl.BlockSpec((block_b, T, H), lambda i: (i, 0, 0)),
        ]
        return pl.pallas_call(
            kernel,
            out_shape=(jax.ShapeDtypeStruct((B, T, E), jnp.float32),
                       jax.ShapeDtypeStruct((B, T, H), jnp.float32)),
            grid=(nb,),
            in_specs=in_specs,
            out_specs=out_specs,
            # Note: donates x/state HBM buffers for the outputs.
            input_output_aliases={0: 0, 1: 1},
            compiler_params=pltpu.CompilerParams(
                dimension_semantics=("parallel",),
                vmem_limit_bytes=vmem_limit),
        )

    if single_buffer_weights:
        try:
            return build(True)(*args)
        except Exception:
            # pipeline_mode=pl.Buffered(1) unsupported on this jax/libtpu ->
            # fall back to default double-buffered weight specs.
            pass
    return build(False)(*args)


def reference(x, state, params, *, num_heads, causal):
    (ln1_g, ln1_b, wq, wk, wv, wproj, bproj,
     ln2_g, ln2_b, w1, b1, w3, b3) = params
    B, T, E = x.shape
    hs = E // num_heads
    xn1 = _layernorm(x, ln1_g[0], ln1_b[0])
    q = xn1 @ wq
    k = xn1 @ wk
    v = xn1 @ wv
    qh = q.reshape(B, T, num_heads, hs).transpose(0, 2, 1, 3)
    kh = k.reshape(B, T, num_heads, hs).transpose(0, 2, 1, 3)
    vh = v.reshape(B, T, num_heads, hs).transpose(0, 2, 1, 3)
    s = jnp.einsum("bhqd,bhkd->bhqk", qh, kh) / math.sqrt(hs)
    if causal:
        mask = jnp.tril(jnp.ones((T, T), bool))
        s = jnp.where(mask, s, -jnp.inf)
    p = jax.nn.softmax(s, axis=-1)
    o = jnp.einsum("bhqk,bhkd->bhqd", p, vh).transpose(0, 2, 1, 3).reshape(B, T, E)
    attn = o @ wproj + bproj[0]
    x2 = x + attn
    xn2 = _layernorm(x2, ln2_g[0], ln2_b[0])
    h = jnp.tanh(xn2 @ w1 + b1[0] + state)
    y = h @ w3 + b3[0]
    return x2 + y, h


if __name__ == "__main__":
    B, T, E = 2, 8, 32
    num_heads = 4
    H = 4 * E          # linear_hidden_size default = 4 * embedding_size
    causal = True

    key = jax.random.PRNGKey(0)
    ks = jax.random.split(key, 16)

    def lin_w(k, fan_in, fan_out):
        # PyTorch-style uniform(-1/sqrt(fan_in), 1/sqrt(fan_in)); pre-transposed (in, out).
        bound = 1.0 / math.sqrt(fan_in)
        return jax.random.uniform(k, (fan_in, fan_out), jnp.float32, -bound, bound)

    def lin_b(k, fan_in, fan_out):
        bound = 1.0 / math.sqrt(fan_in)
        return jax.random.uniform(k, (1, fan_out), jnp.float32, -bound, bound)

    params = (
        jnp.ones((1, E), jnp.float32),           # ln1 gamma
        jnp.zeros((1, E), jnp.float32),          # ln1 beta
        lin_w(ks[0], E, E),                      # Wq  (bias=False)
        lin_w(ks[1], E, E),                      # Wk
        lin_w(ks[2], E, E),                      # Wv
        lin_w(ks[3], E, E),                      # Wproj
        lin_b(ks[4], E, E),                      # bproj
        jnp.ones((1, E), jnp.float32),           # ln2 gamma
        jnp.zeros((1, E), jnp.float32),          # ln2 beta
        lin_w(ks[5], E, H),                      # W1 (net1)
        lin_b(ks[6], E, H),                      # b1
        lin_w(ks[7], H, E),                      # W3 (net3)
        lin_b(ks[8], H, E),                      # b3
    )

    x = jax.random.normal(ks[9], (B, T, E), jnp.float32)
    state = jax.random.normal(ks[10], (B, T, H), jnp.float32) * 0.1

    # Reference first (kernel call donates the x/state HBM buffers).
    x_ref, state_ref = reference(x, state, params,
                                 num_heads=num_heads, causal=causal)
    jax.block_until_ready((x_ref, state_ref))

    prepped = prepare_params(params, num_heads=num_heads)   # one-time prep
    x_out, state_out = block_with_compression_state(
        x, state, prepped, num_heads=num_heads, causal=causal)
    jax.block_until_ready((x_out, state_out))

    # bf16 MXU operands (f32 accumulate / f32 softmax, LN, tanh) vs f32 reference.
    np.testing.assert_allclose(np.asarray(x_out), np.asarray(x_ref),
                               rtol=5e-2, atol=5e-2)
    np.testing.assert_allclose(np.asarray(state_out), np.asarray(state_ref),
                               rtol=5e-2, atol=5e-2)
    print("KERNEL_OK")
</pallas_src>

<mosaic_0001>
module attributes {stable_mosaic.version = 11 : i64} {
  func.func @block_kernel(%arg0: i32, %arg1: memref<2x8x32xf32, #tpu.memory_space<vmem>>, %arg2: memref<2x8x128xf32, #tpu.memory_space<vmem>>, %arg3: memref<1x32xf32, #tpu.memory_space<vmem>>, %arg4: memref<1x32xf32, #tpu.memory_space<vmem>>, %arg5: memref<32x32xbf16, #tpu.memory_space<vmem>>, %arg6: memref<32x32xbf16, #tpu.memory_space<vmem>>, %arg7: memref<32x32xbf16, #tpu.memory_space<vmem>>, %arg8: memref<32x32xbf16, #tpu.memory_space<vmem>>, %arg9: memref<1x32xf32, #tpu.memory_space<vmem>>, %arg10: memref<1x32xf32, #tpu.memory_space<vmem>>, %arg11: memref<1x32xf32, #tpu.memory_space<vmem>>, %arg12: memref<32x128xbf16, #tpu.memory_space<vmem>>, %arg13: memref<1x128xf32, #tpu.memory_space<vmem>>, %arg14: memref<128x32xbf16, #tpu.memory_space<vmem>>, %arg15: memref<1x32xf32, #tpu.memory_space<vmem>>, %arg16: memref<2x8x32xf32, #tpu.memory_space<vmem>>, %arg17: memref<2x8x128xf32, #tpu.memory_space<vmem>>) attributes {dimension_semantics = [#tpu.dimension_semantics<parallel>], iteration_bounds = array<i64: 1>, scalar_prefetch = 0 : i64, scratch_operands = 0 : i64, tpu.core_type = #tpu.core_type<tc>, window_params = [{transform_indices = @transform_0, window_bounds = array<i64: 2, 8, 32>}, {transform_indices = @transform_1, window_bounds = array<i64: 2, 8, 128>}, {pipeline_mode = #tpu.pipeline_mode<synchronous>, transform_indices = @transform_2, window_bounds = array<i64: 1, 32>}, {pipeline_mode = #tpu.pipeline_mode<synchronous>, transform_indices = @transform_3, window_bounds = array<i64: 1, 32>}, {pipeline_mode = #tpu.pipeline_mode<synchronous>, transform_indices = @transform_4, window_bounds = array<i64: 32, 32>}, {pipeline_mode = #tpu.pipeline_mode<synchronous>, transform_indices = @transform_5, window_bounds = array<i64: 32, 32>}, {pipeline_mode = #tpu.pipeline_mode<synchronous>, transform_indices = @transform_6, window_bounds = array<i64: 32, 32>}, {pipeline_mode = #tpu.pipeline_mode<synchronous>, transform_indices = @transform_7, window_bounds = array<i64: 32, 32>}, {pipeline_mode = #tpu.pipeline_mode<synchronous>, transform_indices = @transform_8, window_bounds = array<i64: 1, 32>}, {pipeline_mode = #tpu.pipeline_mode<synchronous>, transform_indices = @transform_9, window_bounds = array<i64: 1, 32>}, {pipeline_mode = #tpu.pipeline_mode<synchronous>, transform_indices = @transform_10, window_bounds = array<i64: 1, 32>}, {pipeline_mode = #tpu.pipeline_mode<synchronous>, transform_indices = @transform_11, window_bounds = array<i64: 32, 128>}, {pipeline_mode = #tpu.pipeline_mode<synchronous>, transform_indices = @transform_12, window_bounds = array<i64: 1, 128>}, {pipeline_mode = #tpu.pipeline_mode<synchronous>, transform_indices = @transform_13, window_bounds = array<i64: 128, 32>}, {pipeline_mode = #tpu.pipeline_mode<synchronous>, transform_indices = @transform_14, window_bounds = array<i64: 1, 32>}, {transform_indices = @transform_15, window_bounds = array<i64: 2, 8, 32>}, {transform_indices = @transform_16, window_bounds = array<i64: 2, 8, 128>}]} {
    %c0 = arith.constant 0 : index
    %c0_0 = arith.constant 0 : index
    %c0_1 = arith.constant 0 : index
    %0 = vector.load %arg1[%c0, %c0_0, %c0_1] : memref<2x8x32xf32, #tpu.memory_space<vmem>>, vector<2x8x32xf32>
    %1 = vector.shape_cast %0 : vector<2x8x32xf32> to vector<16x32xf32>
    %c0_2 = arith.constant 0 : index
    %c0_3 = arith.constant 0 : index
    %c0_4 = arith.constant 0 : index
    %2 = vector.load %arg2[%c0_2, %c0_3, %c0_4] : memref<2x8x128xf32, #tpu.memory_space<vmem>>, vector<2x8x128xf32>
    %3 = vector.shape_cast %2 : vector<2x8x128xf32> to vector<16x128xf32>
    %c0_5 = arith.constant 0 : index
    %c0_6 = arith.constant 0 : index
    %4 = vector.load %arg3[%c0_5, %c0_6] : memref<1x32xf32, #tpu.memory_space<vmem>>, vector<1x32xf32>
    %5 = vector.shape_cast %4 : vector<1x32xf32> to vector<32xf32>
    %c0_7 = arith.constant 0 : index
    %c0_8 = arith.constant 0 : index
    %6 = vector.load %arg4[%c0_7, %c0_8] : memref<1x32xf32, #tpu.memory_space<vmem>>, vector<1x32xf32>
    %7 = vector.shape_cast %6 : vector<1x32xf32> to vector<32xf32>
    %cst = arith.constant dense<0.000000e+00> : vector<16xf32>
    %8 = vector.multi_reduction <add>, %1, %cst [1] : vector<16x32xf32> to vector<16xf32>
    %9 = vector.shape_cast %8 : vector<16xf32> to vector<16x1xf32>
    %cst_9 = arith.constant 3.200000e+01 : f32
    %10 = vector.broadcast %cst_9 : f32 to vector<16x1xf32>
    %11 = arith.divf %9, %10 : vector<16x1xf32>
    %12 = vector.broadcast %11 : vector<16x1xf32> to vector<16x32xf32>
    %13 = arith.subf %1, %12 : vector<16x32xf32>
    %14 = arith.mulf %13, %13 : vector<16x32xf32>
    %cst_10 = arith.constant dense<0.000000e+00> : vector<16xf32>
    %15 = vector.multi_reduction <add>, %14, %cst_10 [1] : vector<16x32xf32> to vector<16xf32>
    %16 = vector.shape_cast %15 : vector<16xf32> to vector<16x1xf32>
    %cst_11 = arith.constant 3.200000e+01 : f32
    %17 = vector.broadcast %cst_11 : f32 to vector<16x1xf32>
    %18 = arith.divf %16, %17 : vector<16x1xf32>
    %19 = vector.broadcast %11 : vector<16x1xf32> to vector<16x32xf32>
    %20 = arith.subf %1, %19 : vector<16x32xf32>
    %cst_12 = arith.constant 9.99999974E-6 : f32
    %21 = vector.broadcast %cst_12 : f32 to vector<16x1xf32>
    %22 = arith.addf %18, %21 : vector<16x1xf32>
    %23 = math.rsqrt %22 : vector<16x1xf32>
    %24 = vector.broadcast %23 : vector<16x1xf32> to vector<16x32xf32>
    %25 = arith.mulf %20, %24 : vector<16x32xf32>
    %26 = vector.shape_cast %5 : vector<32xf32> to vector<1x32xf32>
    %27 = vector.broadcast %26 : vector<1x32xf32> to vector<16x32xf32>
    %28 = arith.mulf %25, %27 : vector<16x32xf32>
    %29 = vector.shape_cast %7 : vector<32xf32> to vector<1x32xf32>
    %30 = vector.broadcast %29 : vector<1x32xf32> to vector<16x32xf32>
    %31 = arith.addf %28, %30 : vector<16x32xf32>
    %32 = arith.truncf %31 : vector<16x32xf32> to vector<16x32xbf16>
    %c0_13 = arith.constant 0 : index
    %c0_14 = arith.constant 0 : index
    %33 = vector.load %arg5[%c0_13, %c0_14] : memref<32x32xbf16, #tpu.memory_space<vmem>>, vector<32x32xbf16>
    %cst_15 = arith.constant dense<0.000000e+00> : vector<16x32xf32>
    %34 = tpu.matmul %32, %33, %cst_15 {dimension_numbers = #tpu.dot_dimension_numbers<[1], [0], [0], [1], [0, 0, 1, 1], [], []>} : vector<16x32xbf16>, vector<32x32xbf16>, vector<16x32xf32> -> vector<16x32xf32>
    %35 = arith.truncf %34 : vector<16x32xf32> to vector<16x32xbf16>
    %c0_16 = arith.constant 0 : index
    %c0_17 = arith.constant 0 : index
    %36 = vector.load %arg6[%c0_16, %c0_17] : memref<32x32xbf16, #tpu.memory_space<vmem>>, vector<32x32xbf16>
    %cst_18 = arith.constant dense<0.000000e+00> : vector<16x32xf32>
    %37 = tpu.matmul %32, %36, %cst_18 {dimension_numbers = #tpu.dot_dimension_numbers<[1], [0], [0], [1], [0, 0, 1, 1], [], []>} : vector<16x32xbf16>, vector<32x32xbf16>, vector<16x32xf32> -> vector<16x32xf32>
    %38 = arith.truncf %37 : vector<16x32xf32> to vector<16x32xbf16>
    %c0_19 = arith.constant 0 : index
    %c0_20 = arith.constant 0 : index
    %39 = vector.load %arg7[%c0_19, %c0_20] : memref<32x32xbf16, #tpu.memory_space<vmem>>, vector<32x32xbf16>
    %cst_21 = arith.constant dense<0.000000e+00> : vector<16x32xf32>
    %40 = tpu.matmul %32, %39, %cst_21 {dimension_numbers = #tpu.dot_dimension_numbers<[1], [0], [0], [1], [0, 0, 1, 1], [], []>} : vector<16x32xbf16>, vector<32x32xbf16>, vector<16x32xf32> -> vector<16x32xf32>
    %41 = arith.truncf %40 : vector<16x32xf32> to vector<16x32xbf16>
    %c0_22 = arith.constant 0 : index
    %c0_23 = arith.constant 0 : index
    %42 = vector.load %arg8[%c0_22, %c0_23] : memref<32x32xbf16, #tpu.memory_space<vmem>>, vector<32x32xbf16>
    %cst_24 = arith.constant 0.000000e+00 : f32
    %43 = vector.broadcast %cst_24 : f32 to vector<16x32xf32>
    %44 = vector.extract_strided_slice %35 {offsets = [0, 0], sizes = [16, 8], strides = [1, 1]} : vector<16x32xbf16> to vector<16x8xbf16>
    %45 = vector.shape_cast %44 : vector<16x8xbf16> to vector<2x8x8xbf16>
    %46 = vector.extract_strided_slice %38 {offsets = [0, 0], sizes = [16, 8], strides = [1, 1]} : vector<16x32xbf16> to vector<16x8xbf16>
    %47 = vector.shape_cast %46 : vector<16x8xbf16> to vector<2x8x8xbf16>
    %48 = vector.extract_strided_slice %41 {offsets = [0, 0], sizes = [16, 8], strides = [1, 1]} : vector<16x32xbf16> to vector<16x8xbf16>
    %49 = vector.shape_cast %48 : vector<16x8xbf16> to vector<2x8x8xbf16>
    %50 = tpu.iota {dimensions = array<i32: 0>} : vector<8x8xi32>
    %cst_25 = arith.constant 0xFF800000 : f32
    %51 = vector.broadcast %cst_25 : f32 to vector<2x8x1xf32>
    %cst_26 = arith.constant 0.000000e+00 : f32
    %52 = vector.broadcast %cst_26 : f32 to vector<2x8x1xf32>
    %cst_27 = arith.constant 0.000000e+00 : f32
    %53 = vector.broadcast %cst_27 : f32 to vector<2x8x8xf32>
    "tpu.trace_start"() <{level = 10 : i32, message = "bqd,bkd->bqk"}> : () -> ()
    %cst_28 = arith.constant dense<0.000000e+00> : vector<2x8x8xf32>
    %54 = tpu.matmul %45, %47, %cst_28 {dimension_numbers = #tpu.dot_dimension_numbers<[2], [2], [1], [1], [0, 0, 0, 1, 1, 1], [0], [0]>} : vector<2x8x8xbf16>, vector<2x8x8xbf16>, vector<2x8x8xf32> -> vector<2x8x8xf32>
    "tpu.trace_stop"() : () -> ()
    %55 = tpu.iota {dimensions = array<i32: 1>} : vector<8x8xi32>
    %c0_i32 = arith.constant 0 : i32
    %56 = vector.broadcast %c0_i32 : i32 to vector<8x8xi32>
    %57 = arith.addi %55, %56 : vector<8x8xi32>
    %58 = arith.cmpi sle, %57, %50 : vector<8x8xi32>
    %59 = vector.shape_cast %58 : vector<8x8xi1> to vector<1x8x8xi1>
    %cst_29 = arith.constant 0xFF800000 : f32
    %60 = vector.shape_cast %59 : vector<1x8x8xi1> to vector<1x8x8xi1>
    %61 = vector.broadcast %60 : vector<1x8x8xi1> to vector<2x8x8xi1>
    %62 = vector.broadcast %cst_29 : f32 to vector<2x8x8xf32>
    %63 = arith.select %61, %54, %62 : vector<2x8x8xi1>, vector<2x8x8xf32>
    %cst_30 = arith.constant dense<0xFF800000> : vector<2x8xf32>
    %64 = vector.multi_reduction <maximumf>, %63, %cst_30 [2] : vector<2x8x8xf32> to vector<2x8xf32>
    %65 = vector.shape_cast %64 : vector<2x8xf32> to vector<2x8x1xf32>
    %66 = arith.maximumf %51, %65 : vector<2x8x1xf32>
    %67 = arith.subf %51, %66 : vector<2x8x1xf32>
    %68 = math.exp %67 : vector<2x8x1xf32>
    %69 = vector.broadcast %66 : vector<2x8x1xf32> to vector<2x8x8xf32>
    %70 = arith.subf %63, %69 : vector<2x8x8xf32>
    %71 = math.exp %70 : vector<2x8x8xf32>
    %72 = arith.mulf %68, %52 : vector<2x8x1xf32>
    %cst_31 = arith.constant dense<0.000000e+00> : vector<2x8xf32>
    %73 = vector.multi_reduction <add>, %71, %cst_31 [2] : vector<2x8x8xf32> to vector<2x8xf32>
    %74 = vector.shape_cast %73 : vector<2x8xf32> to vector<2x8x1xf32>
    %75 = arith.addf %72, %74 : vector<2x8x1xf32>
    %76 = vector.broadcast %68 : vector<2x8x1xf32> to vector<2x8x8xf32>
    %77 = arith.mulf %76, %53 : vector<2x8x8xf32>
    %78 = arith.truncf %71 : vector<2x8x8xf32> to vector<2x8x8xbf16>
    "tpu.trace_start"() <{level = 10 : i32, message = "bqk,bkd->bqd"}> : () -> ()
    %cst_32 = arith.constant dense<0.000000e+00> : vector<2x8x8xf32>
    %79 = tpu.matmul %78, %49, %cst_32 {dimension_numbers = #tpu.dot_dimension_numbers<[2], [1], [1], [2], [0, 0, 0, 1, 1, 2], [0], [0]>} : vector<2x8x8xbf16>, vector<2x8x8xbf16>, vector<2x8x8xf32> -> vector<2x8x8xf32>
    "tpu.trace_stop"() : () -> ()
    %80 = arith.addf %77, %79 : vector<2x8x8xf32>
    %81 = tpu.reciprocal %75 {approx = true} : vector<2x8x1xf32> -> vector<2x8x1xf32>
    %82 = vector.broadcast %81 : vector<2x8x1xf32> to vector<2x8x8xf32>
    %83 = arith.mulf %80, %82 : vector<2x8x8xf32>
    %84 = vector.shape_cast %83 : vector<2x8x8xf32> to vector<16x8xf32>
    %85 = arith.truncf %84 : vector<16x8xf32> to vector<16x8xbf16>
    %86 = vector.extract_strided_slice %42 {offsets = [0, 0], sizes = [8, 32], strides = [1, 1]} : vector<32x32xbf16> to vector<8x32xbf16>
    %cst_33 = arith.constant dense<0.000000e+00> : vector<16x32xf32>
    %87 = tpu.matmul %85, %86, %cst_33 {dimension_numbers = #tpu.dot_dimension_numbers<[1], [0], [0], [1], [0, 0, 1, 1], [], []>} : vector<16x8xbf16>, vector<8x32xbf16>, vector<16x32xf32> -> vector<16x32xf32>
    %88 = arith.addf %43, %87 : vector<16x32xf32>
    %89 = vector.extract_strided_slice %35 {offsets = [0, 8], sizes = [16, 8], strides = [1, 1]} : vector<16x32xbf16> to vector<16x8xbf16>
    %90 = vector.shape_cast %89 : vector<16x8xbf16> to vector<2x8x8xbf16>
    %91 = vector.extract_strided_slice %38 {offsets = [0, 8], sizes = [16, 8], strides = [1, 1]} : vector<16x32xbf16> to vector<16x8xbf16>
    %92 = vector.shape_cast %91 : vector<16x8xbf16> to vector<2x8x8xbf16>
    %93 = vector.extract_strided_slice %41 {offsets = [0, 8], sizes = [16, 8], strides = [1, 1]} : vector<16x32xbf16> to vector<16x8xbf16>
    %94 = vector.shape_cast %93 : vector<16x8xbf16> to vector<2x8x8xbf16>
    %95 = tpu.iota {dimensions = array<i32: 0>} : vector<8x8xi32>
    %cst_34 = arith.constant 0xFF800000 : f32
    %96 = vector.broadcast %cst_34 : f32 to vector<2x8x1xf32>
    %cst_35 = arith.constant 0.000000e+00 : f32
    %97 = vector.broadcast %cst_35 : f32 to vector<2x8x1xf32>
    %cst_36 = arith.constant 0.000000e+00 : f32
    %98 = vector.broadcast %cst_36 : f32 to vector<2x8x8xf32>
    "tpu.trace_start"() <{level = 10 : i32, message = "bqd,bkd->bqk"}> : () -> ()
    %cst_37 = arith.constant dense<0.000000e+00> : vector<2x8x8xf32>
    %99 = tpu.matmul %90, %92, %cst_37 {dimension_numbers = #tpu.dot_dimension_numbers<[2], [2], [1], [1], [0, 0, 0, 1, 1, 1], [0], [0]>} : vector<2x8x8xbf16>, vector<2x8x8xbf16>, vector<2x8x8xf32> -> vector<2x8x8xf32>
    "tpu.trace_stop"() : () -> ()
    %100 = tpu.iota {dimensions = array<i32: 1>} : vector<8x8xi32>
    %c0_i32_38 = arith.constant 0 : i32
    %101 = vector.broadcast %c0_i32_38 : i32 to vector<8x8xi32>
    %102 = arith.addi %100, %101 : vector<8x8xi32>
    %103 = arith.cmpi sle, %102, %95 : vector<8x8xi32>
    %104 = vector.shape_cast %103 : vector<8x8xi1> to vector<1x8x8xi1>
    %cst_39 = arith.constant 0xFF800000 : f32
    %105 = vector.shape_cast %104 : vector<1x8x8xi1> to vector<1x8x8xi1>
    %106 = vector.broadcast %105 : vector<1x8x8xi1> to vector<2x8x8xi1>
    %107 = vector.broadcast %cst_39 : f32 to vector<2x8x8xf32>
    %108 = arith.select %106, %99, %107 : vector<2x8x8xi1>, vector<2x8x8xf32>
    %cst_40 = arith.constant dense<0xFF800000> : vector<2x8xf32>
    %109 = vector.multi_reduction <maximumf>, %108, %cst_40 [2] : vector<2x8x8xf32> to vector<2x8xf32>
    %110 = vector.shape_cast %109 : vector<2x8xf32> to vector<2x8x1xf32>
    %111 = arith.maximumf %96, %110 : vector<2x8x1xf32>
    %112 = arith.subf %96, %111 : vector<2x8x1xf32>
    %113 = math.exp %112 : vector<2x8x1xf32>
    %114 = vector.broadcast %111 : vector<2x8x1xf32> to vector<2x8x8xf32>
    %115 = arith.subf %108, %114 : vector<2x8x8xf32>
    %116 = math.exp %115 : vector<2x8x8xf32>
    %117 = arith.mulf %113, %97 : vector<2x8x1xf32>
    %cst_41 = arith.constant dense<0.000000e+00> : vector<2x8xf32>
    %118 = vector.multi_reduction <add>, %116, %cst_41 [2] : vector<2x8x8xf32> to vector<2x8xf32>
    %119 = vector.shape_cast %118 : vector<2x8xf32> to vector<2x8x1xf32>
    %120 = arith.addf %117, %119 : vector<2x8x1xf32>
    %121 = vector.broadcast %113 : vector<2x8x1xf32> to vector<2x8x8xf32>
    %122 = arith.mulf %121, %98 : vector<2x8x8xf32>
    %123 = arith.truncf %116 : vector<2x8x8xf32> to vector<2x8x8xbf16>
    "tpu.trace_start"() <{level = 10 : i32, message = "bqk,bkd->bqd"}> : () -> ()
    %cst_42 = arith.constant dense<0.000000e+00> : vector<2x8x8xf32>
    %124 = tpu.matmul %123, %94, %cst_42 {dimension_numbers = #tpu.dot_dimension_numbers<[2], [1], [1], [2], [0, 0, 0, 1, 1, 2], [0], [0]>} : vector<2x8x8xbf16>, vector<2x8x8xbf16>, vector<2x8x8xf32> -> vector<2x8x8xf32>
    "tpu.trace_stop"() : () -> ()
    %125 = arith.addf %122, %124 : vector<2x8x8xf32>
    %126 = tpu.reciprocal %120 {approx = true} : vector<2x8x1xf32> -> vector<2x8x1xf32>
    %127 = vector.broadcast %126 : vector<2x8x1xf32> to vector<2x8x8xf32>
    %128 = arith.mulf %125, %127 : vector<2x8x8xf32>
    %129 = vector.shape_cast %128 : vector<2x8x8xf32> to vector<16x8xf32>
    %130 = arith.truncf %129 : vector<16x8xf32> to vector<16x8xbf16>
    %131 = vector.extract_strided_slice %42 {offsets = [8, 0], sizes = [8, 32], strides = [1, 1]} : vector<32x32xbf16> to vector<8x32xbf16>
    %cst_43 = arith.constant dense<0.000000e+00> : vector<16x32xf32>
    %132 = tpu.matmul %130, %131, %cst_43 {dimension_numbers = #tpu.dot_dimension_numbers<[1], [0], [0], [1], [0, 0, 1, 1], [], []>} : vector<16x8xbf16>, vector<8x32xbf16>, vector<16x32xf32> -> vector<16x32xf32>
    %133 = arith.addf %88, %132 : vector<16x32xf32>
    %134 = vector.extract_strided_slice %35 {offsets = [0, 16], sizes = [16, 8], strides = [1, 1]} : vector<16x32xbf16> to vector<16x8xbf16>
    %135 = vector.shape_cast %134 : vector<16x8xbf16> to vector<2x8x8xbf16>
    %136 = vector.extract_strided_slice %38 {offsets = [0, 16], sizes = [16, 8], strides = [1, 1]} : vector<16x32xbf16> to vector<16x8xbf16>
    %137 = vector.shape_cast %136 : vector<16x8xbf16> to vector<2x8x8xbf16>
    %138 = vector.extract_strided_slice %41 {offsets = [0, 16], sizes = [16, 8], strides = [1, 1]} : vector<16x32xbf16> to vector<16x8xbf16>
    %139 = vector.shape_cast %138 : vector<16x8xbf16> to vector<2x8x8xbf16>
    %140 = tpu.iota {dimensions = array<i32: 0>} : vector<8x8xi32>
    %cst_44 = arith.constant 0xFF800000 : f32
    %141 = vector.broadcast %cst_44 : f32 to vector<2x8x1xf32>
    %cst_45 = arith.constant 0.000000e+00 : f32
    %142 = vector.broadcast %cst_45 : f32 to vector<2x8x1xf32>
    %cst_46 = arith.constant 0.000000e+00 : f32
    %143 = vector.broadcast %cst_46 : f32 to vector<2x8x8xf32>
    "tpu.trace_start"() <{level = 10 : i32, message = "bqd,bkd->bqk"}> : () -> ()
    %cst_47 = arith.constant dense<0.000000e+00> : vector<2x8x8xf32>
    %144 = tpu.matmul %135, %137, %cst_47 {dimension_numbers = #tpu.dot_dimension_numbers<[2], [2], [1], [1], [0, 0, 0, 1, 1, 1], [0], [0]>} : vector<2x8x8xbf16>, vector<2x8x8xbf16>, vector<2x8x8xf32> -> vector<2x8x8xf32>
    "tpu.trace_stop"() : () -> ()
    %145 = tpu.iota {dimensions = array<i32: 1>} : vector<8x8xi32>
    %c0_i32_48 = arith.constant 0 : i32
    %146 = vector.broadcast %c0_i32_48 : i32 to vector<8x8xi32>
    %147 = arith.addi %145, %146 : vector<8x8xi32>
    %148 = arith.cmpi sle, %147, %140 : vector<8x8xi32>
    %149 = vector.shape_cast %148 : vector<8x8xi1> to vector<1x8x8xi1>
    %cst_49 = arith.constant 0xFF800000 : f32
    %150 = vector.shape_cast %149 : vector<1x8x8xi1> to vector<1x8x8xi1>
    %151 = vector.broadcast %150 : vector<1x8x8xi1> to vector<2x8x8xi1>
    %152 = vector.broadcast %cst_49 : f32 to vector<2x8x8xf32>
    %153 = arith.select %151, %144, %152 : vector<2x8x8xi1>, vector<2x8x8xf32>
    %cst_50 = arith.constant dense<0xFF800000> : vector<2x8xf32>
    %154 = vector.multi_reduction <maximumf>, %153, %cst_50 [2] : vector<2x8x8xf32> to vector<2x8xf32>
    %155 = vector.shape_cast %154 : vector<2x8xf32> to vector<2x8x1xf32>
    %156 = arith.maximumf %141, %155 : vector<2x8x1xf32>
    %157 = arith.subf %141, %156 : vector<2x8x1xf32>
    %158 = math.exp %157 : vector<2x8x1xf32>
    %159 = vector.broadcast %156 : vector<2x8x1xf32> to vector<2x8x8xf32>
    %160 = arith.subf %153, %159 : vector<2x8x8xf32>
    %161 = math.exp %160 : vector<2x8x8xf32>
    %162 = arith.mulf %158, %142 : vector<2x8x1xf32>
    %cst_51 = arith.constant dense<0.000000e+00> : vector<2x8xf32>
    %163 = vector.multi_reduction <add>, %161, %cst_51 [2] : vector<2x8x8xf32> to vector<2x8xf32>
    %164 = vector.shape_cast %163 : vector<2x8xf32> to vector<2x8x1xf32>
    %165 = arith.addf %162, %164 : vector<2x8x1xf32>
    %166 = vector.broadcast %158 : vector<2x8x1xf32> to vector<2x8x8xf32>
    %167 = arith.mulf %166, %143 : vector<2x8x8xf32>
    %168 = arith.truncf %161 : vector<2x8x8xf32> to vector<2x8x8xbf16>
    "tpu.trace_start"() <{level = 10 : i32, message = "bqk,bkd->bqd"}> : () -> ()
    %cst_52 = arith.constant dense<0.000000e+00> : vector<2x8x8xf32>
    %169 = tpu.matmul %168, %139, %cst_52 {dimension_numbers = #tpu.dot_dimension_numbers<[2], [1], [1], [2], [0, 0, 0, 1, 1, 2], [0], [0]>} : vector<2x8x8xbf16>, vector<2x8x8xbf16>, vector<2x8x8xf32> -> vector<2x8x8xf32>
    "tpu.trace_stop"() : () -> ()
    %170 = arith.addf %167, %169 : vector<2x8x8xf32>
    %171 = tpu.reciprocal %165 {approx = true} : vector<2x8x1xf32> -> vector<2x8x1xf32>
    %172 = vector.broadcast %171 : vector<2x8x1xf32> to vector<2x8x8xf32>
    %173 = arith.mulf %170, %172 : vector<2x8x8xf32>
    %174 = vector.shape_cast %173 : vector<2x8x8xf32> to vector<16x8xf32>
    %175 = arith.truncf %174 : vector<16x8xf32> to vector<16x8xbf16>
    %176 = vector.extract_strided_slice %42 {offsets = [16, 0], sizes = [8, 32], strides = [1, 1]} : vector<32x32xbf16> to vector<8x32xbf16>
    %cst_53 = arith.constant dense<0.000000e+00> : vector<16x32xf32>
    %177 = tpu.matmul %175, %176, %cst_53 {dimension_numbers = #tpu.dot_dimension_numbers<[1], [0], [0], [1], [0, 0, 1, 1], [], []>} : vector<16x8xbf16>, vector<8x32xbf16>, vector<16x32xf32> -> vector<16x32xf32>
    %178 = arith.addf %133, %177 : vector<16x32xf32>
    %179 = vector.extract_strided_slice %35 {offsets = [0, 24], sizes = [16, 8], strides = [1, 1]} : vector<16x32xbf16> to vector<16x8xbf16>
    %180 = vector.shape_cast %179 : vector<16x8xbf16> to vector<2x8x8xbf16>
    %181 = vector.extract_strided_slice %38 {offsets = [0, 24], sizes = [16, 8], strides = [1, 1]} : vector<16x32xbf16> to vector<16x8xbf16>
    %182 = vector.shape_cast %181 : vector<16x8xbf16> to vector<2x8x8xbf16>
    %183 = vector.extract_strided_slice %41 {offsets = [0, 24], sizes = [16, 8], strides = [1, 1]} : vector<16x32xbf16> to vector<16x8xbf16>
    %184 = vector.shape_cast %183 : vector<16x8xbf16> to vector<2x8x8xbf16>
    %185 = tpu.iota {dimensions = array<i32: 0>} : vector<8x8xi32>
    %cst_54 = arith.constant 0xFF800000 : f32
    %186 = vector.broadcast %cst_54 : f32 to vector<2x8x1xf32>
    %cst_55 = arith.constant 0.000000e+00 : f32
    %187 = vector.broadcast %cst_55 : f32 to vector<2x8x1xf32>
    %cst_56 = arith.constant 0.000000e+00 : f32
    %188 = vector.broadcast %cst_56 : f32 to vector<2x8x8xf32>
    "tpu.trace_start"() <{level = 10 : i32, message = "bqd,bkd->bqk"}> : () -> ()
    %cst_57 = arith.constant dense<0.000000e+00> : vector<2x8x8xf32>
    %189 = tpu.matmul %180, %182, %cst_57 {dimension_numbers = #tpu.dot_dimension_numbers<[2], [2], [1], [1], [0, 0, 0, 1, 1, 1], [0], [0]>} : vector<2x8x8xbf16>, vector<2x8x8xbf16>, vector<2x8x8xf32> -> vector<2x8x8xf32>
    "tpu.trace_stop"() : () -> ()
    %190 = tpu.iota {dimensions = array<i32: 1>} : vector<8x8xi32>
    %c0_i32_58 = arith.constant 0 : i32
    %191 = vector.broadcast %c0_i32_58 : i32 to vector<8x8xi32>
    %192 = arith.addi %190, %191 : vector<8x8xi32>
    %193 = arith.cmpi sle, %192, %185 : vector<8x8xi32>
    %194 = vector.shape_cast %193 : vector<8x8xi1> to vector<1x8x8xi1>
    %cst_59 = arith.constant 0xFF800000 : f32
    %195 = vector.shape_cast %194 : vector<1x8x8xi1> to vector<1x8x8xi1>
    %196 = vector.broadcast %195 : vector<1x8x8xi1> to vector<2x8x8xi1>
    %197 = vector.broadcast %cst_59 : f32 to vector<2x8x8xf32>
    %198 = arith.select %196, %189, %197 : vector<2x8x8xi1>, vector<2x8x8xf32>
    %cst_60 = arith.constant dense<0xFF800000> : vector<2x8xf32>
    %199 = vector.multi_reduction <maximumf>, %198, %cst_60 [2] : vector<2x8x8xf32> to vector<2x8xf32>
    %200 = vector.shape_cast %199 : vector<2x8xf32> to vector<2x8x1xf32>
    %201 = arith.maximumf %186, %200 : vector<2x8x1xf32>
    %202 = arith.subf %186, %201 : vector<2x8x1xf32>
    %203 = math.exp %202 : vector<2x8x1xf32>
    %204 = vector.broadcast %201 : vector<2x8x1xf32> to vector<2x8x8xf32>
    %205 = arith.subf %198, %204 : vector<2x8x8xf32>
    %206 = math.exp %205 : vector<2x8x8xf32>
    %207 = arith.mulf %203, %187 : vector<2x8x1xf32>
    %cst_61 = arith.constant dense<0.000000e+00> : vector<2x8xf32>
    %208 = vector.multi_reduction <add>, %206, %cst_61 [2] : vector<2x8x8xf32> to vector<2x8xf32>
    %209 = vector.shape_cast %208 : vector<2x8xf32> to vector<2x8x1xf32>
    %210 = arith.addf %207, %209 : vector<2x8x1xf32>
    %211 = vector.broadcast %203 : vector<2x8x1xf32> to vector<2x8x8xf32>
    %212 = arith.mulf %211, %188 : vector<2x8x8xf32>
    %213 = arith.truncf %206 : vector<2x8x8xf32> to vector<2x8x8xbf16>
    "tpu.trace_start"() <{level = 10 : i32, message = "bqk,bkd->bqd"}> : () -> ()
    %cst_62 = arith.constant dense<0.000000e+00> : vector<2x8x8xf32>
    %214 = tpu.matmul %213, %184, %cst_62 {dimension_numbers = #tpu.dot_dimension_numbers<[2], [1], [1], [2], [0, 0, 0, 1, 1, 2], [0], [0]>} : vector<2x8x8xbf16>, vector<2x8x8xbf16>, vector<2x8x8xf32> -> vector<2x8x8xf32>
    "tpu.trace_stop"() : () -> ()
    %215 = arith.addf %212, %214 : vector<2x8x8xf32>
    %216 = tpu.reciprocal %210 {approx = true} : vector<2x8x1xf32> -> vector<2x8x1xf32>
    %217 = vector.broadcast %216 : vector<2x8x1xf32> to vector<2x8x8xf32>
    %218 = arith.mulf %215, %217 : vector<2x8x8xf32>
    %219 = vector.shape_cast %218 : vector<2x8x8xf32> to vector<16x8xf32>
    %220 = arith.truncf %219 : vector<16x8xf32> to vector<16x8xbf16>
    %221 = vector.extract_strided_slice %42 {offsets = [24, 0], sizes = [8, 32], strides = [1, 1]} : vector<32x32xbf16> to vector<8x32xbf16>
    %cst_63 = arith.constant dense<0.000000e+00> : vector<16x32xf32>
    %222 = tpu.matmul %220, %221, %cst_63 {dimension_numbers = #tpu.dot_dimension_numbers<[1], [0], [0], [1], [0, 0, 1, 1], [], []>} : vector<16x8xbf16>, vector<8x32xbf16>, vector<16x32xf32> -> vector<16x32xf32>
    %223 = arith.addf %178, %222 : vector<16x32xf32>
    %224 = arith.addf %1, %223 : vector<16x32xf32>
    %c0_64 = arith.constant 0 : index
    %c0_65 = arith.constant 0 : index
    %225 = vector.load %arg9[%c0_64, %c0_65] : memref<1x32xf32, #tpu.memory_space<vmem>>, vector<1x32xf32>
    %226 = vector.shape_cast %225 : vector<1x32xf32> to vector<32xf32>
    %227 = vector.shape_cast %226 : vector<32xf32> to vector<1x32xf32>
    %228 = vector.broadcast %227 : vector<1x32xf32> to vector<16x32xf32>
    %229 = arith.addf %224, %228 : vector<16x32xf32>
    %c0_66 = arith.constant 0 : index
    %c0_67 = arith.constant 0 : index
    %230 = vector.load %arg10[%c0_66, %c0_67] : memref<1x32xf32, #tpu.memory_space<vmem>>, vector<1x32xf32>
    %231 = vector.shape_cast %230 : vector<1x32xf32> to vector<32xf32>
    %c0_68 = arith.constant 0 : index
    %c0_69 = arith.constant 0 : index
    %232 = vector.load %arg11[%c0_68, %c0_69] : memref<1x32xf32, #tpu.memory_space<vmem>>, vector<1x32xf32>
    %233 = vector.shape_cast %232 : vector<1x32xf32> to vector<32xf32>
    %cst_70 = arith.constant dense<0.000000e+00> : vector<16xf32>
    %234 = vector.multi_reduction <add>, %229, %cst_70 [1] : vector<16x32xf32> to vector<16xf32>
    %235 = vector.shape_cast %234 : vector<16xf32> to vector<16x1xf32>
    %cst_71 = arith.constant 3.200000e+01 : f32
    %236 = vector.broadcast %cst_71 : f32 to vector<16x1xf32>
    %237 = arith.divf %235, %236 : vector<16x1xf32>
    %238 = vector.broadcast %237 : vector<16x1xf32> to vector<16x32xf32>
    %239 = arith.subf %229, %238 : vector<16x32xf32>
    %240 = arith.mulf %239, %239 : vector<16x32xf32>
    %cst_72 = arith.constant dense<0.000000e+00> : vector<16xf32>
    %241 = vector.multi_reduction <add>, %240, %cst_72 [1] : vector<16x32xf32> to vector<16xf32>
    %242 = vector.shape_cast %241 : vector<16xf32> to vector<16x1xf32>
    %cst_73 = arith.constant 3.200000e+01 : f32
    %243 = vector.broadcast %cst_73 : f32 to vector<16x1xf32>
    %244 = arith.divf %242, %243 : vector<16x1xf32>
    %245 = vector.broadcast %237 : vector<16x1xf32> to vector<16x32xf32>
    %246 = arith.subf %229, %245 : vector<16x32xf32>
    %cst_74 = arith.constant 9.99999974E-6 : f32
    %247 = vector.broadcast %cst_74 : f32 to vector<16x1xf32>
    %248 = arith.addf %244, %247 : vector<16x1xf32>
    %249 = math.rsqrt %248 : vector<16x1xf32>
    %250 = vector.broadcast %249 : vector<16x1xf32> to vector<16x32xf32>
    %251 = arith.mulf %246, %250 : vector<16x32xf32>
    %252 = vector.shape_cast %231 : vector<32xf32> to vector<1x32xf32>
    %253 = vector.broadcast %252 : vector<1x32xf32> to vector<16x32xf32>
    %254 = arith.mulf %251, %253 : vector<16x32xf32>
    %255 = vector.shape_cast %233 : vector<32xf32> to vector<1x32xf32>
    %256 = vector.broadcast %255 : vector<1x32xf32> to vector<16x32xf32>
    %257 = arith.addf %254, %256 : vector<16x32xf32>
    %258 = arith.truncf %257 : vector<16x32xf32> to vector<16x32xbf16>
    %c0_75 = arith.constant 0 : index
    %c0_76 = arith.constant 0 : index
    %259 = vector.load %arg12[%c0_75, %c0_76] : memref<32x128xbf16, #tpu.memory_space<vmem>>, vector<32x128xbf16>
    %cst_77 = arith.constant dense<0.000000e+00> : vector<16x128xf32>
    %260 = tpu.matmul %258, %259, %cst_77 {dimension_numbers = #tpu.dot_dimension_numbers<[1], [0], [0], [1], [0, 0, 1, 1], [], []>} : vector<16x32xbf16>, vector<32x128xbf16>, vector<16x128xf32> -> vector<16x128xf32>
    %c0_78 = arith.constant 0 : index
    %c0_79 = arith.constant 0 : index
    %261 = vector.load %arg13[%c0_78, %c0_79] : memref<1x128xf32, #tpu.memory_space<vmem>>, vector<1x128xf32>
    %262 = vector.shape_cast %261 : vector<1x128xf32> to vector<128xf32>
    %263 = vector.shape_cast %262 : vector<128xf32> to vector<1x128xf32>
    %264 = vector.broadcast %263 : vector<1x128xf32> to vector<16x128xf32>
    %265 = arith.addf %260, %264 : vector<16x128xf32>
    %266 = arith.addf %265, %3 : vector<16x128xf32>
    %267 = math.tanh %266 : vector<16x128xf32>
    %268 = arith.truncf %267 : vector<16x128xf32> to vector<16x128xbf16>
    %c0_80 = arith.constant 0 : index
    %c0_81 = arith.constant 0 : index
    %269 = vector.load %arg14[%c0_80, %c0_81] : memref<128x32xbf16, #tpu.memory_space<vmem>>, vector<128x32xbf16>
    %cst_82 = arith.constant dense<0.000000e+00> : vector<16x32xf32>
    %270 = tpu.matmul %268, %269, %cst_82 {dimension_numbers = #tpu.dot_dimension_numbers<[1], [0], [0], [1], [0, 0, 1, 1], [], []>} : vector<16x128xbf16>, vector<128x32xbf16>, vector<16x32xf32> -> vector<16x32xf32>
    %c0_83 = arith.constant 0 : index
    %c0_84 = arith.constant 0 : index
    %271 = vector.load %arg15[%c0_83, %c0_84] : memref<1x32xf32, #tpu.memory_space<vmem>>, vector<1x32xf32>
    %272 = vector.shape_cast %271 : vector<1x32xf32> to vector<32xf32>
    %273 = vector.shape_cast %272 : vector<32xf32> to vector<1x32xf32>
    %274 = vector.broadcast %273 : vector<1x32xf32> to vector<16x32xf32>
    %275 = arith.addf %270, %274 : vector<16x32xf32>
    %276 = arith.addf %229, %275 : vector<16x32xf32>
    %277 = vector.shape_cast %276 : vector<16x32xf32> to vector<2x8x32xf32>
    %c0_85 = arith.constant 0 : index
    %c0_86 = arith.constant 0 : index
    %c0_87 = arith.constant 0 : index
    %278 = vector.load %arg16[%c0_85, %c0_86, %c0_87] : memref<2x8x32xf32, #tpu.memory_space<vmem>>, vector<2x8x32xf32>
    tpu.vector_store %arg16[%c0_85, %c0_86, %c0_87], %277 {strides = array<i32>} : memref<2x8x32xf32, #tpu.memory_space<vmem>>, vector<2x8x32xf32>,
    %279 = vector.shape_cast %267 : vector<16x128xf32> to vector<2x8x128xf32>
    %c0_88 = arith.constant 0 : index
    %c0_89 = arith.constant 0 : index
    %c0_90 = arith.constant 0 : index
    %280 = vector.load %arg17[%c0_88, %c0_89, %c0_90] : memref<2x8x128xf32, #tpu.memory_space<vmem>>, vector<2x8x128xf32>
    tpu.vector_store %arg17[%c0_88, %c0_89, %c0_90], %279 {strides = array<i32>} : memref<2x8x128xf32, #tpu.memory_space<vmem>>, vector<2x8x128xf32>,
    return
  }
  func.func @transform_0(%arg0: i32) -> (i32, i32, i32) {
    %c0_i32 = arith.constant 0 : i32
    %c0_i32_0 = arith.constant 0 : i32
    %c0_i32_1 = arith.constant 0 : i32
    return %arg0, %c0_i32, %c0_i32_0 : i32, i32, i32
  }
  func.func @transform_1(%arg0: i32) -> (i32, i32, i32) {
    %c0_i32 = arith.constant 0 : i32
    %c0_i32_0 = arith.constant 0 : i32
    %c0_i32_1 = arith.constant 0 : i32
    return %arg0, %c0_i32, %c0_i32_0 : i32, i32, i32
  }
  func.func @transform_2(%arg0: i32) -> (i32, i32) {
    %c0_i32 = arith.constant 0 : i32
    %c0_i32_0 = arith.constant 0 : i32
    %c0_i32_1 = arith.constant 0 : i32
    return %c0_i32, %c0_i32_0 : i32, i32
  }
  func.func @transform_3(%arg0: i32) -> (i32, i32) {
    %c0_i32 = arith.constant 0 : i32
    %c0_i32_0 = arith.constant 0 : i32
    %c0_i32_1 = arith.constant 0 : i32
    return %c0_i32, %c0_i32_0 : i32, i32
  }
  func.func @transform_4(%arg0: i32) -> (i32, i32) {
    %c0_i32 = arith.constant 0 : i32
    %c0_i32_0 = arith.constant 0 : i32
    %c0_i32_1 = arith.constant 0 : i32
    return %c0_i32, %c0_i32_0 : i32, i32
  }
  func.func @transform_5(%arg0: i32) -> (i32, i32) {
    %c0_i32 = arith.constant 0 : i32
    %c0_i32_0 = arith.constant 0 : i32
    %c0_i32_1 = arith.constant 0 : i32
    return %c0_i32, %c0_i32_0 : i32, i32
  }
  func.func @transform_6(%arg0: i32) -> (i32, i32) {
    %c0_i32 = arith.constant 0 : i32
    %c0_i32_0 = arith.constant 0 : i32
    %c0_i32_1 = arith.constant 0 : i32
    return %c0_i32, %c0_i32_0 : i32, i32
  }
  func.func @transform_7(%arg0: i32) -> (i32, i32) {
    %c0_i32 = arith.constant 0 : i32
    %c0_i32_0 = arith.constant 0 : i32
    %c0_i32_1 = arith.constant 0 : i32
    return %c0_i32, %c0_i32_0 : i32, i32
  }
  func.func @transform_8(%arg0: i32) -> (i32, i32) {
    %c0_i32 = arith.constant 0 : i32
    %c0_i32_0 = arith.constant 0 : i32
    %c0_i32_1 = arith.constant 0 : i32
    return %c0_i32, %c0_i32_0 : i32, i32
  }
  func.func @transform_9(%arg0: i32) -> (i32, i32) {
    %c0_i32 = arith.constant 0 : i32
    %c0_i32_0 = arith.constant 0 : i32
    %c0_i32_1 = arith.constant 0 : i32
    return %c0_i32, %c0_i32_0 : i32, i32
  }
  func.func @transform_10(%arg0: i32) -> (i32, i32) {
    %c0_i32 = arith.constant 0 : i32
    %c0_i32_0 = arith.constant 0 : i32
    %c0_i32_1 = arith.constant 0 : i32
    return %c0_i32, %c0_i32_0 : i32, i32
  }
  func.func @transform_11(%arg0: i32) -> (i32, i32) {
    %c0_i32 = arith.constant 0 : i32
    %c0_i32_0 = arith.constant 0 : i32
    %c0_i32_1 = arith.constant 0 : i32
    return %c0_i32, %c0_i32_0 : i32, i32
  }
  func.func @transform_12(%arg0: i32) -> (i32, i32) {
    %c0_i32 = arith.constant 0 : i32
    %c0_i32_0 = arith.constant 0 : i32
    %c0_i32_1 = arith.constant 0 : i32
    return %c0_i32, %c0_i32_0 : i32, i32
  }
  func.func @transform_13(%arg0: i32) -> (i32, i32) {
    %c0_i32 = arith.constant 0 : i32
    %c0_i32_0 = arith.constant 0 : i32
    %c0_i32_1 = arith.constant 0 : i32
    return %c0_i32, %c0_i32_0 : i32, i32
  }
  func.func @transform_14(%arg0: i32) -> (i32, i32) {
    %c0_i32 = arith.constant 0 : i32
    %c0_i32_0 = arith.constant 0 : i32
    %c0_i32_1 = arith.constant 0 : i32
    return %c0_i32, %c0_i32_0 : i32, i32
  }
  func.func @transform_15(%arg0: i32) -> (i32, i32, i32) {
    %c0_i32 = arith.constant 0 : i32
    %c0_i32_0 = arith.constant 0 : i32
    %c0_i32_1 = arith.constant 0 : i32
    return %arg0, %c0_i32, %c0_i32_0 : i32, i32, i32
  }
  func.func @transform_16(%arg0: i32) -> (i32, i32, i32) {
    %c0_i32 = arith.constant 0 : i32
    %c0_i32_0 = arith.constant 0 : i32
    %c0_i32_1 = arith.constant 0 : i32
    return %arg0, %c0_i32, %c0_i32_0 : i32, i32, i32
  }
}

module attributes {stable_mosaic.version = 11 : i64} {
  func.func @block_kernel(%arg0: i32, %arg1: memref<2x8x32xf32, #tpu.memory_space<vmem>>, %arg2: memref<2x8x128xf32, #tpu.memory_space<vmem>>, %arg3: memref<1x32xf32, #tpu.memory_space<vmem>>, %arg4: memref<1x32xf32, #tpu.memory_space<vmem>>, %arg5: memref<32x32xbf16, #tpu.memory_space<vmem>>, %arg6: memref<32x32xbf16, #tpu.memory_space<vmem>>, %arg7: memref<32x32xbf16, #tpu.memory_space<vmem>>, %arg8: memref<32x32xbf16, #tpu.memory_space<vmem>>, %arg9: memref<1x32xf32, #tpu.memory_space<vmem>>, %arg10: memref<1x32xf32, #tpu.memory_space<vmem>>, %arg11: memref<1x32xf32, #tpu.memory_space<vmem>>, %arg12: memref<32x128xbf16, #tpu.memory_space<vmem>>, %arg13: memref<1x128xf32, #tpu.memory_space<vmem>>, %arg14: memref<128x32xbf16, #tpu.memory_space<vmem>>, %arg15: memref<1x32xf32, #tpu.memory_space<vmem>>, %arg16: memref<2x8x32xf32, #tpu.memory_space<vmem>>, %arg17: memref<2x8x128xf32, #tpu.memory_space<vmem>>) attributes {dimension_semantics = [#tpu.dimension_semantics<parallel>], iteration_bounds = array<i64: 1>, scalar_prefetch = 0 : i64, scratch_operands = 0 : i64, tpu.core_type = #tpu.core_type<tc>, window_params = [{transform_indices = @transform_0, window_bounds = array<i64: 2, 8, 32>}, {transform_indices = @transform_1, window_bounds = array<i64: 2, 8, 128>}, {pipeline_mode = #tpu.pipeline_mode<synchronous>, transform_indices = @transform_2, window_bounds = array<i64: 1, 32>}, {pipeline_mode = #tpu.pipeline_mode<synchronous>, transform_indices = @transform_3, window_bounds = array<i64: 1, 32>}, {pipeline_mode = #tpu.pipeline_mode<synchronous>, transform_indices = @transform_4, window_bounds = array<i64: 32, 32>}, {pipeline_mode = #tpu.pipeline_mode<synchronous>, transform_indices = @transform_5, window_bounds = array<i64: 32, 32>}, {pipeline_mode = #tpu.pipeline_mode<synchronous>, transform_indices = @transform_6, window_bounds = array<i64: 32, 32>}, {pipeline_mode = #tpu.pipeline_mode<synchronous>, transform_indices = @transform_7, window_bounds = array<i64: 32, 32>}, {pipeline_mode = #tpu.pipeline_mode<synchronous>, transform_indices = @transform_8, window_bounds = array<i64: 1, 32>}, {pipeline_mode = #tpu.pipeline_mode<synchronous>, transform_indices = @transform_9, window_bounds = array<i64: 1, 32>}, {pipeline_mode = #tpu.pipeline_mode<synchronous>, transform_indices = @transform_10, window_bounds = array<i64: 1, 32>}, {pipeline_mode = #tpu.pipeline_mode<synchronous>, transform_indices = @transform_11, window_bounds = array<i64: 32, 128>}, {pipeline_mode = #tpu.pipeline_mode<synchronous>, transform_indices = @transform_12, window_bounds = array<i64: 1, 128>}, {pipeline_mode = #tpu.pipeline_mode<synchronous>, transform_indices = @transform_13, window_bounds = array<i64: 128, 32>}, {pipeline_mode = #tpu.pipeline_mode<synchronous>, transform_indices = @transform_14, window_bounds = array<i64: 1, 32>}, {transform_indices = @transform_15, window_bounds = array<i64: 2, 8, 32>}, {transform_indices = @transform_16, window_bounds = array<i64: 2, 8, 128>}]} {
    %c0 = arith.constant 0 : index
    %c0_0 = arith.constant 0 : index
    %c0_1 = arith.constant 0 : index
    %0 = vector.load %arg1[%c0, %c0_0, %c0_1] : memref<2x8x32xf32, #tpu.memory_space<vmem>>, vector<2x8x32xf32>
    %1 = vector.shape_cast %0 : vector<2x8x32xf32> to vector<16x32xf32>
    %c0_2 = arith.constant 0 : index
    %c0_3 = arith.constant 0 : index
    %c0_4 = arith.constant 0 : index
    %2 = vector.load %arg2[%c0_2, %c0_3, %c0_4] : memref<2x8x128xf32, #tpu.memory_space<vmem>>, vector<2x8x128xf32>
    %3 = vector.shape_cast %2 : vector<2x8x128xf32> to vector<16x128xf32>
    %c0_5 = arith.constant 0 : index
    %c0_6 = arith.constant 0 : index
    %4 = vector.load %arg3[%c0_5, %c0_6] : memref<1x32xf32, #tpu.memory_space<vmem>>, vector<1x32xf32>
    %5 = vector.shape_cast %4 : vector<1x32xf32> to vector<32xf32>
    %c0_7 = arith.constant 0 : index
    %c0_8 = arith.constant 0 : index
    %6 = vector.load %arg4[%c0_7, %c0_8] : memref<1x32xf32, #tpu.memory_space<vmem>>, vector<1x32xf32>
    %7 = vector.shape_cast %6 : vector<1x32xf32> to vector<32xf32>
    %cst = arith.constant dense<0.000000e+00> : vector<16xf32>
    %8 = vector.multi_reduction <add>, %1, %cst [1] : vector<16x32xf32> to vector<16xf32>
    %9 = vector.shape_cast %8 : vector<16xf32> to vector<16x1xf32>
    %cst_9 = arith.constant 3.200000e+01 : f32
    %10 = vector.broadcast %cst_9 : f32 to vector<16x1xf32>
    %11 = arith.divf %9, %10 : vector<16x1xf32>
    %12 = vector.broadcast %11 : vector<16x1xf32> to vector<16x32xf32>
    %13 = arith.subf %1, %12 : vector<16x32xf32>
    %14 = arith.mulf %13, %13 : vector<16x32xf32>
    %cst_10 = arith.constant dense<0.000000e+00> : vector<16xf32>
    %15 = vector.multi_reduction <add>, %14, %cst_10 [1] : vector<16x32xf32> to vector<16xf32>
    %16 = vector.shape_cast %15 : vector<16xf32> to vector<16x1xf32>
    %cst_11 = arith.constant 3.200000e+01 : f32
    %17 = vector.broadcast %cst_11 : f32 to vector<16x1xf32>
    %18 = arith.divf %16, %17 : vector<16x1xf32>
    %19 = vector.broadcast %11 : vector<16x1xf32> to vector<16x32xf32>
    %20 = arith.subf %1, %19 : vector<16x32xf32>
    %cst_12 = arith.constant 9.99999974E-6 : f32
    %21 = vector.broadcast %cst_12 : f32 to vector<16x1xf32>
    %22 = arith.addf %18, %21 : vector<16x1xf32>
    %23 = math.rsqrt %22 : vector<16x1xf32>
    %24 = vector.broadcast %23 : vector<16x1xf32> to vector<16x32xf32>
    %25 = arith.mulf %20, %24 : vector<16x32xf32>
    %26 = vector.shape_cast %5 : vector<32xf32> to vector<1x32xf32>
    %27 = vector.broadcast %26 : vector<1x32xf32> to vector<16x32xf32>
    %28 = arith.mulf %25, %27 : vector<16x32xf32>
    %29 = vector.shape_cast %7 : vector<32xf32> to vector<1x32xf32>
    %30 = vector.broadcast %29 : vector<1x32xf32> to vector<16x32xf32>
    %31 = arith.addf %28, %30 : vector<16x32xf32>
    %32 = arith.truncf %31 : vector<16x32xf32> to vector<16x32xbf16>
    %c0_13 = arith.constant 0 : index
    %c0_14 = arith.constant 0 : index
    %33 = vector.load %arg5[%c0_13, %c0_14] : memref<32x32xbf16, #tpu.memory_space<vmem>>, vector<32x32xbf16>
    %cst_15 = arith.constant dense<0.000000e+00> : vector<16x32xf32>
    %34 = tpu.matmul %32, %33, %cst_15 {dimension_numbers = #tpu.dot_dimension_numbers<[1], [0], [0], [1], [0, 0, 1, 1], [], []>} : vector<16x32xbf16>, vector<32x32xbf16>, vector<16x32xf32> -> vector<16x32xf32>
    %35 = arith.truncf %34 : vector<16x32xf32> to vector<16x32xbf16>
    %c0_16 = arith.constant 0 : index
    %c0_17 = arith.constant 0 : index
    %36 = vector.load %arg6[%c0_16, %c0_17] : memref<32x32xbf16, #tpu.memory_space<vmem>>, vector<32x32xbf16>
    %cst_18 = arith.constant dense<0.000000e+00> : vector<16x32xf32>
    %37 = tpu.matmul %32, %36, %cst_18 {dimension_numbers = #tpu.dot_dimension_numbers<[1], [0], [0], [1], [0, 0, 1, 1], [], []>} : vector<16x32xbf16>, vector<32x32xbf16>, vector<16x32xf32> -> vector<16x32xf32>
    %38 = arith.truncf %37 : vector<16x32xf32> to vector<16x32xbf16>
    %c0_19 = arith.constant 0 : index
    %c0_20 = arith.constant 0 : index
    %39 = vector.load %arg7[%c0_19, %c0_20] : memref<32x32xbf16, #tpu.memory_space<vmem>>, vector<32x32xbf16>
    %cst_21 = arith.constant dense<0.000000e+00> : vector<16x32xf32>
    %40 = tpu.matmul %32, %39, %cst_21 {dimension_numbers = #tpu.dot_dimension_numbers<[1], [0], [0], [1], [0, 0, 1, 1], [], []>} : vector<16x32xbf16>, vector<32x32xbf16>, vector<16x32xf32> -> vector<16x32xf32>
    %41 = arith.truncf %40 : vector<16x32xf32> to vector<16x32xbf16>
    %c0_22 = arith.constant 0 : index
    %c0_23 = arith.constant 0 : index
    %42 = vector.load %arg8[%c0_22, %c0_23] : memref<32x32xbf16, #tpu.memory_space<vmem>>, vector<32x32xbf16>
    %cst_24 = arith.constant 0.000000e+00 : f32
    %43 = vector.broadcast %cst_24 : f32 to vector<16x32xf32>
    %44 = vector.extract_strided_slice %35 {offsets = [0, 0], sizes = [16, 8], strides = [1, 1]} : vector<16x32xbf16> to vector<16x8xbf16>
    %45 = vector.shape_cast %44 : vector<16x8xbf16> to vector<2x8x8xbf16>
    %46 = vector.extract_strided_slice %38 {offsets = [0, 0], sizes = [16, 8], strides = [1, 1]} : vector<16x32xbf16> to vector<16x8xbf16>
    %47 = vector.shape_cast %46 : vector<16x8xbf16> to vector<2x8x8xbf16>
    %48 = vector.extract_strided_slice %41 {offsets = [0, 0], sizes = [16, 8], strides = [1, 1]} : vector<16x32xbf16> to vector<16x8xbf16>
    %49 = vector.shape_cast %48 : vector<16x8xbf16> to vector<2x8x8xbf16>
    %50 = tpu.iota {dimensions = array<i32: 0>} : vector<8x8xi32>
    %cst_25 = arith.constant 0xFF800000 : f32
    %51 = vector.broadcast %cst_25 : f32 to vector<2x8x1xf32>
    %cst_26 = arith.constant 0.000000e+00 : f32
    %52 = vector.broadcast %cst_26 : f32 to vector<2x8x1xf32>
    %cst_27 = arith.constant 0.000000e+00 : f32
    %53 = vector.broadcast %cst_27 : f32 to vector<2x8x8xf32>
    "tpu.trace_start"() <{level = 10 : i32, message = "bqd,bkd->bqk"}> : () -> ()
    %cst_28 = arith.constant dense<0.000000e+00> : vector<2x8x8xf32>
    %54 = tpu.matmul %45, %47, %cst_28 {dimension_numbers = #tpu.dot_dimension_numbers<[2], [2], [1], [1], [0, 0, 0, 1, 1, 1], [0], [0]>} : vector<2x8x8xbf16>, vector<2x8x8xbf16>, vector<2x8x8xf32> -> vector<2x8x8xf32>
    "tpu.trace_stop"() : () -> ()
    %55 = tpu.iota {dimensions = array<i32: 1>} : vector<8x8xi32>
    %c0_i32 = arith.constant 0 : i32
    %56 = vector.broadcast %c0_i32 : i32 to vector<8x8xi32>
    %57 = arith.addi %55, %56 : vector<8x8xi32>
    %58 = arith.cmpi sle, %57, %50 : vector<8x8xi32>
    %59 = vector.shape_cast %58 : vector<8x8xi1> to vector<1x8x8xi1>
    %cst_29 = arith.constant 0xFF800000 : f32
    %60 = vector.shape_cast %59 : vector<1x8x8xi1> to vector<1x8x8xi1>
    %61 = vector.broadcast %60 : vector<1x8x8xi1> to vector<2x8x8xi1>
    %62 = vector.broadcast %cst_29 : f32 to vector<2x8x8xf32>
    %63 = arith.select %61, %54, %62 : vector<2x8x8xi1>, vector<2x8x8xf32>
    %cst_30 = arith.constant dense<0xFF800000> : vector<2x8xf32>
    %64 = vector.multi_reduction <maximumf>, %63, %cst_30 [2] : vector<2x8x8xf32> to vector<2x8xf32>
    %65 = vector.shape_cast %64 : vector<2x8xf32> to vector<2x8x1xf32>
    %66 = arith.maximumf %51, %65 : vector<2x8x1xf32>
    %67 = arith.subf %51, %66 : vector<2x8x1xf32>
    %68 = math.exp %67 : vector<2x8x1xf32>
    %69 = vector.broadcast %66 : vector<2x8x1xf32> to vector<2x8x8xf32>
    %70 = arith.subf %63, %69 : vector<2x8x8xf32>
    %71 = math.exp %70 : vector<2x8x8xf32>
    %72 = arith.mulf %68, %52 : vector<2x8x1xf32>
    %cst_31 = arith.constant dense<0.000000e+00> : vector<2x8xf32>
    %73 = vector.multi_reduction <add>, %71, %cst_31 [2] : vector<2x8x8xf32> to vector<2x8xf32>
    %74 = vector.shape_cast %73 : vector<2x8xf32> to vector<2x8x1xf32>
    %75 = arith.addf %72, %74 : vector<2x8x1xf32>
    %76 = vector.broadcast %68 : vector<2x8x1xf32> to vector<2x8x8xf32>
    %77 = arith.mulf %76, %53 : vector<2x8x8xf32>
    %78 = arith.truncf %71 : vector<2x8x8xf32> to vector<2x8x8xbf16>
    "tpu.trace_start"() <{level = 10 : i32, message = "bqk,bkd->bqd"}> : () -> ()
    %cst_32 = arith.constant dense<0.000000e+00> : vector<2x8x8xf32>
    %79 = tpu.matmul %78, %49, %cst_32 {dimension_numbers = #tpu.dot_dimension_numbers<[2], [1], [1], [2], [0, 0, 0, 1, 1, 2], [0], [0]>} : vector<2x8x8xbf16>, vector<2x8x8xbf16>, vector<2x8x8xf32> -> vector<2x8x8xf32>
    "tpu.trace_stop"() : () -> ()
    %80 = arith.addf %77, %79 : vector<2x8x8xf32>
    %81 = tpu.reciprocal %75 {approx = true} : vector<2x8x1xf32> -> vector<2x8x1xf32>
    %82 = vector.broadcast %81 : vector<2x8x1xf32> to vector<2x8x8xf32>
    %83 = arith.mulf %80, %82 : vector<2x8x8xf32>
    %84 = vector.shape_cast %83 : vector<2x8x8xf32> to vector<16x8xf32>
    %85 = arith.truncf %84 : vector<16x8xf32> to vector<16x8xbf16>
    %86 = vector.extract_strided_slice %42 {offsets = [0, 0], sizes = [8, 32], strides = [1, 1]} : vector<32x32xbf16> to vector<8x32xbf16>
    %cst_33 = arith.constant dense<0.000000e+00> : vector<16x32xf32>
    %87 = tpu.matmul %85, %86, %cst_33 {dimension_numbers = #tpu.dot_dimension_numbers<[1], [0], [0], [1], [0, 0, 1, 1], [], []>} : vector<16x8xbf16>, vector<8x32xbf16>, vector<16x32xf32> -> vector<16x32xf32>
    %88 = arith.addf %43, %87 : vector<16x32xf32>
    %89 = vector.extract_strided_slice %35 {offsets = [0, 8], sizes = [16, 8], strides = [1, 1]} : vector<16x32xbf16> to vector<16x8xbf16>
    %90 = vector.shape_cast %89 : vector<16x8xbf16> to vector<2x8x8xbf16>
    %91 = vector.extract_strided_slice %38 {offsets = [0, 8], sizes = [16, 8], strides = [1, 1]} : vector<16x32xbf16> to vector<16x8xbf16>
    %92 = vector.shape_cast %91 : vector<16x8xbf16> to vector<2x8x8xbf16>
    %93 = vector.extract_strided_slice %41 {offsets = [0, 8], sizes = [16, 8], strides = [1, 1]} : vector<16x32xbf16> to vector<16x8xbf16>
    %94 = vector.shape_cast %93 : vector<16x8xbf16> to vector<2x8x8xbf16>
    %95 = tpu.iota {dimensions = array<i32: 0>} : vector<8x8xi32>
    %cst_34 = arith.constant 0xFF800000 : f32
    %96 = vector.broadcast %cst_34 : f32 to vector<2x8x1xf32>
    %cst_35 = arith.constant 0.000000e+00 : f32
    %97 = vector.broadcast %cst_35 : f32 to vector<2x8x1xf32>
    %cst_36 = arith.constant 0.000000e+00 : f32
    %98 = vector.broadcast %cst_36 : f32 to vector<2x8x8xf32>
    "tpu.trace_start"() <{level = 10 : i32, message = "bqd,bkd->bqk"}> : () -> ()
    %cst_37 = arith.constant dense<0.000000e+00> : vector<2x8x8xf32>
    %99 = tpu.matmul %90, %92, %cst_37 {dimension_numbers = #tpu.dot_dimension_numbers<[2], [2], [1], [1], [0, 0, 0, 1, 1, 1], [0], [0]>} : vector<2x8x8xbf16>, vector<2x8x8xbf16>, vector<2x8x8xf32> -> vector<2x8x8xf32>
    "tpu.trace_stop"() : () -> ()
    %100 = tpu.iota {dimensions = array<i32: 1>} : vector<8x8xi32>
    %c0_i32_38 = arith.constant 0 : i32
    %101 = vector.broadcast %c0_i32_38 : i32 to vector<8x8xi32>
    %102 = arith.addi %100, %101 : vector<8x8xi32>
    %103 = arith.cmpi sle, %102, %95 : vector<8x8xi32>
    %104 = vector.shape_cast %103 : vector<8x8xi1> to vector<1x8x8xi1>
    %cst_39 = arith.constant 0xFF800000 : f32
    %105 = vector.shape_cast %104 : vector<1x8x8xi1> to vector<1x8x8xi1>
    %106 = vector.broadcast %105 : vector<1x8x8xi1> to vector<2x8x8xi1>
    %107 = vector.broadcast %cst_39 : f32 to vector<2x8x8xf32>
    %108 = arith.select %106, %99, %107 : vector<2x8x8xi1>, vector<2x8x8xf32>
    %cst_40 = arith.constant dense<0xFF800000> : vector<2x8xf32>
    %109 = vector.multi_reduction <maximumf>, %108, %cst_40 [2] : vector<2x8x8xf32> to vector<2x8xf32>
    %110 = vector.shape_cast %109 : vector<2x8xf32> to vector<2x8x1xf32>
    %111 = arith.maximumf %96, %110 : vector<2x8x1xf32>
    %112 = arith.subf %96, %111 : vector<2x8x1xf32>
    %113 = math.exp %112 : vector<2x8x1xf32>
    %114 = vector.broadcast %111 : vector<2x8x1xf32> to vector<2x8x8xf32>
    %115 = arith.subf %108, %114 : vector<2x8x8xf32>
    %116 = math.exp %115 : vector<2x8x8xf32>
    %117 = arith.mulf %113, %97 : vector<2x8x1xf32>
    %cst_41 = arith.constant dense<0.000000e+00> : vector<2x8xf32>
    %118 = vector.multi_reduction <add>, %116, %cst_41 [2] : vector<2x8x8xf32> to vector<2x8xf32>
    %119 = vector.shape_cast %118 : vector<2x8xf32> to vector<2x8x1xf32>
    %120 = arith.addf %117, %119 : vector<2x8x1xf32>
    %121 = vector.broadcast %113 : vector<2x8x1xf32> to vector<2x8x8xf32>
    %122 = arith.mulf %121, %98 : vector<2x8x8xf32>
    %123 = arith.truncf %116 : vector<2x8x8xf32> to vector<2x8x8xbf16>
    "tpu.trace_start"() <{level = 10 : i32, message = "bqk,bkd->bqd"}> : () -> ()
    %cst_42 = arith.constant dense<0.000000e+00> : vector<2x8x8xf32>
    %124 = tpu.matmul %123, %94, %cst_42 {dimension_numbers = #tpu.dot_dimension_numbers<[2], [1], [1], [2], [0, 0, 0, 1, 1, 2], [0], [0]>} : vector<2x8x8xbf16>, vector<2x8x8xbf16>, vector<2x8x8xf32> -> vector<2x8x8xf32>
    "tpu.trace_stop"() : () -> ()
    %125 = arith.addf %122, %124 : vector<2x8x8xf32>
    %126 = tpu.reciprocal %120 {approx = true} : vector<2x8x1xf32> -> vector<2x8x1xf32>
    %127 = vector.broadcast %126 : vector<2x8x1xf32> to vector<2x8x8xf32>
    %128 = arith.mulf %125, %127 : vector<2x8x8xf32>
    %129 = vector.shape_cast %128 : vector<2x8x8xf32> to vector<16x8xf32>
    %130 = arith.truncf %129 : vector<16x8xf32> to vector<16x8xbf16>
    %131 = vector.extract_strided_slice %42 {offsets = [8, 0], sizes = [8, 32], strides = [1, 1]} : vector<32x32xbf16> to vector<8x32xbf16>
    %cst_43 = arith.constant dense<0.000000e+00> : vector<16x32xf32>
    %132 = tpu.matmul %130, %131, %cst_43 {dimension_numbers = #tpu.dot_dimension_numbers<[1], [0], [0], [1], [0, 0, 1, 1], [], []>} : vector<16x8xbf16>, vector<8x32xbf16>, vector<16x32xf32> -> vector<16x32xf32>
    %133 = arith.addf %88, %132 : vector<16x32xf32>
    %134 = vector.extract_strided_slice %35 {offsets = [0, 16], sizes = [16, 8], strides = [1, 1]} : vector<16x32xbf16> to vector<16x8xbf16>
    %135 = vector.shape_cast %134 : vector<16x8xbf16> to vector<2x8x8xbf16>
    %136 = vector.extract_strided_slice %38 {offsets = [0, 16], sizes = [16, 8], strides = [1, 1]} : vector<16x32xbf16> to vector<16x8xbf16>
    %137 = vector.shape_cast %136 : vector<16x8xbf16> to vector<2x8x8xbf16>
    %138 = vector.extract_strided_slice %41 {offsets = [0, 16], sizes = [16, 8], strides = [1, 1]} : vector<16x32xbf16> to vector<16x8xbf16>
    %139 = vector.shape_cast %138 : vector<16x8xbf16> to vector<2x8x8xbf16>
    %140 = tpu.iota {dimensions = array<i32: 0>} : vector<8x8xi32>
    %cst_44 = arith.constant 0xFF800000 : f32
    %141 = vector.broadcast %cst_44 : f32 to vector<2x8x1xf32>
    %cst_45 = arith.constant 0.000000e+00 : f32
    %142 = vector.broadcast %cst_45 : f32 to vector<2x8x1xf32>
    %cst_46 = arith.constant 0.000000e+00 : f32
    %143 = vector.broadcast %cst_46 : f32 to vector<2x8x8xf32>
    "tpu.trace_start"() <{level = 10 : i32, message = "bqd,bkd->bqk"}> : () -> ()
    %cst_47 = arith.constant dense<0.000000e+00> : vector<2x8x8xf32>
    %144 = tpu.matmul %135, %137, %cst_47 {dimension_numbers = #tpu.dot_dimension_numbers<[2], [2], [1], [1], [0, 0, 0, 1, 1, 1], [0], [0]>} : vector<2x8x8xbf16>, vector<2x8x8xbf16>, vector<2x8x8xf32> -> vector<2x8x8xf32>
    "tpu.trace_stop"() : () -> ()
    %145 = tpu.iota {dimensions = array<i32: 1>} : vector<8x8xi32>
    %c0_i32_48 = arith.constant 0 : i32
    %146 = vector.broadcast %c0_i32_48 : i32 to vector<8x8xi32>
    %147 = arith.addi %145, %146 : vector<8x8xi32>
    %148 = arith.cmpi sle, %147, %140 : vector<8x8xi32>
    %149 = vector.shape_cast %148 : vector<8x8xi1> to vector<1x8x8xi1>
    %cst_49 = arith.constant 0xFF800000 : f32
    %150 = vector.shape_cast %149 : vector<1x8x8xi1> to vector<1x8x8xi1>
    %151 = vector.broadcast %150 : vector<1x8x8xi1> to vector<2x8x8xi1>
    %152 = vector.broadcast %cst_49 : f32 to vector<2x8x8xf32>
    %153 = arith.select %151, %144, %152 : vector<2x8x8xi1>, vector<2x8x8xf32>
    %cst_50 = arith.constant dense<0xFF800000> : vector<2x8xf32>
    %154 = vector.multi_reduction <maximumf>, %153, %cst_50 [2] : vector<2x8x8xf32> to vector<2x8xf32>
    %155 = vector.shape_cast %154 : vector<2x8xf32> to vector<2x8x1xf32>
    %156 = arith.maximumf %141, %155 : vector<2x8x1xf32>
    %157 = arith.subf %141, %156 : vector<2x8x1xf32>
    %158 = math.exp %157 : vector<2x8x1xf32>
    %159 = vector.broadcast %156 : vector<2x8x1xf32> to vector<2x8x8xf32>
    %160 = arith.subf %153, %159 : vector<2x8x8xf32>
    %161 = math.exp %160 : vector<2x8x8xf32>
    %162 = arith.mulf %158, %142 : vector<2x8x1xf32>
    %cst_51 = arith.constant dense<0.000000e+00> : vector<2x8xf32>
    %163 = vector.multi_reduction <add>, %161, %cst_51 [2] : vector<2x8x8xf32> to vector<2x8xf32>
    %164 = vector.shape_cast %163 : vector<2x8xf32> to vector<2x8x1xf32>
    %165 = arith.addf %162, %164 : vector<2x8x1xf32>
    %166 = vector.broadcast %158 : vector<2x8x1xf32> to vector<2x8x8xf32>
    %167 = arith.mulf %166, %143 : vector<2x8x8xf32>
    %168 = arith.truncf %161 : vector<2x8x8xf32> to vector<2x8x8xbf16>
    "tpu.trace_start"() <{level = 10 : i32, message = "bqk,bkd->bqd"}> : () -> ()
    %cst_52 = arith.constant dense<0.000000e+00> : vector<2x8x8xf32>
    %169 = tpu.matmul %168, %139, %cst_52 {dimension_numbers = #tpu.dot_dimension_numbers<[2], [1], [1], [2], [0, 0, 0, 1, 1, 2], [0], [0]>} : vector<2x8x8xbf16>, vector<2x8x8xbf16>, vector<2x8x8xf32> -> vector<2x8x8xf32>
    "tpu.trace_stop"() : () -> ()
    %170 = arith.addf %167, %169 : vector<2x8x8xf32>
    %171 = tpu.reciprocal %165 {approx = true} : vector<2x8x1xf32> -> vector<2x8x1xf32>
    %172 = vector.broadcast %171 : vector<2x8x1xf32> to vector<2x8x8xf32>
    %173 = arith.mulf %170, %172 : vector<2x8x8xf32>
    %174 = vector.shape_cast %173 : vector<2x8x8xf32> to vector<16x8xf32>
    %175 = arith.truncf %174 : vector<16x8xf32> to vector<16x8xbf16>
    %176 = vector.extract_strided_slice %42 {offsets = [16, 0], sizes = [8, 32], strides = [1, 1]} : vector<32x32xbf16> to vector<8x32xbf16>
    %cst_53 = arith.constant dense<0.000000e+00> : vector<16x32xf32>
    %177 = tpu.matmul %175, %176, %cst_53 {dimension_numbers = #tpu.dot_dimension_numbers<[1], [0], [0], [1], [0, 0, 1, 1], [], []>} : vector<16x8xbf16>, vector<8x32xbf16>, vector<16x32xf32> -> vector<16x32xf32>
    %178 = arith.addf %133, %177 : vector<16x32xf32>
    %179 = vector.extract_strided_slice %35 {offsets = [0, 24], sizes = [16, 8], strides = [1, 1]} : vector<16x32xbf16> to vector<16x8xbf16>
    %180 = vector.shape_cast %179 : vector<16x8xbf16> to vector<2x8x8xbf16>
    %181 = vector.extract_strided_slice %38 {offsets = [0, 24], sizes = [16, 8], strides = [1, 1]} : vector<16x32xbf16> to vector<16x8xbf16>
    %182 = vector.shape_cast %181 : vector<16x8xbf16> to vector<2x8x8xbf16>
    %183 = vector.extract_strided_slice %41 {offsets = [0, 24], sizes = [16, 8], strides = [1, 1]} : vector<16x32xbf16> to vector<16x8xbf16>
    %184 = vector.shape_cast %183 : vector<16x8xbf16> to vector<2x8x8xbf16>
    %185 = tpu.iota {dimensions = array<i32: 0>} : vector<8x8xi32>
    %cst_54 = arith.constant 0xFF800000 : f32
    %186 = vector.broadcast %cst_54 : f32 to vector<2x8x1xf32>
    %cst_55 = arith.constant 0.000000e+00 : f32
    %187 = vector.broadcast %cst_55 : f32 to vector<2x8x1xf32>
    %cst_56 = arith.constant 0.000000e+00 : f32
    %188 = vector.broadcast %cst_56 : f32 to vector<2x8x8xf32>
    "tpu.trace_start"() <{level = 10 : i32, message = "bqd,bkd->bqk"}> : () -> ()
    %cst_57 = arith.constant dense<0.000000e+00> : vector<2x8x8xf32>
    %189 = tpu.matmul %180, %182, %cst_57 {dimension_numbers = #tpu.dot_dimension_numbers<[2], [2], [1], [1], [0, 0, 0, 1, 1, 1], [0], [0]>} : vector<2x8x8xbf16>, vector<2x8x8xbf16>, vector<2x8x8xf32> -> vector<2x8x8xf32>
    "tpu.trace_stop"() : () -> ()
    %190 = tpu.iota {dimensions = array<i32: 1>} : vector<8x8xi32>
    %c0_i32_58 = arith.constant 0 : i32
    %191 = vector.broadcast %c0_i32_58 : i32 to vector<8x8xi32>
    %192 = arith.addi %190, %191 : vector<8x8xi32>
    %193 = arith.cmpi sle, %192, %185 : vector<8x8xi32>
    %194 = vector.shape_cast %193 : vector<8x8xi1> to vector<1x8x8xi1>
    %cst_59 = arith.constant 0xFF800000 : f32
    %195 = vector.shape_cast %194 : vector<1x8x8xi1> to vector<1x8x8xi1>
    %196 = vector.broadcast %195 : vector<1x8x8xi1> to vector<2x8x8xi1>
    %197 = vector.broadcast %cst_59 : f32 to vector<2x8x8xf32>
    %198 = arith.select %196, %189, %197 : vector<2x8x8xi1>, vector<2x8x8xf32>
    %cst_60 = arith.constant dense<0xFF800000> : vector<2x8xf32>
    %199 = vector.multi_reduction <maximumf>, %198, %cst_60 [2] : vector<2x8x8xf32> to vector<2x8xf32>
    %200 = vector.shape_cast %199 : vector<2x8xf32> to vector<2x8x1xf32>
    %201 = arith.maximumf %186, %200 : vector<2x8x1xf32>
    %202 = arith.subf %186, %201 : vector<2x8x1xf32>
    %203 = math.exp %202 : vector<2x8x1xf32>
    %204 = vector.broadcast %201 : vector<2x8x1xf32> to vector<2x8x8xf32>
    %205 = arith.subf %198, %204 : vector<2x8x8xf32>
    %206 = math.exp %205 : vector<2x8x8xf32>
    %207 = arith.mulf %203, %187 : vector<2x8x1xf32>
    %cst_61 = arith.constant dense<0.000000e+00> : vector<2x8xf32>
    %208 = vector.multi_reduction <add>, %206, %cst_61 [2] : vector<2x8x8xf32> to vector<2x8xf32>
    %209 = vector.shape_cast %208 : vector<2x8xf32> to vector<2x8x1xf32>
    %210 = arith.addf %207, %209 : vector<2x8x1xf32>
    %211 = vector.broadcast %203 : vector<2x8x1xf32> to vector<2x8x8xf32>
    %212 = arith.mulf %211, %188 : vector<2x8x8xf32>
    %213 = arith.truncf %206 : vector<2x8x8xf32> to vector<2x8x8xbf16>
    "tpu.trace_start"() <{level = 10 : i32, message = "bqk,bkd->bqd"}> : () -> ()
    %cst_62 = arith.constant dense<0.000000e+00> : vector<2x8x8xf32>
    %214 = tpu.matmul %213, %184, %cst_62 {dimension_numbers = #tpu.dot_dimension_numbers<[2], [1], [1], [2], [0, 0, 0, 1, 1, 2], [0], [0]>} : vector<2x8x8xbf16>, vector<2x8x8xbf16>, vector<2x8x8xf32> -> vector<2x8x8xf32>
    "tpu.trace_stop"() : () -> ()
    %215 = arith.addf %212, %214 : vector<2x8x8xf32>
    %216 = tpu.reciprocal %210 {approx = true} : vector<2x8x1xf32> -> vector<2x8x1xf32>
    %217 = vector.broadcast %216 : vector<2x8x1xf32> to vector<2x8x8xf32>
    %218 = arith.mulf %215, %217 : vector<2x8x8xf32>
    %219 = vector.shape_cast %218 : vector<2x8x8xf32> to vector<16x8xf32>
    %220 = arith.truncf %219 : vector<16x8xf32> to vector<16x8xbf16>
    %221 = vector.extract_strided_slice %42 {offsets = [24, 0], sizes = [8, 32], strides = [1, 1]} : vector<32x32xbf16> to vector<8x32xbf16>
    %cst_63 = arith.constant dense<0.000000e+00> : vector<16x32xf32>
    %222 = tpu.matmul %220, %221, %cst_63 {dimension_numbers = #tpu.dot_dimension_numbers<[1], [0], [0], [1], [0, 0, 1, 1], [], []>} : vector<16x8xbf16>, vector<8x32xbf16>, vector<16x32xf32> -> vector<16x32xf32>
    %223 = arith.addf %178, %222 : vector<16x32xf32>
    %224 = arith.addf %1, %223 : vector<16x32xf32>
    %c0_64 = arith.constant 0 : index
    %c0_65 = arith.constant 0 : index
    %225 = vector.load %arg9[%c0_64, %c0_65] : memref<1x32xf32, #tpu.memory_space<vmem>>, vector<1x32xf32>
    %226 = vector.shape_cast %225 : vector<1x32xf32> to vector<32xf32>
    %227 = vector.shape_cast %226 : vector<32xf32> to vector<1x32xf32>
    %228 = vector.broadcast %227 : vector<1x32xf32> to vector<16x32xf32>
    %229 = arith.addf %224, %228 : vector<16x32xf32>
    %c0_66 = arith.constant 0 : index
    %c0_67 = arith.constant 0 : index
    %230 = vector.load %arg10[%c0_66, %c0_67] : memref<1x32xf32, #tpu.memory_space<vmem>>, vector<1x32xf32>
    %231 = vector.shape_cast %230 : vector<1x32xf32> to vector<32xf32>
    %c0_68 = arith.constant 0 : index
    %c0_69 = arith.constant 0 : index
    %232 = vector.load %arg11[%c0_68, %c0_69] : memref<1x32xf32, #tpu.memory_space<vmem>>, vector<1x32xf32>
    %233 = vector.shape_cast %232 : vector<1x32xf32> to vector<32xf32>
    %cst_70 = arith.constant dense<0.000000e+00> : vector<16xf32>
    %234 = vector.multi_reduction <add>, %229, %cst_70 [1] : vector<16x32xf32> to vector<16xf32>
    %235 = vector.shape_cast %234 : vector<16xf32> to vector<16x1xf32>
    %cst_71 = arith.constant 3.200000e+01 : f32
    %236 = vector.broadcast %cst_71 : f32 to vector<16x1xf32>
    %237 = arith.divf %235, %236 : vector<16x1xf32>
    %238 = vector.broadcast %237 : vector<16x1xf32> to vector<16x32xf32>
    %239 = arith.subf %229, %238 : vector<16x32xf32>
    %240 = arith.mulf %239, %239 : vector<16x32xf32>
    %cst_72 = arith.constant dense<0.000000e+00> : vector<16xf32>
    %241 = vector.multi_reduction <add>, %240, %cst_72 [1] : vector<16x32xf32> to vector<16xf32>
    %242 = vector.shape_cast %241 : vector<16xf32> to vector<16x1xf32>
    %cst_73 = arith.constant 3.200000e+01 : f32
    %243 = vector.broadcast %cst_73 : f32 to vector<16x1xf32>
    %244 = arith.divf %242, %243 : vector<16x1xf32>
    %245 = vector.broadcast %237 : vector<16x1xf32> to vector<16x32xf32>
    %246 = arith.subf %229, %245 : vector<16x32xf32>
    %cst_74 = arith.constant 9.99999974E-6 : f32
    %247 = vector.broadcast %cst_74 : f32 to vector<16x1xf32>
    %248 = arith.addf %244, %247 : vector<16x1xf32>
    %249 = math.rsqrt %248 : vector<16x1xf32>
    %250 = vector.broadcast %249 : vector<16x1xf32> to vector<16x32xf32>
    %251 = arith.mulf %246, %250 : vector<16x32xf32>
    %252 = vector.shape_cast %231 : vector<32xf32> to vector<1x32xf32>
    %253 = vector.broadcast %252 : vector<1x32xf32> to vector<16x32xf32>
    %254 = arith.mulf %251, %253 : vector<16x32xf32>
    %255 = vector.shape_cast %233 : vector<32xf32> to vector<1x32xf32>
    %256 = vector.broadcast %255 : vector<1x32xf32> to vector<16x32xf32>
    %257 = arith.addf %254, %256 : vector<16x32xf32>
    %258 = arith.truncf %257 : vector<16x32xf32> to vector<16x32xbf16>
    %c0_75 = arith.constant 0 : index
    %c0_76 = arith.constant 0 : index
    %259 = vector.load %arg12[%c0_75, %c0_76] : memref<32x128xbf16, #tpu.memory_space<vmem>>, vector<32x128xbf16>
    %cst_77 = arith.constant dense<0.000000e+00> : vector<16x128xf32>
    %260 = tpu.matmul %258, %259, %cst_77 {dimension_numbers = #tpu.dot_dimension_numbers<[1], [0], [0], [1], [0, 0, 1, 1], [], []>} : vector<16x32xbf16>, vector<32x128xbf16>, vector<16x128xf32> -> vector<16x128xf32>
    %c0_78 = arith.constant 0 : index
    %c0_79 = arith.constant 0 : index
    %261 = vector.load %arg13[%c0_78, %c0_79] : memref<1x128xf32, #tpu.memory_space<vmem>>, vector<1x128xf32>
    %262 = vector.shape_cast %261 : vector<1x128xf32> to vector<128xf32>
    %263 = vector.shape_cast %262 : vector<128xf32> to vector<1x128xf32>
    %264 = vector.broadcast %263 : vector<1x128xf32> to vector<16x128xf32>
    %265 = arith.addf %260, %264 : vector<16x128xf32>
    %266 = arith.addf %265, %3 : vector<16x128xf32>
    %267 = math.tanh %266 : vector<16x128xf32>
    %268 = arith.truncf %267 : vector<16x128xf32> to vector<16x128xbf16>
    %c0_80 = arith.constant 0 : index
    %c0_81 = arith.constant 0 : index
    %269 = vector.load %arg14[%c0_80, %c0_81] : memref<128x32xbf16, #tpu.memory_space<vmem>>, vector<128x32xbf16>
    %cst_82 = arith.constant dense<0.000000e+00> : vector<16x32xf32>
    %270 = tpu.matmul %268, %269, %cst_82 {dimension_numbers = #tpu.dot_dimension_numbers<[1], [0], [0], [1], [0, 0, 1, 1], [], []>} : vector<16x128xbf16>, vector<128x32xbf16>, vector<16x32xf32> -> vector<16x32xf32>
    %c0_83 = arith.constant 0 : index
    %c0_84 = arith.constant 0 : index
    %271 = vector.load %arg15[%c0_83, %c0_84] : memref<1x32xf32, #tpu.memory_space<vmem>>, vector<1x32xf32>
    %272 = vector.shape_cast %271 : vector<1x32xf32> to vector<32xf32>
    %273 = vector.shape_cast %272 : vector<32xf32> to vector<1x32xf32>
    %274 = vector.broadcast %273 : vector<1x32xf32> to vector<16x32xf32>
    %275 = arith.addf %270, %274 : vector<16x32xf32>
    %276 = arith.addf %229, %275 : vector<16x32xf32>
    %277 = vector.shape_cast %276 : vector<16x32xf32> to vector<2x8x32xf32>
    %c0_85 = arith.constant 0 : index
    %c0_86 = arith.constant 0 : index
    %c0_87 = arith.constant 0 : index
    %278 = vector.load %arg16[%c0_85, %c0_86, %c0_87] : memref<2x8x32xf32, #tpu.memory_space<vmem>>, vector<2x8x32xf32>
    tpu.vector_store %arg16[%c0_85, %c0_86, %c0_87], %277 {strides = array<i32>} : memref<2x8x32xf32, #tpu.memory_space<vmem>>, vector<2x8x32xf32>,
    %279 = vector.shape_cast %267 : vector<16x128xf32> to vector<2x8x128xf32>
    %c0_88 = arith.constant 0 : index
    %c0_89 = arith.constant 0 : index
    %c0_90 = arith.constant 0 : index
    %280 = vector.load %arg17[%c0_88, %c0_89, %c0_90] : memref<2x8x128xf32, #tpu.memory_space<vmem>>, vector<2x8x128xf32>
    tpu.vector_store %arg17[%c0_88, %c0_89, %c0_90], %279 {strides = array<i32>} : memref<2x8x128xf32, #tpu.memory_space<vmem>>, vector<2x8x128xf32>,
    return
  }
  func.func @transform_0(%arg0: i32) -> (i32, i32, i32) {
    %c0_i32 = arith.constant 0 : i32
    %c0_i32_0 = arith.constant 0 : i32
    %c0_i32_1 = arith.constant 0 : i32
    return %arg0, %c0_i32, %c0_i32_0 : i32, i32, i32
  }
  func.func @transform_1(%arg0: i32) -> (i32, i32, i32) {
    %c0_i32 = arith.constant 0 : i32
    %c0_i32_0 = arith.constant 0 : i32
    %c0_i32_1 = arith.constant 0 : i32
    return %arg0, %c0_i32, %c0_i32_0 : i32, i32, i32
  }
  func.func @transform_2(%arg0: i32) -> (i32, i32) {
    %c0_i32 = arith.constant 0 : i32
    %c0_i32_0 = arith.constant 0 : i32
    %c0_i32_1 = arith.constant 0 : i32
    return %c0_i32, %c0_i32_0 : i32, i32
  }
  func.func @transform_3(%arg0: i32) -> (i32, i32) {
    %c0_i32 = arith.constant 0 : i32
    %c0_i32_0 = arith.constant 0 : i32
    %c0_i32_1 = arith.constant 0 : i32
    return %c0_i32, %c0_i32_0 : i32, i32
  }
  func.func @transform_4(%arg0: i32) -> (i32, i32) {
    %c0_i32 = arith.constant 0 : i32
    %c0_i32_0 = arith.constant 0 : i32
    %c0_i32_1 = arith.constant 0 : i32
    return %c0_i32, %c0_i32_0 : i32, i32
  }
  func.func @transform_5(%arg0: i32) -> (i32, i32) {
    %c0_i32 = arith.constant 0 : i32
    %c0_i32_0 = arith.constant 0 : i32
    %c0_i32_1 = arith.constant 0 : i32
    return %c0_i32, %c0_i32_0 : i32, i32
  }
  func.func @transform_6(%arg0: i32) -> (i32, i32) {
    %c0_i32 = arith.constant 0 : i32
    %c0_i32_0 = arith.constant 0 : i32
    %c0_i32_1 = arith.constant 0 : i32
    return %c0_i32, %c0_i32_0 : i32, i32
  }
  func.func @transform_7(%arg0: i32) -> (i32, i32) {
    %c0_i32 = arith.constant 0 : i32
    %c0_i32_0 = arith.constant 0 : i32
    %c0_i32_1 = arith.constant 0 : i32
    return %c0_i32, %c0_i32_0 : i32, i32
  }
  func.func @transform_8(%arg0: i32) -> (i32, i32) {
    %c0_i32 = arith.constant 0 : i32
    %c0_i32_0 = arith.constant 0 : i32
    %c0_i32_1 = arith.constant 0 : i32
    return %c0_i32, %c0_i32_0 : i32, i32
  }
  func.func @transform_9(%arg0: i32) -> (i32, i32) {
    %c0_i32 = arith.constant 0 : i32
    %c0_i32_0 = arith.constant 0 : i32
    %c0_i32_1 = arith.constant 0 : i32
    return %c0_i32, %c0_i32_0 : i32, i32
  }
  func.func @transform_10(%arg0: i32) -> (i32, i32) {
    %c0_i32 = arith.constant 0 : i32
    %c0_i32_0 = arith.constant 0 : i32
    %c0_i32_1 = arith.constant 0 : i32
    return %c0_i32, %c0_i32_0 : i32, i32
  }
  func.func @transform_11(%arg0: i32) -> (i32, i32) {
    %c0_i32 = arith.constant 0 : i32
    %c0_i32_0 = arith.constant 0 : i32
    %c0_i32_1 = arith.constant 0 : i32
    return %c0_i32, %c0_i32_0 : i32, i32
  }
  func.func @transform_12(%arg0: i32) -> (i32, i32) {
    %c0_i32 = arith.constant 0 : i32
    %c0_i32_0 = arith.constant 0 : i32
    %c0_i32_1 = arith.constant 0 : i32
    return %c0_i32, %c0_i32_0 : i32, i32
  }
  func.func @transform_13(%arg0: i32) -> (i32, i32) {
    %c0_i32 = arith.constant 0 : i32
    %c0_i32_0 = arith.constant 0 : i32
    %c0_i32_1 = arith.constant 0 : i32
    return %c0_i32, %c0_i32_0 : i32, i32
  }
  func.func @transform_14(%arg0: i32) -> (i32, i32) {
    %c0_i32 = arith.constant 0 : i32
    %c0_i32_0 = arith.constant 0 : i32
    %c0_i32_1 = arith.constant 0 : i32
    return %c0_i32, %c0_i32_0 : i32, i32
  }
  func.func @transform_15(%arg0: i32) -> (i32, i32, i32) {
    %c0_i32 = arith.constant 0 : i32
    %c0_i32_0 = arith.constant 0 : i32
    %c0_i32_1 = arith.constant 0 : i32
    return %arg0, %c0_i32, %c0_i32_0 : i32, i32, i32
  }
  func.func @transform_16(%arg0: i32) -> (i32, i32, i32) {
    %c0_i32 = arith.constant 0 : i32
    %c0_i32_0 = arith.constant 0 : i32
    %c0_i32_1 = arith.constant 0 : i32
    return %arg0, %c0_i32, %c0_i32_0 : i32, i32, i32
  }
}

</mosaic_0001>

<llo_original>
// kernel: tpu_custom_call.1
$region0: #{tpu_custom_call.1}
  #allocation0 [shape = 'u32[]', space=smem, size = 0x4, offset = 0x4, fixed_abs, tag = 'smem constant byte address 0x4 - core index']
  #allocation1 [shape = 'u32[144,128]{1,0:T(1,128)}', space=vmem, size = 0x12000, scoped, tag = 'internal scratch']
  %s0 = inlined_call_operand.hbm [shape: f32[2,8,32], index: 0, kind: input, shape index: {}, may-alias: {0,15}]
  %s1 = inlined_call_operand.hbm [shape: f32[2,8,128], index: 1, kind: input, shape index: {}, may-alias: {1,16}]
  %s2 = inlined_call_operand.vmem [shape: f32[1,32], index: 2, kind: input, shape index: {}]
  %s3 = inlined_call_operand.vmem [shape: f32[1,32], index: 3, kind: input, shape index: {}]
  %s4 = inlined_call_operand.vmem [shape: bf16[32,32], index: 4, kind: input, shape index: {}]
  %s5 = inlined_call_operand.vmem [shape: bf16[32,32], index: 5, kind: input, shape index: {}]
  %s6 = inlined_call_operand.vmem [shape: bf16[32,32], index: 6, kind: input, shape index: {}]
  %s7 = inlined_call_operand.vmem [shape: bf16[32,32], index: 7, kind: input, shape index: {}]
  %s8 = inlined_call_operand.vmem [shape: f32[1,32], index: 8, kind: input, shape index: {}]
  %s9 = inlined_call_operand.vmem [shape: f32[1,32], index: 9, kind: input, shape index: {}]
  %s10 = inlined_call_operand.vmem [shape: f32[1,32], index: 10, kind: input, shape index: {}]
  %s11 = inlined_call_operand.vmem [shape: bf16[32,128], index: 11, kind: input, shape index: {}]
  %s12 = inlined_call_operand.vmem [shape: f32[1,128], index: 12, kind: input, shape index: {}]
  %s13 = inlined_call_operand.vmem [shape: bf16[128,32], index: 13, kind: input, shape index: {}]
  %s14 = inlined_call_operand.vmem [shape: f32[1,32], index: 14, kind: input, shape index: {}]
  %s15 = inlined_call_operand.hbm [shape: f32[2,8,32], index: 15, kind: output, shape index: {0}, may-alias: {0,15}]
  %s16 = inlined_call_operand.hbm [shape: f32[2,8,128], index: 16, kind: output, shape index: {1}, may-alias: {1,16}]
  %17 = xla_tuple %s15, %s16
  %s18 = sld [smem:[#allocation0]]
  $region86: #{tpu_custom_call.1} parent=0
    _
  %s20 = ssub.s32 1, %s18
  %s21 = scalar_select 0, %s20, %s18
  $region1: #{tpu_custom_call.1} parent=0
    #allocation2 [shape = 'u8[8192]{0}', space=vmem, size = 0x2000, scoped, tag = 'input window, operand 0, single buffered']
    #allocation3 [shape = 's32[1]{0}', space=sflag, size = 0x4, scoped, tag = 'scoped memory for tpu_custom_call.1']
    #allocation4 [shape = 's32[1]{0}', space=sflag, size = 0x4, scoped, tag = 'scoped memory for tpu_custom_call.1']
    #allocation5 [shape = 'u8[8192]{0}', space=vmem, size = 0x2000, scoped, tag = 'input window, operand 1, single buffered']
    #allocation6 [shape = 's32[1]{0}', space=sflag, size = 0x4, scoped, tag = 'scoped memory for tpu_custom_call.1']
    #allocation7 [shape = 'u8[8192]{0}', space=vmem, size = 0x2000, scoped, tag = 'output window, operand 0, single buffered']
    #allocation8 [shape = 'u8[8192]{0}', space=vmem, size = 0x2000, scoped, tag = 'output window, operand 1, single buffered']
    #allocation9 [shape = 's32[1]{0}', space=sflag, size = 0x4, scoped, tag = 'scoped memory for tpu_custom_call.1']
    %22 = vsyncpa [#allocation3], 0
    %23 = vsyncpa [#allocation6], 0
    %24 = vsyncpa [#allocation4], 0
    %25 = vsyncpa [#allocation9], 0
    // Predicated region
    $region2: #{tpu_custom_call.1} parent=1 // pred_check
      _
    $region3: #{tpu_custom_call.1} parent=1 // pred_check_branch
      %27 = sbr.rel (0) target = $region5
    $region4: #{tpu_custom_call.1} parent=1 // pred_region
      %s29 = ssub.s32 256, 256
      %30 = vsyncadd [#allocation3], %s29
      %s31 = sshll.u32 [#allocation2], 4
      %s32 = int_to_ptr.vmem [resolvable:$true] %s31
      %37 = dma.hbm_to_vmem [thread:$0]  %s0, 256, %s32, [#allocation3], 128, 128, 8
    $region5: #{tpu_custom_call.1} parent=1 // pred_fallthru
      _
    // Predicated region
    $region6: #{tpu_custom_call.1} parent=1 // pred_check
      _
    $region7: #{tpu_custom_call.1} parent=1 // pred_check_branch
      %39 = sbr.rel (0) target = $region9
    $region8: #{tpu_custom_call.1} parent=1 // pred_region
      %s41 = ssub.s32 256, 256
      %42 = vsyncadd [#allocation6], %s41
      %s43 = sshll.u32 [#allocation5], 4
      %s44 = int_to_ptr.vmem [resolvable:$true] %s43
      %49 = dma.hbm_to_vmem [thread:$0]  %s1, 256, %s44, [#allocation6], 128, 128, 8
    $region9: #{tpu_custom_call.1} parent=1 // pred_fallthru
      _
    // Predicated region
    $region10: #{tpu_custom_call.1} parent=1 // pred_check
      _
    $region11: #{tpu_custom_call.1} parent=1 // pred_check_branch
      %51 = sbr.rel (0) target = $region13
    $region12: #{tpu_custom_call.1} parent=1 // pred_region
      _
    $region13: #{tpu_custom_call.1} parent=1 // pred_fallthru
      _
    // Predicated region
    $region14: #{tpu_custom_call.1} parent=1 // pred_check
      _
    $region15: #{tpu_custom_call.1} parent=1 // pred_check_branch
      %53 = sbr.rel (0) target = $region17
    $region16: #{tpu_custom_call.1} parent=1 // pred_region
      _
    $region17: #{tpu_custom_call.1} parent=1 // pred_fallthru
      _
    // Predicated region
    $region18: #{tpu_custom_call.1} parent=1 // pred_check
      _
    $region19: #{tpu_custom_call.1} parent=1 // pred_check_branch
      %55 = sbr.rel (0) target = $region21
    $region20: #{tpu_custom_call.1} parent=1 // pred_region
      _
    $region21: #{tpu_custom_call.1} parent=1 // pred_fallthru
      _
    // Predicated region
    $region22: #{tpu_custom_call.1} parent=1 // pred_check
      _
    $region23: #{tpu_custom_call.1} parent=1 // pred_check_branch
      %57 = sbr.rel (0) target = $region25
    $region24: #{tpu_custom_call.1} parent=1 // pred_region
      _
    $region25: #{tpu_custom_call.1} parent=1 // pred_fallthru
      _
    // Predicated region
    $region26: #{tpu_custom_call.1} parent=1 // pred_check
      _
    $region27: #{tpu_custom_call.1} parent=1 // pred_check_branch
      %59 = sbr.rel (0) target = $region29
    $region28: #{tpu_custom_call.1} parent=1 // pred_region
      _
    $region29: #{tpu_custom_call.1} parent=1 // pred_fallthru
      _
    // Predicated region
    $region30: #{tpu_custom_call.1} parent=1 // pred_check
      _
    $region31: #{tpu_custom_call.1} parent=1 // pred_check_branch
      %61 = sbr.rel (0) target = $region33
    $region32: #{tpu_custom_call.1} parent=1 // pred_region
      _
    $region33: #{tpu_custom_call.1} parent=1 // pred_fallthru
      _
    // Predicated region
    $region34: #{tpu_custom_call.1} parent=1 // pred_check
      _
    $region35: #{tpu_custom_call.1} parent=1 // pred_check_branch
      %63 = sbr.rel (0) target = $region37
    $region36: #{tpu_custom_call.1} parent=1 // pred_region
      _
    $region37: #{tpu_custom_call.1} parent=1 // pred_fallthru
      _
    // Predicated region
    $region38: #{tpu_custom_call.1} parent=1 // pred_check
      _
    $region39: #{tpu_custom_call.1} parent=1 // pred_check_branch
      %65 = sbr.rel (0) target = $region41
    $region40: #{tpu_custom_call.1} parent=1 // pred_region
      _
    $region41: #{tpu_custom_call.1} parent=1 // pred_fallthru
      _
    // Predicated region
    $region42: #{tpu_custom_call.1} parent=1 // pred_check
      _
    $region43: #{tpu_custom_call.1} parent=1 // pred_check_branch
      %67 = sbr.rel (0) target = $region45
    $region44: #{tpu_custom_call.1} parent=1 // pred_region
      _
    $region45: #{tpu_custom_call.1} parent=1 // pred_fallthru
      _
    // Predicated region
    $region46: #{tpu_custom_call.1} parent=1 // pred_check
      _
    $region47: #{tpu_custom_call.1} parent=1 // pred_check_branch
      %69 = sbr.rel (0) target = $region49
    $region48: #{tpu_custom_call.1} parent=1 // pred_region
      _
    $region49: #{tpu_custom_call.1} parent=1 // pred_fallthru
      _
    // Predicated region
    $region50: #{tpu_custom_call.1} parent=1 // pred_check
      _
    $region51: #{tpu_custom_call.1} parent=1 // pred_check_branch
      %71 = sbr.rel (0) target = $region53
    $region52: #{tpu_custom_call.1} parent=1 // pred_region
      _
    $region53: #{tpu_custom_call.1} parent=1 // pred_fallthru
      _
    // Predicated region
    $region54: #{tpu_custom_call.1} parent=1 // pred_check
      _
    $region55: #{tpu_custom_call.1} parent=1 // pred_check_branch
      %73 = sbr.rel (0) target = $region57
    $region56: #{tpu_custom_call.1} parent=1 // pred_region
      _
    $region57: #{tpu_custom_call.1} parent=1 // pred_fallthru
      _
    // Predicated region
    $region58: #{tpu_custom_call.1} parent=1 // pred_check
      _
    $region59: #{tpu_custom_call.1} parent=1 // pred_check_branch
      %75 = sbr.rel (0) target = $region61
    $region60: #{tpu_custom_call.1} parent=1 // pred_region
      _
    $region61: #{tpu_custom_call.1} parent=1 // pred_fallthru
      _
    // Predicated region
    $region62: #{tpu_custom_call.1} parent=1 // pred_check
      _
    $region63: #{tpu_custom_call.1} parent=1 // pred_check_branch
      %77 = sbr.rel (0) target = $region65
    $region64: #{tpu_custom_call.1} parent=1 // pred_region
      %78 = dma.done [#allocation3], 256
    $region65: #{tpu_custom_call.1} parent=1 // pred_fallthru
      _
    // Predicated region
    $region66: #{tpu_custom_call.1} parent=1 // pred_check
      _
    $region67: #{tpu_custom_call.1} parent=1 // pred_check_branch
      %80 = sbr.rel (0) target = $region69
    $region68: #{tpu_custom_call.1} parent=1 // pred_region
      %81 = dma.done [#allocation6], 256
    $region69: #{tpu_custom_call.1} parent=1 // pred_fallthru
      _
    %v83 = vld [vmem:[#allocation2] sm:$0xff]
    %v84 = vld [vmem:[#allocation2 + $0x8] sm:$0xff]
    %v85 = vld [vmem:[#allocation5] sm:$0xff]
    %v86 = vld [vmem:[#allocation5 + $0x8] sm:$0xff]
    %v87 = vld [vmem:[%s2] sm:$0x1]
    %v88 = vld [vmem:[%s3] sm:$0x1]
    %vm89 = vcmask 261120
    %v90 = vsel %vm89, %v83, 0.0
    %91 = vadd.xlane.f32.xlu0 %v90
    %v92 = vpop.xlane.xlu0 %91
    %v93 = vsel %vm89, %v84, 0.0
    %94 = vadd.xlane.f32.xlu0 %v93
    %v95 = vpop.xlane.xlu0 %94
    %v96 = vrcp.pop 32.0
    %v97 = vmul.f32 %v92, %v96
    %v98 = vmul.f32 %v95, %v96
    %v99 = vsub.f32 %v83, %v97
    %v100 = vsub.f32 %v84, %v98
    %v101 = vmul.f32 %v99, %v99
    %v102 = vmul.f32 %v100, %v100
    %v103 = vsel %vm89, %v101, 0.0
    %104 = vadd.xlane.f32.xlu0 %v103
    %v105 = vpop.xlane.xlu0 %104
    %v106 = vsel %vm89, %v102, 0.0
    %107 = vadd.xlane.f32.xlu0 %v106
    %v108 = vpop.xlane.xlu0 %107
    %v109 = vmul.f32 %v105, %v96
    %v110 = vmul.f32 %v108, %v96
    %v111 = vadd.f32 %v109, 1e-05
    %v112 = vadd.f32 %v110, 1e-05
    %v113 = vrsqrt.pop %v111
    %v114 = vrsqrt.pop %v112
    %v115 = vmul.f32 %v99, %v113
    %v116 = vmul.f32 %v100, %v114
    %v118 = vlaneseq
    %v119 = vshrl.u32 %v118, 7
    %v120 = vsub.s32 0, %v119
    %v121 = vrot.slane %v87, %v120
    %v123 = vmul.f32 %v115, %v121
    %v124 = vmul.f32 %v116, %v121
    %v126 = vlaneseq
    %v127 = vshrl.u32 %v126, 7
    %v128 = vsub.s32 0, %v127
    %v129 = vrot.slane %v88, %v128
    %v131 = vadd.f32 %v123, %v129
    %v132 = vadd.f32 %v124, %v129
    %v133 = vpack.c.bf16 %v132, %v131
    %v134 = vld [vmem:[%s4] sm:$0xf]
    %v135 = vld [vmem:[%s4 + $0x4] sm:$0xf]
    %v136 = vld [vmem:[%s4 + $0x8] sm:$0xf]
    %v137 = vld [vmem:[%s4 + $0xc] sm:$0xf]
    %v142 = vunpack.c.l.b16 %v134
    %v143 = vunpack.c.l.b16 %v135
    %v144 = vunpack.c.l.b16 %v136
    %v145 = vunpack.c.l.b16 %v137
    %v146 = vpack.c.b16 %v143, %v142
    %v147 = vpack.c.b16 %v145, %v144
    %v151 = vsel %vm89, %v133, 0
    %153 = vmatprep.subr.bf16.mxu0 0
    %154 = vmatpush1.bf16.msra.mxu0 0
    %155 = vmatprep.subr.bf16.mxu0 0
    %156 = vmatpush1.bf16.msra.mxu0 0
    %157 = vmatprep.subr.bf16.mxu0 0
    %158 = vmatpush1.bf16.msra.mxu0 0
    %159 = vmatprep.subr.bf16.mxu0 0
    %160 = vmatpush1.bf16.msra.mxu0 0
    %161 = vmatprep.subr.bf16.mxu0 0
    %162 = vmatpush1.bf16.msra.mxu0 0
    %163 = vmatprep.subr.bf16.mxu0 0
    %164 = vmatpush1.bf16.msra.mxu0 0
    %165 = vmatprep.subr.bf16.mxu0 0
    %166 = vmatpush1.bf16.msra.mxu0 %v147
    %167 = vmatprep.subr.bf16.mxu0 0
    %168 = vmatpush1.bf16.msra.mxu0 %v146
    %169 = vmatprep.subr.bf16.mxu0 0
    %170 = vmatpush2.bf16.msra.mxu0 0
    %171 = vmatprep.subr.bf16.mxu0 0
    %172 = vmatpush2.bf16.msra.mxu0 0
    %173 = vmatprep.subr.bf16.mxu0 0
    %174 = vmatpush2.bf16.msra.mxu0 0
    %175 = vmatprep.subr.bf16.mxu0 0
    %176 = vmatpush2.bf16.msra.mxu0 0
    %177 = vmatprep.subr.bf16.mxu0 0
    %178 = vmatpush2.bf16.msra.mxu0 0
    %179 = vmatprep.subr.bf16.mxu0 0
    %180 = vmatpush2.bf16.msra.mxu0 0
    %181 = vmatprep.subr.bf16.mxu0 0
    %182 = vmatpush2.bf16.msra.mxu0 0
    %183 = vmatprep.subr.bf16.mxu0 0
    %184 = vmatpush2.bf16.msra.mxu0 0
    %185 = vmatprep.mubr.bf16.mxu0 0
    %186 = vmatmul.mubr.bf16.gmra.mxu0 %v151
    %v187 = vpop.f32.mrf.mxu0
    %v188 = vadd.f32 0.0, %v187
    %v189 = vpop.f32.mrf.mxu0
    %v190 = vpop.f32.mrf.mxu0
    %v191 = vadd.f32 0.0, %v190
    %v192 = vpop.f32.mrf.mxu0
    %193 = vdwg.mxu0
    %v194 = vpack.c.bf16 %v191, %v188
    %v195 = vld [vmem:[%s5] sm:$0xf]
    %v196 = vld [vmem:[%s5 + $0x4] sm:$0xf]
    %v197 = vld [vmem:[%s5 + $0x8] sm:$0xf]
    %v198 = vld [vmem:[%s5 + $0xc] sm:$0xf]
    %v203 = vunpack.c.l.b16 %v195
    %v204 = vunpack.c.l.b16 %v196
    %v205 = vunpack.c.l.b16 %v197
    %v206 = vunpack.c.l.b16 %v198
    %v207 = vpack.c.b16 %v204, %v203
    %v208 = vpack.c.b16 %v206, %v205
    %211 = vmatprep.subr.bf16.mxu0 0
    %212 = vmatpush1.bf16.msra.mxu0 0
    %213 = vmatprep.subr.bf16.mxu0 0
    %214 = vmatpush1.bf16.msra.mxu0 0
    %215 = vmatprep.subr.bf16.mxu0 0
    %216 = vmatpush1.bf16.msra.mxu0 0
    %217 = vmatprep.subr.bf16.mxu0 0
    %218 = vmatpush1.bf16.msra.mxu0 0
    %219 = vmatprep.subr.bf16.mxu0 0
    %220 = vmatpush1.bf16.msra.mxu0 0
    %221 = vmatprep.subr.bf16.mxu0 0
    %222 = vmatpush1.bf16.msra.mxu0 0
    %223 = vmatprep.subr.bf16.mxu0 0
    %224 = vmatpush1.bf16.msra.mxu0 %v208
    %225 = vmatprep.subr.bf16.mxu0 0
    %226 = vmatpush1.bf16.msra.mxu0 %v207
    %227 = vmatprep.subr.bf16.mxu0 0
    %228 = vmatpush2.bf16.msra.mxu0 0
    %229 = vmatprep.subr.bf16.mxu0 0
    %230 = vmatpush2.bf16.msra.mxu0 0
    %231 = vmatprep.subr.bf16.mxu0 0
    %232 = vmatpush2.bf16.msra.mxu0 0
    %233 = vmatprep.subr.bf16.mxu0 0
    %234 = vmatpush2.bf16.msra.mxu0 0
    %235 = vmatprep.subr.bf16.mxu0 0
    %236 = vmatpush2.bf16.msra.mxu0 0
    %237 = vmatprep.subr.bf16.mxu0 0
    %238 = vmatpush2.bf16.msra.mxu0 0
    %239 = vmatprep.subr.bf16.mxu0 0
    %240 = vmatpush2.bf16.msra.mxu0 0
    %241 = vmatprep.subr.bf16.mxu0 0
    %242 = vmatpush2.bf16.msra.mxu0 0
    %243 = vmatprep.mubr.bf16.mxu0 0
    %244 = vmatmul.mubr.bf16.gmra.mxu0 %v151
    %v245 = vpop.f32.mrf.mxu0
    %v246 = vadd.f32 0.0, %v245
    %v247 = vpop.f32.mrf.mxu0
    %v248 = vpop.f32.mrf.mxu0
    %v249 = vadd.f32 0.0, %v248
    %v250 = vpop.f32.mrf.mxu0
    %251 = vdwg.mxu0
    %v252 = vpack.c.bf16 %v249, %v246
    %v253 = vld [vmem:[%s6] sm:$0xf]
    %v254 = vld [vmem:[%s6 + $0x4] sm:$0xf]
    %v255 = vld [vmem:[%s6 + $0x8] sm:$0xf]
    %v256 = vld [vmem:[%s6 + $0xc] sm:$0xf]
    %v261 = vunpack.c.l.b16 %v253
    %v262 = vunpack.c.l.b16 %v254
    %v263 = vunpack.c.l.b16 %v255
    %v264 = vunpack.c.l.b16 %v256
    %v265 = vpack.c.b16 %v262, %v261
    %v266 = vpack.c.b16 %v264, %v263
    %269 = vmatprep.subr.bf16.mxu0 0
    %270 = vmatpush1.bf16.msra.mxu0 0
    %271 = vmatprep.subr.bf16.mxu0 0
    %272 = vmatpush1.bf16.msra.mxu0 0
    %273 = vmatprep.subr.bf16.mxu0 0
    %274 = vmatpush1.bf16.msra.mxu0 0
    %275 = vmatprep.subr.bf16.mxu0 0
    %276 = vmatpush1.bf16.msra.mxu0 0
    %277 = vmatprep.subr.bf16.mxu0 0
    %278 = vmatpush1.bf16.msra.mxu0 0
    %279 = vmatprep.subr.bf16.mxu0 0
    %280 = vmatpush1.bf16.msra.mxu0 0
    %281 = vmatprep.subr.bf16.mxu0 0
    %282 = vmatpush1.bf16.msra.mxu0 %v266
    %283 = vmatprep.subr.bf16.mxu0 0
    %284 = vmatpush1.bf16.msra.mxu0 %v265
    %285 = vmatprep.subr.bf16.mxu0 0
    %286 = vmatpush2.bf16.msra.mxu0 0
    %287 = vmatprep.subr.bf16.mxu0 0
    %288 = vmatpush2.bf16.msra.mxu0 0
    %289 = vmatprep.subr.bf16.mxu0 0
    %290 = vmatpush2.bf16.msra.mxu0 0
    %291 = vmatprep.subr.bf16.mxu0 0
    %292 = vmatpush2.bf16.msra.mxu0 0
    %293 = vmatprep.subr.bf16.mxu0 0
    %294 = vmatpush2.bf16.msra.mxu0 0
    %295 = vmatprep.subr.bf16.mxu0 0
    %296 = vmatpush2.bf16.msra.mxu0 0
    %297 = vmatprep.subr.bf16.mxu0 0
    %298 = vmatpush2.bf16.msra.mxu0 0
    %299 = vmatprep.subr.bf16.mxu0 0
    %300 = vmatpush2.bf16.msra.mxu0 0
    %301 = vmatprep.mubr.bf16.mxu0 0
    %302 = vmatmul.mubr.bf16.gmra.mxu0 %v151
    %v303 = vpop.f32.mrf.mxu0
    %v304 = vadd.f32 0.0, %v303
    %v305 = vpop.f32.mrf.mxu0
    %v306 = vpop.f32.mrf.mxu0
    %v307 = vadd.f32 0.0, %v306
    %v308 = vpop.f32.mrf.mxu0
    %309 = vdwg.mxu0
    %v310 = vpack.c.bf16 %v307, %v304
    %v311 = vld [vmem:[%s7] sm:$0xf]
    %v312 = vld [vmem:[%s7 + $0x4] sm:$0xf]
    %v313 = vld [vmem:[%s7 + $0x8] sm:$0xf]
    %v314 = vld [vmem:[%s7 + $0xc] sm:$0xf]
    %v316 = vunpack.c.l.b16 %v194
    %v317 = vunpack.c.h.b16 %v194
    %v318 = vpack.c.b16 %v316, %v316
    %v319 = vpack.c.b16 %v317, %v317
    %v321 = vunpack.c.l.b16 %v252
    %v322 = vunpack.c.h.b16 %v252
    %v323 = vpack.c.b16 %v321, %v321
    %v324 = vpack.c.b16 %v322, %v322
    %v326 = vunpack.c.l.b16 %v310
    %v327 = vunpack.c.h.b16 %v310
    %v328 = vpack.c.b16 %v326, %v326
    %v329 = vpack.c.b16 %v327, %v327
    %v330 = vlaneseq
    %v331 = vshrl.u32 %v330, 7
    %vm332 = vcmask 64512
    %v334 = vsel %vm332, %v318, 0
    %v337 = vsel %vm332, %v323, 0
    %339 = vmatprep.subr.bf16.mxu0 0
    %340 = vmatpush1.bf16.xpose.msra.mxu0 0
    %341 = vmatprep.subr.bf16.mxu0 0
    %342 = vmatpush1.bf16.xpose.msra.mxu0 0
    %343 = vmatprep.subr.bf16.mxu0 0
    %344 = vmatpush1.bf16.xpose.msra.mxu0 0
    %345 = vmatprep.subr.bf16.mxu0 0
    %346 = vmatpush1.bf16.xpose.msra.mxu0 0
    %347 = vmatprep.subr.bf16.mxu0 0
    %348 = vmatpush1.bf16.xpose.msra.mxu0 0
    %349 = vmatprep.subr.bf16.mxu0 0
    %350 = vmatpush1.bf16.xpose.msra.mxu0 0
    %351 = vmatprep.subr.bf16.mxu0 0
    %352 = vmatpush1.bf16.xpose.msra.mxu0 0
    %353 = vmatprep.subr.bf16.mxu0 0
    %354 = vmatpush1.bf16.xpose.msra.mxu0 %v337
    %355 = vmatprep.subr.bf16.mxu0 0
    %356 = vmatpush2.bf16.xpose.msra.mxu0 0
    %357 = vmatprep.subr.bf16.mxu0 0
    %358 = vmatpush2.bf16.xpose.msra.mxu0 0
    %359 = vmatprep.subr.bf16.mxu0 0
    %360 = vmatpush2.bf16.xpose.msra.mxu0 0
    %361 = vmatprep.subr.bf16.mxu0 0
    %362 = vmatpush2.bf16.xpose.msra.mxu0 0
    %363 = vmatprep.subr.bf16.mxu0 0
    %364 = vmatpush2.bf16.xpose.msra.mxu0 0
    %365 = vmatprep.subr.bf16.mxu0 0
    %366 = vmatpush2.bf16.xpose.msra.mxu0 0
    %367 = vmatprep.subr.bf16.mxu0 0
    %368 = vmatpush2.bf16.xpose.msra.mxu0 0
    %369 = vmatprep.subr.bf16.mxu0 0
    %370 = vmatpush2.bf16.xpose.msra.mxu0 0
    %371 = vmatprep.mubr.bf16.mxu0 0
    %372 = vmatmul.mubr.bf16.gmra.mxu0 %v334
    %v373 = vpop.f32.mrf.mxu0
    %v374 = vadd.f32 0.0, %v373
    %v375 = vpop.f32.mrf.mxu0
    %v376 = vpop.f32.mrf.mxu0
    %v377 = vpop.f32.mrf.mxu0
    %378 = vdwg.mxu0
    %v380 = vsel %vm332, %v319, 0
    %v383 = vsel %vm332, %v324, 0
    %385 = vmatprep.subr.bf16.mxu0 0
    %386 = vmatpush1.bf16.xpose.msra.mxu0 0
    %387 = vmatprep.subr.bf16.mxu0 0
    %388 = vmatpush1.bf16.xpose.msra.mxu0 0
    %389 = vmatprep.subr.bf16.mxu0 0
    %390 = vmatpush1.bf16.xpose.msra.mxu0 0
    %391 = vmatprep.subr.bf16.mxu0 0
    %392 = vmatpush1.bf16.xpose.msra.mxu0 0
    %393 = vmatprep.subr.bf16.mxu0 0
    %394 = vmatpush1.bf16.xpose.msra.mxu0 0
    %395 = vmatprep.subr.bf16.mxu0 0
    %396 = vmatpush1.bf16.xpose.msra.mxu0 0
    %397 = vmatprep.subr.bf16.mxu0 0
    %398 = vmatpush1.bf16.xpose.msra.mxu0 0
    %399 = vmatprep.subr.bf16.mxu0 0
    %400 = vmatpush1.bf16.xpose.msra.mxu0 %v383
    %401 = vmatprep.subr.bf16.mxu0 0
    %402 = vmatpush2.bf16.xpose.msra.mxu0 0
    %403 = vmatprep.subr.bf16.mxu0 0
    %404 = vmatpush2.bf16.xpose.msra.mxu0 0
    %405 = vmatprep.subr.bf16.mxu0 0
    %406 = vmatpush2.bf16.xpose.msra.mxu0 0
    %407 = vmatprep.subr.bf16.mxu0 0
    %408 = vmatpush2.bf16.xpose.msra.mxu0 0
    %409 = vmatprep.subr.bf16.mxu0 0
    %410 = vmatpush2.bf16.xpose.msra.mxu0 0
    %411 = vmatprep.subr.bf16.mxu0 0
    %412 = vmatpush2.bf16.xpose.msra.mxu0 0
    %413 = vmatprep.subr.bf16.mxu0 0
    %414 = vmatpush2.bf16.xpose.msra.mxu0 0
    %415 = vmatprep.subr.bf16.mxu0 0
    %416 = vmatpush2.bf16.xpose.msra.mxu0 0
    %417 = vmatprep.mubr.bf16.mxu0 0
    %418 = vmatmul.mubr.bf16.gmra.mxu0 %v380
    %v419 = vpop.f32.mrf.mxu0
    %v420 = vadd.f32 0.0, %v419
    %v421 = vpop.f32.mrf.mxu0
    %v422 = vpop.f32.mrf.mxu0
    %v423 = vpop.f32.mrf.mxu0
    %424 = vdwg.mxu0
    %v425 = vlaneseq
    %v426 = vand.u32 %v425, 127
    %vm427 = vcmp.le.s32.totalorder %v426, %v331
    %v428 = vsel %vm427, 1, 0
    %vm429 = vcmp.eq.s32.totalorder %v428, 1
    %v430 = vsel %vm429, %v374, -inf
    %v431 = vsel %vm429, %v420, -inf
    %v432 = vsel %vm332, %v430, -inf
    %433 = vmax.xlane.f32.xlu0 %v432
    %v434 = vpop.xlane.xlu0 %433
    %v435 = vsel %vm332, %v431, -inf
    %436 = vmax.xlane.f32.xlu0 %v435
    %v437 = vpop.xlane.xlu0 %436
    %v438 = vsub.f32 -inf, %v434
    %v439 = vsub.f32 -inf, %v437
    %v440 = vmul.f32 %v438, 1.442695
    %v441 = vpow.pop %v440
    %v442 = vmul.f32 %v439, 1.442695
    %v443 = vpow.pop %v442
    %v444 = vsub.f32 %v430, %v434
    %v445 = vsub.f32 %v431, %v437
    %v446 = vmul.f32 %v444, 1.442695
    %v447 = vpow.pop %v446
    %v448 = vmul.f32 %v445, 1.442695
    %v449 = vpow.pop %v448
    %v450 = vmul.f32 %v441, 0.0
    %v451 = vmul.f32 %v443, 0.0
    %v452 = vsel %vm332, %v447, 0.0
    %453 = vadd.xlane.f32.xlu0 %v452
    %v454 = vpop.xlane.xlu0 %453
    %v455 = vsel %vm332, %v449, 0.0
    %456 = vadd.xlane.f32.xlu0 %v455
    %v457 = vpop.xlane.xlu0 %456
    %v458 = vadd.f32 %v450, %v454
    %v459 = vadd.f32 %v451, %v457
    %v460 = vpack.c.bf16 %v447, %v447
    %v461 = vpack.c.bf16 %v449, %v449
    %v463 = vsel %vm332, %v460, 0
    %vm465 = vcmask 1043456
    %v467 = vsel %vm465, %v328, 0
    %469 = vmatprep.subr.bf16.mxu0 0
    %470 = vmatpush1.bf16.msra.mxu0 0
    %471 = vmatprep.subr.bf16.mxu0 0
    %472 = vmatpush1.bf16.msra.mxu0 0
    %473 = vmatprep.subr.bf16.mxu0 0
    %474 = vmatpush1.bf16.msra.mxu0 0
    %475 = vmatprep.subr.bf16.mxu0 0
    %476 = vmatpush1.bf16.msra.mxu0 0
    %477 = vmatprep.subr.bf16.mxu0 0
    %478 = vmatpush1.bf16.msra.mxu0 0
    %479 = vmatprep.subr.bf16.mxu0 0
    %480 = vmatpush1.bf16.msra.mxu0 0
    %481 = vmatprep.subr.bf16.mxu0 0
    %482 = vmatpush1.bf16.msra.mxu0 0
    %483 = vmatprep.subr.bf16.mxu0 0
    %484 = vmatpush1.bf16.msra.mxu0 %v467
    %485 = vmatprep.subr.bf16.mxu0 0
    %486 = vmatpush2.bf16.msra.mxu0 0
    %487 = vmatprep.subr.bf16.mxu0 0
    %488 = vmatpush2.bf16.msra.mxu0 0
    %489 = vmatprep.subr.bf16.mxu0 0
    %490 = vmatpush2.bf16.msra.mxu0 0
    %491 = vmatprep.subr.bf16.mxu0 0
    %492 = vmatpush2.bf16.msra.mxu0 0
    %493 = vmatprep.subr.bf16.mxu0 0
    %494 = vmatpush2.bf16.msra.mxu0 0
    %495 = vmatprep.subr.bf16.mxu0 0
    %496 = vmatpush2.bf16.msra.mxu0 0
    %497 = vmatprep.subr.bf16.mxu0 0
    %498 = vmatpush2.bf16.msra.mxu0 0
    %499 = vmatprep.subr.bf16.mxu0 0
    %500 = vmatpush2.bf16.msra.mxu0 0
    %501 = vmatprep.mubr.bf16.mxu0 0
    %502 = vmatmul.mubr.bf16.gmra.mxu0 %v463
    %v503 = vpop.f32.mrf.mxu0
    %v504 = vadd.f32 0.0, %v503
    %v505 = vpop.f32.mrf.mxu0
    %v506 = vpop.f32.mrf.mxu0
    %v507 = vpop.f32.mrf.mxu0
    %508 = vdwg.mxu0
    %v510 = vsel %vm332, %v461, 0
    %v513 = vsel %vm465, %v329, 0
    %515 = vmatprep.subr.bf16.mxu0 0
    %516 = vmatpush1.bf16.msra.mxu0 0
    %517 = vmatprep.subr.bf16.mxu0 0
    %518 = vmatpush1.bf16.msra.mxu0 0
    %519 = vmatprep.subr.bf16.mxu0 0
    %520 = vmatpush1.bf16.msra.mxu0 0
    %521 = vmatprep.subr.bf16.mxu0 0
    %522 = vmatpush1.bf16.msra.mxu0 0
    %523 = vmatprep.subr.bf16.mxu0 0
    %524 = vmatpush1.bf16.msra.mxu0 0
    %525 = vmatprep.subr.bf16.mxu0 0
    %526 = vmatpush1.bf16.msra.mxu0 0
    %527 = vmatprep.subr.bf16.mxu0 0
    %528 = vmatpush1.bf16.msra.mxu0 0
    %529 = vmatprep.subr.bf16.mxu0 0
    %530 = vmatpush1.bf16.msra.mxu0 %v513
    %531 = vmatprep.subr.bf16.mxu0 0
    %532 = vmatpush2.bf16.msra.mxu0 0
    %533 = vmatprep.subr.bf16.mxu0 0
    %534 = vmatpush2.bf16.msra.mxu0 0
    %535 = vmatprep.subr.bf16.mxu0 0
    %536 = vmatpush2.bf16.msra.mxu0 0
    %537 = vmatprep.subr.bf16.mxu0 0
    %538 = vmatpush2.bf16.msra.mxu0 0
    %539 = vmatprep.subr.bf16.mxu0 0
    %540 = vmatpush2.bf16.msra.mxu0 0
    %541 = vmatprep.subr.bf16.mxu0 0
    %542 = vmatpush2.bf16.msra.mxu0 0
    %543 = vmatprep.subr.bf16.mxu0 0
    %544 = vmatpush2.bf16.msra.mxu0 0
    %545 = vmatprep.subr.bf16.mxu0 0
    %546 = vmatpush2.bf16.msra.mxu0 0
    %547 = vmatprep.mubr.bf16.mxu0 0
    %548 = vmatmul.mubr.bf16.gmra.mxu0 %v510
    %v549 = vpop.f32.mrf.mxu0
    %v550 = vadd.f32 0.0, %v549
    %v551 = vpop.f32.mrf.mxu0
    %v552 = vpop.f32.mrf.mxu0
    %v553 = vpop.f32.mrf.mxu0
    %554 = vdwg.mxu0
    %v555 = vadd.f32 %v450, %v504
    %v556 = vadd.f32 %v451, %v550
    %v557 = vrcp.pop %v458
    %v558 = vrcp.pop %v459
    %v559 = vmul.f32 %v555, %v557
    %v560 = vmul.f32 %v556, %v558
    %v561 = vpack.c.bf16 %v560, %v559
    %562 = vrot.lane.b32.xlu0 %v318, 120
    %v563 = vpop.permute.xlu0 %562
    %564 = vrot.lane.b32.xlu0 %v323, 120
    %v565 = vpop.permute.xlu0 %564
    %v567 = vsel %vm332, %v563, 0
    %v570 = vsel %vm332, %v565, 0
    %572 = vmatprep.subr.bf16.mxu0 0
    %573 = vmatpush1.bf16.xpose.msra.mxu0 0
    %574 = vmatprep.subr.bf16.mxu0 0
    %575 = vmatpush1.bf16.xpose.msra.mxu0 0
    %576 = vmatprep.subr.bf16.mxu0 0
    %577 = vmatpush1.bf16.xpose.msra.mxu0 0
    %578 = vmatprep.subr.bf16.mxu0 0
    %579 = vmatpush1.bf16.xpose.msra.mxu0 0
    %580 = vmatprep.subr.bf16.mxu0 0
    %581 = vmatpush1.bf16.xpose.msra.mxu0 0
    %582 = vmatprep.subr.bf16.mxu0 0
    %583 = vmatpush1.bf16.xpose.msra.mxu0 0
    %584 = vmatprep.subr.bf16.mxu0 0
    %585 = vmatpush1.bf16.xpose.msra.mxu0 0
    %586 = vmatprep.subr.bf16.mxu0 0
    %587 = vmatpush1.bf16.xpose.msra.mxu0 %v570
    %588 = vmatprep.subr.bf16.mxu0 0
    %589 = vmatpush2.bf16.xpose.msra.mxu0 0
    %590 = vmatprep.subr.bf16.mxu0 0
    %591 = vmatpush2.bf16.xpose.msra.mxu0 0
    %592 = vmatprep.subr.bf16.mxu0 0
    %593 = vmatpush2.bf16.xpose.msra.mxu0 0
    %594 = vmatprep.subr.bf16.mxu0 0
    %595 = vmatpush2.bf16.xpose.msra.mxu0 0
    %596 = vmatprep.subr.bf16.mxu0 0
    %597 = vmatpush2.bf16.xpose.msra.mxu0 0
    %598 = vmatprep.subr.bf16.mxu0 0
    %599 = vmatpush2.bf16.xpose.msra.mxu0 0
    %600 = vmatprep.subr.bf16.mxu0 0
    %601 = vmatpush2.bf16.xpose.msra.mxu0 0
    %602 = vmatprep.subr.bf16.mxu0 0
    %603 = vmatpush2.bf16.xpose.msra.mxu0 0
    %604 = vmatprep.mubr.bf16.mxu0 0
    %605 = vmatmul.mubr.bf16.gmra.mxu0 %v567
    %v606 = vpop.f32.mrf.mxu0
    %v607 = vadd.f32 0.0, %v606
    %v608 = vpop.f32.mrf.mxu0
    %v609 = vpop.f32.mrf.mxu0
    %v610 = vpop.f32.mrf.mxu0
    %611 = vdwg.mxu0
    %612 = vrot.lane.b32.xlu0 %v319, 120
    %v613 = vpop.permute.xlu0 %612
    %614 = vrot.lane.b32.xlu0 %v324, 120
    %v615 = vpop.permute.xlu0 %614
    %v617 = vsel %vm332, %v613, 0
    %v620 = vsel %vm332, %v615, 0
    %622 = vmatprep.subr.bf16.mxu0 0
    %623 = vmatpush1.bf16.xpose.msra.mxu0 0
    %624 = vmatprep.subr.bf16.mxu0 0
    %625 = vmatpush1.bf16.xpose.msra.mxu0 0
    %626 = vmatprep.subr.bf16.mxu0 0
    %627 = vmatpush1.bf16.xpose.msra.mxu0 0
    %628 = vmatprep.subr.bf16.mxu0 0
    %629 = vmatpush1.bf16.xpose.msra.mxu0 0
    %630 = vmatprep.subr.bf16.mxu0 0
    %631 = vmatpush1.bf16.xpose.msra.mxu0 0
    %632 = vmatprep.subr.bf16.mxu0 0
    %633 = vmatpush1.bf16.xpose.msra.mxu0 0
    %634 = vmatprep.subr.bf16.mxu0 0
    %635 = vmatpush1.bf16.xpose.msra.mxu0 0
    %636 = vmatprep.subr.bf16.mxu0 0
    %637 = vmatpush1.bf16.xpose.msra.mxu0 %v620
    %638 = vmatprep.subr.bf16.mxu0 0
    %639 = vmatpush2.bf16.xpose.msra.mxu0 0
    %640 = vmatprep.subr.bf16.mxu0 0
    %641 = vmatpush2.bf16.xpose.msra.mxu0 0
    %642 = vmatprep.subr.bf16.mxu0 0
    %643 = vmatpush2.bf16.xpose.msra.mxu0 0
    %644 = vmatprep.subr.bf16.mxu0 0
    %645 = vmatpush2.bf16.xpose.msra.mxu0 0
    %646 = vmatprep.subr.bf16.mxu0 0
    %647 = vmatpush2.bf16.xpose.msra.mxu0 0
    %648 = vmatprep.subr.bf16.mxu0 0
    %649 = vmatpush2.bf16.xpose.msra.mxu0 0
    %650 = vmatprep.subr.bf16.mxu0 0
    %651 = vmatpush2.bf16.xpose.msra.mxu0 0
    %652 = vmatprep.subr.bf16.mxu0 0
    %653 = vmatpush2.bf16.xpose.msra.mxu0 0
    %654 = vmatprep.mubr.bf16.mxu0 0
    %655 = vmatmul.mubr.bf16.gmra.mxu0 %v617
    %v656 = vpop.f32.mrf.mxu0
    %v657 = vadd.f32 0.0, %v656
    %v658 = vpop.f32.mrf.mxu0
    %v659 = vpop.f32.mrf.mxu0
    %v660 = vpop.f32.mrf.mxu0
    %661 = vdwg.mxu0
    %v662 = vsel %vm429, %v607, -inf
    %v663 = vsel %vm429, %v657, -inf
    %v664 = vsel %vm332, %v662, -inf
    %665 = vmax.xlane.f32.xlu0 %v664
    %v666 = vpop.xlane.xlu0 %665
    %v667 = vsel %vm332, %v663, -inf
    %668 = vmax.xlane.f32.xlu0 %v667
    %v669 = vpop.xlane.xlu0 %668
    %v670 = vsub.f32 -inf, %v666
    %v671 = vsub.f32 -inf, %v669
    %v672 = vmul.f32 %v670, 1.442695
    %v673 = vpow.pop %v672
    %v674 = vmul.f32 %v671, 1.442695
    %v675 = vpow.pop %v674
    %v676 = vsub.f32 %v662, %v666
    %v677 = vsub.f32 %v663, %v669
    %v678 = vmul.f32 %v676, 1.442695
    %v679 = vpow.pop %v678
    %v680 = vmul.f32 %v677, 1.442695
    %v681 = vpow.pop %v680
    %v682 = vmul.f32 %v673, 0.0
    %v683 = vmul.f32 %v675, 0.0
    %v684 = vsel %vm332, %v679, 0.0
    %685 = vadd.xlane.f32.xlu0 %v684
    %v686 = vpop.xlane.xlu0 %685
    %v687 = vsel %vm332, %v681, 0.0
    %688 = vadd.xlane.f32.xlu0 %v687
    %v689 = vpop.xlane.xlu0 %688
    %v690 = vadd.f32 %v682, %v686
    %v691 = vadd.f32 %v683, %v689
    %v692 = vpack.c.bf16 %v679, %v679
    %v693 = vpack.c.bf16 %v681, %v681
    %694 = vrot.lane.b32.xlu0 %v328, 120
    %v695 = vpop.permute.xlu0 %694
    %v697 = vsel %vm332, %v692, 0
    %v700 = vsel %vm465, %v695, 0
    %702 = vmatprep.subr.bf16.mxu0 0
    %703 = vmatpush1.bf16.msra.mxu0 0
    %704 = vmatprep.subr.bf16.mxu0 0
    %705 = vmatpush1.bf16.msra.mxu0 0
    %706 = vmatprep.subr.bf16.mxu0 0
    %707 = vmatpush1.bf16.msra.mxu0 0
    %708 = vmatprep.subr.bf16.mxu0 0
    %709 = vmatpush1.bf16.msra.mxu0 0
    %710 = vmatprep.subr.bf16.mxu0 0
    %711 = vmatpush1.bf16.msra.mxu0 0
    %712 = vmatprep.subr.bf16.mxu0 0
    %713 = vmatpush1.bf16.msra.mxu0 0
    %714 = vmatprep.subr.bf16.mxu0 0
    %715 = vmatpush1.bf16.msra.mxu0 0
    %716 = vmatprep.subr.bf16.mxu0 0
    %717 = vmatpush1.bf16.msra.mxu0 %v700
    %718 = vmatprep.subr.bf16.mxu0 0
    %719 = vmatpush2.bf16.msra.mxu0 0
    %720 = vmatprep.subr.bf16.mxu0 0
    %721 = vmatpush2.bf16.msra.mxu0 0
    %722 = vmatprep.subr.bf16.mxu0 0
    %723 = vmatpush2.bf16.msra.mxu0 0
    %724 = vmatprep.subr.bf16.mxu0 0
    %725 = vmatpush2.bf16.msra.mxu0 0
    %726 = vmatprep.subr.bf16.mxu0 0
    %727 = vmatpush2.bf16.msra.mxu0 0
    %728 = vmatprep.subr.bf16.mxu0 0
    %729 = vmatpush2.bf16.msra.mxu0 0
    %730 = vmatprep.subr.bf16.mxu0 0
    %731 = vmatpush2.bf16.msra.mxu0 0
    %732 = vmatprep.subr.bf16.mxu0 0
    %733 = vmatpush2.bf16.msra.mxu0 0
    %734 = vmatprep.mubr.bf16.mxu0 0
    %735 = vmatmul.mubr.bf16.gmra.mxu0 %v697
    %v736 = vpop.f32.mrf.mxu0
    %v737 = vadd.f32 0.0, %v736
    %v738 = vpop.f32.mrf.mxu0
    %v739 = vpop.f32.mrf.mxu0
    %v740 = vpop.f32.mrf.mxu0
    %741 = vdwg.mxu0
    %742 = vrot.lane.b32.xlu0 %v329, 120
    %v743 = vpop.permute.xlu0 %742
    %v745 = vsel %vm332, %v693, 0
    %v748 = vsel %vm465, %v743, 0
    %750 = vmatprep.subr.bf16.mxu0 0
    %751 = vmatpush1.bf16.msra.mxu0 0
    %752 = vmatprep.subr.bf16.mxu0 0
    %753 = vmatpush1.bf16.msra.mxu0 0
    %754 = vmatprep.subr.bf16.mxu0 0
    %755 = vmatpush1.bf16.msra.mxu0 0
    %756 = vmatprep.subr.bf16.mxu0 0
    %757 = vmatpush1.bf16.msra.mxu0 0
    %758 = vmatprep.subr.bf16.mxu0 0
    %759 = vmatpush1.bf16.msra.mxu0 0
    %760 = vmatprep.subr.bf16.mxu0 0
    %761 = vmatpush1.bf16.msra.mxu0 0
    %762 = vmatprep.subr.bf16.mxu0 0
    %763 = vmatpush1.bf16.msra.mxu0 0
    %764 = vmatprep.subr.bf16.mxu0 0
    %765 = vmatpush1.bf16.msra.mxu0 %v748
    %766 = vmatprep.subr.bf16.mxu0 0
    %767 = vmatpush2.bf16.msra.mxu0 0
    %768 = vmatprep.subr.bf16.mxu0 0
    %769 = vmatpush2.bf16.msra.mxu0 0
    %770 = vmatprep.subr.bf16.mxu0 0
    %771 = vmatpush2.bf16.msra.mxu0 0
    %772 = vmatprep.subr.bf16.mxu0 0
    %773 = vmatpush2.bf16.msra.mxu0 0
    %774 = vmatprep.subr.bf16.mxu0 0
    %775 = vmatpush2.bf16.msra.mxu0 0
    %776 = vmatprep.subr.bf16.mxu0 0
    %777 = vmatpush2.bf16.msra.mxu0 0
    %778 = vmatprep.subr.bf16.mxu0 0
    %779 = vmatpush2.bf16.msra.mxu0 0
    %780 = vmatprep.subr.bf16.mxu0 0
    %781 = vmatpush2.bf16.msra.mxu0 0
    %782 = vmatprep.mubr.bf16.mxu0 0
    %783 = vmatmul.mubr.bf16.gmra.mxu0 %v745
    %v784 = vpop.f32.mrf.mxu0
    %v785 = vadd.f32 0.0, %v784
    %v786 = vpop.f32.mrf.mxu0
    %v787 = vpop.f32.mrf.mxu0
    %v788 = vpop.f32.mrf.mxu0
    %789 = vdwg.mxu0
    %v790 = vadd.f32 %v682, %v737
    %v791 = vadd.f32 %v683, %v785
    %v792 = vrcp.pop %v690
    %v793 = vrcp.pop %v691
    %v794 = vmul.f32 %v790, %v792
    %v795 = vmul.f32 %v791, %v793
    %v796 = vpack.c.bf16 %v795, %v794
    %v798 = vsel %vm332, %v796, 0
    %v801 = vsel %vm465, %v312, 0
    %803 = vmatprep.subr.bf16.mxu0 0
    %804 = vmatpush1.bf16.msra.mxu0 0
    %805 = vmatprep.subr.bf16.mxu0 0
    %806 = vmatpush1.bf16.msra.mxu0 0
    %807 = vmatprep.subr.bf16.mxu0 0
    %808 = vmatpush1.bf16.msra.mxu0 0
    %809 = vmatprep.subr.bf16.mxu0 0
    %810 = vmatpush1.bf16.msra.mxu0 0
    %811 = vmatprep.subr.bf16.mxu0 0
    %812 = vmatpush1.bf16.msra.mxu0 0
    %813 = vmatprep.subr.bf16.mxu0 0
    %814 = vmatpush1.bf16.msra.mxu0 0
    %815 = vmatprep.subr.bf16.mxu0 0
    %816 = vmatpush1.bf16.msra.mxu0 0
    %817 = vmatprep.subr.bf16.mxu0 0
    %818 = vmatpush1.bf16.msra.mxu0 %v801
    %819 = vmatprep.subr.bf16.mxu0 0
    %820 = vmatpush2.bf16.msra.mxu0 0
    %821 = vmatprep.subr.bf16.mxu0 0
    %822 = vmatpush2.bf16.msra.mxu0 0
    %823 = vmatprep.subr.bf16.mxu0 0
    %824 = vmatpush2.bf16.msra.mxu0 0
    %825 = vmatprep.subr.bf16.mxu0 0
    %826 = vmatpush2.bf16.msra.mxu0 0
    %827 = vmatprep.subr.bf16.mxu0 0
    %828 = vmatpush2.bf16.msra.mxu0 0
    %829 = vmatprep.subr.bf16.mxu0 0
    %830 = vmatpush2.bf16.msra.mxu0 0
    %831 = vmatprep.subr.bf16.mxu0 0
    %832 = vmatpush2.bf16.msra.mxu0 0
    %833 = vmatprep.subr.bf16.mxu0 0
    %834 = vmatpush2.bf16.msra.mxu0 0
    %835 = vmatprep.mubr.bf16.mxu0 0
    %836 = vmatmul.mubr.bf16.gmra.mxu0 %v798
    %v837 = vpop.f32.mrf.mxu0
    %v838 = vadd.f32 0.0, %v837
    %v839 = vpop.f32.mrf.mxu0
    %v840 = vpop.f32.mrf.mxu0
    %v841 = vadd.f32 0.0, %v840
    %v842 = vpop.f32.mrf.mxu0
    %843 = vdwg.mxu0
    %v845 = vsel %vm332, %v561, 0
    %v848 = vsel %vm465, %v311, 0
    %850 = vmatprep.subr.bf16.mxu0 0
    %851 = vmatpush1.bf16.msra.mxu0 0
    %852 = vmatprep.subr.bf16.mxu0 0
    %853 = vmatpush1.bf16.msra.mxu0 0
    %854 = vmatprep.subr.bf16.mxu0 0
    %855 = vmatpush1.bf16.msra.mxu0 0
    %856 = vmatprep.subr.bf16.mxu0 0
    %857 = vmatpush1.bf16.msra.mxu0 0
    %858 = vmatprep.subr.bf16.mxu0 0
    %859 = vmatpush1.bf16.msra.mxu0 0
    %860 = vmatprep.subr.bf16.mxu0 0
    %861 = vmatpush1.bf16.msra.mxu0 0
    %862 = vmatprep.subr.bf16.mxu0 0
    %863 = vmatpush1.bf16.msra.mxu0 0
    %864 = vmatprep.subr.bf16.mxu0 0
    %865 = vmatpush1.bf16.msra.mxu0 %v848
    %866 = vmatprep.subr.bf16.mxu0 0
    %867 = vmatpush2.bf16.msra.mxu0 0
    %868 = vmatprep.subr.bf16.mxu0 0
    %869 = vmatpush2.bf16.msra.mxu0 0
    %870 = vmatprep.subr.bf16.mxu0 0
    %871 = vmatpush2.bf16.msra.mxu0 0
    %872 = vmatprep.subr.bf16.mxu0 0
    %873 = vmatpush2.bf16.msra.mxu0 0
    %874 = vmatprep.subr.bf16.mxu0 0
    %875 = vmatpush2.bf16.msra.mxu0 0
    %876 = vmatprep.subr.bf16.mxu0 0
    %877 = vmatpush2.bf16.msra.mxu0 0
    %878 = vmatprep.subr.bf16.mxu0 0
    %879 = vmatpush2.bf16.msra.mxu0 0
    %880 = vmatprep.subr.bf16.mxu0 0
    %881 = vmatpush2.bf16.msra.mxu0 0
    %882 = vmatprep.mubr.bf16.mxu0 0
    %883 = vmatmul.mubr.bf16.gmra.mxu0 %v845
    %v884 = vpop.f32.mrf.mxu0
    %v885 = vadd.f32 %v838, %v884
    %v886 = vpop.f32.mrf.mxu0
    %v887 = vpop.f32.mrf.mxu0
    %v888 = vadd.f32 %v841, %v887
    %v889 = vpop.f32.mrf.mxu0
    %890 = vdwg.mxu0
    %891 = vrot.lane.b32.xlu0 %v318, 112
    %v892 = vpop.permute.xlu0 %891
    %893 = vrot.lane.b32.xlu0 %v323, 112
    %v894 = vpop.permute.xlu0 %893
    %v896 = vsel %vm332, %v892, 0
    %v899 = vsel %vm332, %v894, 0
    %901 = vmatprep.subr.bf16.mxu0 0
    %902 = vmatpush1.bf16.xpose.msra.mxu0 0
    %903 = vmatprep.subr.bf16.mxu0 0
    %904 = vmatpush1.bf16.xpose.msra.mxu0 0
    %905 = vmatprep.subr.bf16.mxu0 0
    %906 = vmatpush1.bf16.xpose.msra.mxu0 0
    %907 = vmatprep.subr.bf16.mxu0 0
    %908 = vmatpush1.bf16.xpose.msra.mxu0 0
    %909 = vmatprep.subr.bf16.mxu0 0
    %910 = vmatpush1.bf16.xpose.msra.mxu0 0
    %911 = vmatprep.subr.bf16.mxu0 0
    %912 = vmatpush1.bf16.xpose.msra.mxu0 0
    %913 = vmatprep.subr.bf16.mxu0 0
    %914 = vmatpush1.bf16.xpose.msra.mxu0 0
    %915 = vmatprep.subr.bf16.mxu0 0
    %916 = vmatpush1.bf16.xpose.msra.mxu0 %v899
    %917 = vmatprep.subr.bf16.mxu0 0
    %918 = vmatpush2.bf16.xpose.msra.mxu0 0
    %919 = vmatprep.subr.bf16.mxu0 0
    %920 = vmatpush2.bf16.xpose.msra.mxu0 0
    %921 = vmatprep.subr.bf16.mxu0 0
    %922 = vmatpush2.bf16.xpose.msra.mxu0 0
    %923 = vmatprep.subr.bf16.mxu0 0
    %924 = vmatpush2.bf16.xpose.msra.mxu0 0
    %925 = vmatprep.subr.bf16.mxu0 0
    %926 = vmatpush2.bf16.xpose.msra.mxu0 0
    %927 = vmatprep.subr.bf16.mxu0 0
    %928 = vmatpush2.bf16.xpose.msra.mxu0 0
    %929 = vmatprep.subr.bf16.mxu0 0
    %930 = vmatpush2.bf16.xpose.msra.mxu0 0
    %931 = vmatprep.subr.bf16.mxu0 0
    %932 = vmatpush2.bf16.xpose.msra.mxu0 0
    %933 = vmatprep.mubr.bf16.mxu0 0
    %934 = vmatmul.mubr.bf16.gmra.mxu0 %v896
    %v935 = vpop.f32.mrf.mxu0
    %v936 = vadd.f32 0.0, %v935
    %v937 = vpop.f32.mrf.mxu0
    %v938 = vpop.f32.mrf.mxu0
    %v939 = vpop.f32.mrf.mxu0
    %940 = vdwg.mxu0
    %941 = vrot.lane.b32.xlu0 %v319, 112
    %v942 = vpop.permute.xlu0 %941
    %943 = vrot.lane.b32.xlu0 %v324, 112
    %v944 = vpop.permute.xlu0 %943
    %v946 = vsel %vm332, %v942, 0
    %v949 = vsel %vm332, %v944, 0
    %951 = vmatprep.subr.bf16.mxu0 0
    %952 = vmatpush1.bf16.xpose.msra.mxu0 0
    %953 = vmatprep.subr.bf16.mxu0 0
    %954 = vmatpush1.bf16.xpose.msra.mxu0 0
    %955 = vmatprep.subr.bf16.mxu0 0
    %956 = vmatpush1.bf16.xpose.msra.mxu0 0
    %957 = vmatprep.subr.bf16.mxu0 0
    %958 = vmatpush1.bf16.xpose.msra.mxu0 0
    %959 = vmatprep.subr.bf16.mxu0 0
    %960 = vmatpush1.bf16.xpose.msra.mxu0 0
    %961 = vmatprep.subr.bf16.mxu0 0
    %962 = vmatpush1.bf16.xpose.msra.mxu0 0
    %963 = vmatprep.subr.bf16.mxu0 0
    %964 = vmatpush1.bf16.xpose.msra.mxu0 0
    %965 = vmatprep.subr.bf16.mxu0 0
    %966 = vmatpush1.bf16.xpose.msra.mxu0 %v949
    %967 = vmatprep.subr.bf16.mxu0 0
    %968 = vmatpush2.bf16.xpose.msra.mxu0 0
    %969 = vmatprep.subr.bf16.mxu0 0
    %970 = vmatpush2.bf16.xpose.msra.mxu0 0
    %971 = vmatprep.subr.bf16.mxu0 0
    %972 = vmatpush2.bf16.xpose.msra.mxu0 0
    %973 = vmatprep.subr.bf16.mxu0 0
    %974 = vmatpush2.bf16.xpose.msra.mxu0 0
    %975 = vmatprep.subr.bf16.mxu0 0
    %976 = vmatpush2.bf16.xpose.msra.mxu0 0
    %977 = vmatprep.subr.bf16.mxu0 0
    %978 = vmatpush2.bf16.xpose.msra.mxu0 0
    %979 = vmatprep.subr.bf16.mxu0 0
    %980 = vmatpush2.bf16.xpose.msra.mxu0 0
    %981 = vmatprep.subr.bf16.mxu0 0
    %982 = vmatpush2.bf16.xpose.msra.mxu0 0
    %983 = vmatprep.mubr.bf16.mxu0 0
    %984 = vmatmul.mubr.bf16.gmra.mxu0 %v946
    %v985 = vpop.f32.mrf.mxu0
    %v986 = vadd.f32 0.0, %v985
    %v987 = vpop.f32.mrf.mxu0
    %v988 = vpop.f32.mrf.mxu0
    %v989 = vpop.f32.mrf.mxu0
    %990 = vdwg.mxu0
    %v991 = vsel %vm429, %v936, -inf
    %v992 = vsel %vm429, %v986, -inf
    %v993 = vsel %vm332, %v991, -inf
    %994 = vmax.xlane.f32.xlu0 %v993
    %v995 = vpop.xlane.xlu0 %994
    %v996 = vsel %vm332, %v992, -inf
    %997 = vmax.xlane.f32.xlu0 %v996
    %v998 = vpop.xlane.xlu0 %997
    %v999 = vsub.f32 -inf, %v995
    %v1000 = vsub.f32 -inf, %v998
    %v1001 = vmul.f32 %v999, 1.442695
    %v1002 = vpow.pop %v1001
    %v1003 = vmul.f32 %v1000, 1.442695
    %v1004 = vpow.pop %v1003
    %v1005 = vsub.f32 %v991, %v995
    %v1006 = vsub.f32 %v992, %v998
    %v1007 = vmul.f32 %v1005, 1.442695
    %v1008 = vpow.pop %v1007
    %v1009 = vmul.f32 %v1006, 1.442695
    %v1010 = vpow.pop %v1009
    %v1011 = vmul.f32 %v1002, 0.0
    %v1012 = vmul.f32 %v1004, 0.0
    %v1013 = vsel %vm332, %v1008, 0.0
    %1014 = vadd.xlane.f32.xlu0 %v1013
    %v1015 = vpop.xlane.xlu0 %1014
    %v1016 = vsel %vm332, %v1010, 0.0
    %1017 = vadd.xlane.f32.xlu0 %v1016
    %v1018 = vpop.xlane.xlu0 %1017
    %v1019 = vadd.f32 %v1011, %v1015
    %v1020 = vadd.f32 %v1012, %v1018
    %v1021 = vpack.c.bf16 %v1008, %v1008
    %v1022 = vpack.c.bf16 %v1010, %v1010
    %1023 = vrot.lane.b32.xlu0 %v328, 112
    %v1024 = vpop.permute.xlu0 %1023
    %v1026 = vsel %vm332, %v1021, 0
    %v1029 = vsel %vm465, %v1024, 0
    %1031 = vmatprep.subr.bf16.mxu0 0
    %1032 = vmatpush1.bf16.msra.mxu0 0
    %1033 = vmatprep.subr.bf16.mxu0 0
    %1034 = vmatpush1.bf16.msra.mxu0 0
    %1035 = vmatprep.subr.bf16.mxu0 0
    %1036 = vmatpush1.bf16.msra.mxu0 0
    %1037 = vmatprep.subr.bf16.mxu0 0
    %1038 = vmatpush1.bf16.msra.mxu0 0
    %1039 = vmatprep.subr.bf16.mxu0 0
    %1040 = vmatpush1.bf16.msra.mxu0 0
    %1041 = vmatprep.subr.bf16.mxu0 0
    %1042 = vmatpush1.bf16.msra.mxu0 0
    %1043 = vmatprep.subr.bf16.mxu0 0
    %1044 = vmatpush1.bf16.msra.mxu0 0
    %1045 = vmatprep.subr.bf16.mxu0 0
    %1046 = vmatpush1.bf16.msra.mxu0 %v1029
    %1047 = vmatprep.subr.bf16.mxu0 0
    %1048 = vmatpush2.bf16.msra.mxu0 0
    %1049 = vmatprep.subr.bf16.mxu0 0
    %1050 = vmatpush2.bf16.msra.mxu0 0
    %1051 = vmatprep.subr.bf16.mxu0 0
    %1052 = vmatpush2.bf16.msra.mxu0 0
    %1053 = vmatprep.subr.bf16.mxu0 0
    %1054 = vmatpush2.bf16.msra.mxu0 0
    %1055 = vmatprep.subr.bf16.mxu0 0
    %1056 = vmatpush2.bf16.msra.mxu0 0
    %1057 = vmatprep.subr.bf16.mxu0 0
    %1058 = vmatpush2.bf16.msra.mxu0 0
    %1059 = vmatprep.subr.bf16.mxu0 0
    %1060 = vmatpush2.bf16.msra.mxu0 0
    %1061 = vmatprep.subr.bf16.mxu0 0
    %1062 = vmatpush2.bf16.msra.mxu0 0
    %1063 = vmatprep.mubr.bf16.mxu0 0
    %1064 = vmatmul.mubr.bf16.gmra.mxu0 %v1026
    %v1065 = vpop.f32.mrf.mxu0
    %v1066 = vadd.f32 0.0, %v1065
    %v1067 = vpop.f32.mrf.mxu0
    %v1068 = vpop.f32.mrf.mxu0
    %v1069 = vpop.f32.mrf.mxu0
    %1070 = vdwg.mxu0
    %1071 = vrot.lane.b32.xlu0 %v329, 112
    %v1072 = vpop.permute.xlu0 %1071
    %v1074 = vsel %vm332, %v1022, 0
    %v1077 = vsel %vm465, %v1072, 0
    %1079 = vmatprep.subr.bf16.mxu0 0
    %1080 = vmatpush1.bf16.msra.mxu0 0
    %1081 = vmatprep.subr.bf16.mxu0 0
    %1082 = vmatpush1.bf16.msra.mxu0 0
    %1083 = vmatprep.subr.bf16.mxu0 0
    %1084 = vmatpush1.bf16.msra.mxu0 0
    %1085 = vmatprep.subr.bf16.mxu0 0
    %1086 = vmatpush1.bf16.msra.mxu0 0
    %1087 = vmatprep.subr.bf16.mxu0 0
    %1088 = vmatpush1.bf16.msra.mxu0 0
    %1089 = vmatprep.subr.bf16.mxu0 0
    %1090 = vmatpush1.bf16.msra.mxu0 0
    %1091 = vmatprep.subr.bf16.mxu0 0
    %1092 = vmatpush1.bf16.msra.mxu0 0
    %1093 = vmatprep.subr.bf16.mxu0 0
    %1094 = vmatpush1.bf16.msra.mxu0 %v1077
    %1095 = vmatprep.subr.bf16.mxu0 0
    %1096 = vmatpush2.bf16.msra.mxu0 0
    %1097 = vmatprep.subr.bf16.mxu0 0
    %1098 = vmatpush2.bf16.msra.mxu0 0
    %1099 = vmatprep.subr.bf16.mxu0 0
    %1100 = vmatpush2.bf16.msra.mxu0 0
    %1101 = vmatprep.subr.bf16.mxu0 0
    %1102 = vmatpush2.bf16.msra.mxu0 0
    %1103 = vmatprep.subr.bf16.mxu0 0
    %1104 = vmatpush2.bf16.msra.mxu0 0
    %1105 = vmatprep.subr.bf16.mxu0 0
    %1106 = vmatpush2.bf16.msra.mxu0 0
    %1107 = vmatprep.subr.bf16.mxu0 0
    %1108 = vmatpush2.bf16.msra.mxu0 0
    %1109 = vmatprep.subr.bf16.mxu0 0
    %1110 = vmatpush2.bf16.msra.mxu0 0
    %1111 = vmatprep.mubr.bf16.mxu0 0
    %1112 = vmatmul.mubr.bf16.gmra.mxu0 %v1074
    %v1113 = vpop.f32.mrf.mxu0
    %v1114 = vadd.f32 0.0, %v1113
    %v1115 = vpop.f32.mrf.mxu0
    %v1116 = vpop.f32.mrf.mxu0
    %v1117 = vpop.f32.mrf.mxu0
    %1118 = vdwg.mxu0
    %v1119 = vadd.f32 %v1011, %v1066
    %v1120 = vadd.f32 %v1012, %v1114
    %v1121 = vrcp.pop %v1019
    %v1122 = vrcp.pop %v1020
    %v1123 = vmul.f32 %v1119, %v1121
    %v1124 = vmul.f32 %v1120, %v1122
    %v1125 = vpack.c.bf16 %v1124, %v1123
    %v1127 = vsel %vm332, %v1125, 0
    %v1130 = vsel %vm465, %v313, 0
    %1132 = vmatprep.subr.bf16.mxu0 0
    %1133 = vmatpush1.bf16.msra.mxu0 0
    %1134 = vmatprep.subr.bf16.mxu0 0
    %1135 = vmatpush1.bf16.msra.mxu0 0
    %1136 = vmatprep.subr.bf16.mxu0 0
    %1137 = vmatpush1.bf16.msra.mxu0 0
    %1138 = vmatprep.subr.bf16.mxu0 0
    %1139 = vmatpush1.bf16.msra.mxu0 0
    %1140 = vmatprep.subr.bf16.mxu0 0
    %1141 = vmatpush1.bf16.msra.mxu0 0
    %1142 = vmatprep.subr.bf16.mxu0 0
    %1143 = vmatpush1.bf16.msra.mxu0 0
    %1144 = vmatprep.subr.bf16.mxu0 0
    %1145 = vmatpush1.bf16.msra.mxu0 0
    %1146 = vmatprep.subr.bf16.mxu0 0
    %1147 = vmatpush1.bf16.msra.mxu0 %v1130
    %1148 = vmatprep.subr.bf16.mxu0 0
    %1149 = vmatpush2.bf16.msra.mxu0 0
    %1150 = vmatprep.subr.bf16.mxu0 0
    %1151 = vmatpush2.bf16.msra.mxu0 0
    %1152 = vmatprep.subr.bf16.mxu0 0
    %1153 = vmatpush2.bf16.msra.mxu0 0
    %1154 = vmatprep.subr.bf16.mxu0 0
    %1155 = vmatpush2.bf16.msra.mxu0 0
    %1156 = vmatprep.subr.bf16.mxu0 0
    %1157 = vmatpush2.bf16.msra.mxu0 0
    %1158 = vmatprep.subr.bf16.mxu0 0
    %1159 = vmatpush2.bf16.msra.mxu0 0
    %1160 = vmatprep.subr.bf16.mxu0 0
    %1161 = vmatpush2.bf16.msra.mxu0 0
    %1162 = vmatprep.subr.bf16.mxu0 0
    %1163 = vmatpush2.bf16.msra.mxu0 0
    %1164 = vmatprep.mubr.bf16.mxu0 0
    %1165 = vmatmul.mubr.bf16.gmra.mxu0 %v1127
    %v1166 = vpop.f32.mrf.mxu0
    %v1167 = vadd.f32 0.0, %v1166
    %v1168 = vpop.f32.mrf.mxu0
    %v1169 = vpop.f32.mrf.mxu0
    %v1170 = vadd.f32 0.0, %v1169
    %v1171 = vpop.f32.mrf.mxu0
    %1172 = vdwg.mxu0
    %v1173 = vadd.f32 %v885, %v1167
    %v1174 = vadd.f32 %v888, %v1170
    %1175 = vrot.lane.b32.xlu0 %v318, 104
    %v1176 = vpop.permute.xlu0 %1175
    %1177 = vrot.lane.b32.xlu0 %v323, 104
    %v1178 = vpop.permute.xlu0 %1177
    %v1180 = vsel %vm332, %v1176, 0
    %v1183 = vsel %vm332, %v1178, 0
    %1185 = vmatprep.subr.bf16.mxu0 0
    %1186 = vmatpush1.bf16.xpose.msra.mxu0 0
    %1187 = vmatprep.subr.bf16.mxu0 0
    %1188 = vmatpush1.bf16.xpose.msra.mxu0 0
    %1189 = vmatprep.subr.bf16.mxu0 0
    %1190 = vmatpush1.bf16.xpose.msra.mxu0 0
    %1191 = vmatprep.subr.bf16.mxu0 0
    %1192 = vmatpush1.bf16.xpose.msra.mxu0 0
    %1193 = vmatprep.subr.bf16.mxu0 0
    %1194 = vmatpush1.bf16.xpose.msra.mxu0 0
    %1195 = vmatprep.subr.bf16.mxu0 0
    %1196 = vmatpush1.bf16.xpose.msra.mxu0 0
    %1197 = vmatprep.subr.bf16.mxu0 0
    %1198 = vmatpush1.bf16.xpose.msra.mxu0 0
    %1199 = vmatprep.subr.bf16.mxu0 0
    %1200 = vmatpush1.bf16.xpose.msra.mxu0 %v1183
    %1201 = vmatprep.subr.bf16.mxu0 0
    %1202 = vmatpush2.bf16.xpose.msra.mxu0 0
    %1203 = vmatprep.subr.bf16.mxu0 0
    %1204 = vmatpush2.bf16.xpose.msra.mxu0 0
    %1205 = vmatprep.subr.bf16.mxu0 0
    %1206 = vmatpush2.bf16.xpose.msra.mxu0 0
    %1207 = vmatprep.subr.bf16.mxu0 0
    %1208 = vmatpush2.bf16.xpose.msra.mxu0 0
    %1209 = vmatprep.subr.bf16.mxu0 0
    %1210 = vmatpush2.bf16.xpose.msra.mxu0 0
    %1211 = vmatprep.subr.bf16.mxu0 0
    %1212 = vmatpush2.bf16.xpose.msra.mxu0 0
    %1213 = vmatprep.subr.bf16.mxu0 0
    %1214 = vmatpush2.bf16.xpose.msra.mxu0 0
    %1215 = vmatprep.subr.bf16.mxu0 0
    %1216 = vmatpush2.bf16.xpose.msra.mxu0 0
    %1217 = vmatprep.mubr.bf16.mxu0 0
    %1218 = vmatmul.mubr.bf16.gmra.mxu0 %v1180
    %v1219 = vpop.f32.mrf.mxu0
    %v1220 = vadd.f32 0.0, %v1219
    %v1221 = vpop.f32.mrf.mxu0
    %v1222 = vpop.f32.mrf.mxu0
    %v1223 = vpop.f32.mrf.mxu0
    %1224 = vdwg.mxu0
    %1225 = vrot.lane.b32.xlu0 %v319, 104
    %v1226 = vpop.permute.xlu0 %1225
    %1227 = vrot.lane.b32.xlu0 %v324, 104
    %v1228 = vpop.permute.xlu0 %1227
    %v1230 = vsel %vm332, %v1226, 0
    %v1233 = vsel %vm332, %v1228, 0
    %1235 = vmatprep.subr.bf16.mxu0 0
    %1236 = vmatpush1.bf16.xpose.msra.mxu0 0
    %1237 = vmatprep.subr.bf16.mxu0 0
    %1238 = vmatpush1.bf16.xpose.msra.mxu0 0
    %1239 = vmatprep.subr.bf16.mxu0 0
    %1240 = vmatpush1.bf16.xpose.msra.mxu0 0
    %1241 = vmatprep.subr.bf16.mxu0 0
    %1242 = vmatpush1.bf16.xpose.msra.mxu0 0
    %1243 = vmatprep.subr.bf16.mxu0 0
    %1244 = vmatpush1.bf16.xpose.msra.mxu0 0
    %1245 = vmatprep.subr.bf16.mxu0 0
    %1246 = vmatpush1.bf16.xpose.msra.mxu0 0
    %1247 = vmatprep.subr.bf16.mxu0 0
    %1248 = vmatpush1.bf16.xpose.msra.mxu0 0
    %1249 = vmatprep.subr.bf16.mxu0 0
    %1250 = vmatpush1.bf16.xpose.msra.mxu0 %v1233
    %1251 = vmatprep.subr.bf16.mxu0 0
    %1252 = vmatpush2.bf16.xpose.msra.mxu0 0
    %1253 = vmatprep.subr.bf16.mxu0 0
    %1254 = vmatpush2.bf16.xpose.msra.mxu0 0
    %1255 = vmatprep.subr.bf16.mxu0 0
    %1256 = vmatpush2.bf16.xpose.msra.mxu0 0
    %1257 = vmatprep.subr.bf16.mxu0 0
    %1258 = vmatpush2.bf16.xpose.msra.mxu0 0
    %1259 = vmatprep.subr.bf16.mxu0 0
    %1260 = vmatpush2.bf16.xpose.msra.mxu0 0
    %1261 = vmatprep.subr.bf16.mxu0 0
    %1262 = vmatpush2.bf16.xpose.msra.mxu0 0
    %1263 = vmatprep.subr.bf16.mxu0 0
    %1264 = vmatpush2.bf16.xpose.msra.mxu0 0
    %1265 = vmatprep.subr.bf16.mxu0 0
    %1266 = vmatpush2.bf16.xpose.msra.mxu0 0
    %1267 = vmatprep.mubr.bf16.mxu0 0
    %1268 = vmatmul.mubr.bf16.gmra.mxu0 %v1230
    %v1269 = vpop.f32.mrf.mxu0
    %v1270 = vadd.f32 0.0, %v1269
    %v1271 = vpop.f32.mrf.mxu0
    %v1272 = vpop.f32.mrf.mxu0
    %v1273 = vpop.f32.mrf.mxu0
    %1274 = vdwg.mxu0
    %v1275 = vsel %vm429, %v1220, -inf
    %v1276 = vsel %vm429, %v1270, -inf
    %v1277 = vsel %vm332, %v1275, -inf
    %1278 = vmax.xlane.f32.xlu0 %v1277
    %v1279 = vpop.xlane.xlu0 %1278
    %v1280 = vsel %vm332, %v1276, -inf
    %1281 = vmax.xlane.f32.xlu0 %v1280
    %v1282 = vpop.xlane.xlu0 %1281
    %v1283 = vsub.f32 -inf, %v1279
    %v1284 = vsub.f32 -inf, %v1282
    %v1285 = vmul.f32 %v1283, 1.442695
    %v1286 = vpow.pop %v1285
    %v1287 = vmul.f32 %v1284, 1.442695
    %v1288 = vpow.pop %v1287
    %v1289 = vsub.f32 %v1275, %v1279
    %v1290 = vsub.f32 %v1276, %v1282
    %v1291 = vmul.f32 %v1289, 1.442695
    %v1292 = vpow.pop %v1291
    %v1293 = vmul.f32 %v1290, 1.442695
    %v1294 = vpow.pop %v1293
    %v1295 = vmul.f32 %v1286, 0.0
    %v1296 = vmul.f32 %v1288, 0.0
    %v1297 = vsel %vm332, %v1292, 0.0
    %1298 = vadd.xlane.f32.xlu0 %v1297
    %v1299 = vpop.xlane.xlu0 %1298
    %v1300 = vsel %vm332, %v1294, 0.0
    %1301 = vadd.xlane.f32.xlu0 %v1300
    %v1302 = vpop.xlane.xlu0 %1301
    %v1303 = vadd.f32 %v1295, %v1299
    %v1304 = vadd.f32 %v1296, %v1302
    %v1305 = vpack.c.bf16 %v1292, %v1292
    %v1306 = vpack.c.bf16 %v1294, %v1294
    %1307 = vrot.lane.b32.xlu0 %v328, 104
    %v1308 = vpop.permute.xlu0 %1307
    %v1310 = vsel %vm332, %v1305, 0
    %v1313 = vsel %vm465, %v1308, 0
    %1315 = vmatprep.subr.bf16.mxu0 0
    %1316 = vmatpush1.bf16.msra.mxu0 0
    %1317 = vmatprep.subr.bf16.mxu0 0
    %1318 = vmatpush1.bf16.msra.mxu0 0
    %1319 = vmatprep.subr.bf16.mxu0 0
    %1320 = vmatpush1.bf16.msra.mxu0 0
    %1321 = vmatprep.subr.bf16.mxu0 0
    %1322 = vmatpush1.bf16.msra.mxu0 0
    %1323 = vmatprep.subr.bf16.mxu0 0
    %1324 = vmatpush1.bf16.msra.mxu0 0
    %1325 = vmatprep.subr.bf16.mxu0 0
    %1326 = vmatpush1.bf16.msra.mxu0 0
    %1327 = vmatprep.subr.bf16.mxu0 0
    %1328 = vmatpush1.bf16.msra.mxu0 0
    %1329 = vmatprep.subr.bf16.mxu0 0
    %1330 = vmatpush1.bf16.msra.mxu0 %v1313
    %1331 = vmatprep.subr.bf16.mxu0 0
    %1332 = vmatpush2.bf16.msra.mxu0 0
    %1333 = vmatprep.subr.bf16.mxu0 0
    %1334 = vmatpush2.bf16.msra.mxu0 0
    %1335 = vmatprep.subr.bf16.mxu0 0
    %1336 = vmatpush2.bf16.msra.mxu0 0
    %1337 = vmatprep.subr.bf16.mxu0 0
    %1338 = vmatpush2.bf16.msra.mxu0 0
    %1339 = vmatprep.subr.bf16.mxu0 0
    %1340 = vmatpush2.bf16.msra.mxu0 0
    %1341 = vmatprep.subr.bf16.mxu0 0
    %1342 = vmatpush2.bf16.msra.mxu0 0
    %1343 = vmatprep.subr.bf16.mxu0 0
    %1344 = vmatpush2.bf16.msra.mxu0 0
    %1345 = vmatprep.subr.bf16.mxu0 0
    %1346 = vmatpush2.bf16.msra.mxu0 0
    %1347 = vmatprep.mubr.bf16.mxu0 0
    %1348 = vmatmul.mubr.bf16.gmra.mxu0 %v1310
    %v1349 = vpop.f32.mrf.mxu0
    %v1350 = vadd.f32 0.0, %v1349
    %v1351 = vpop.f32.mrf.mxu0
    %v1352 = vpop.f32.mrf.mxu0
    %v1353 = vpop.f32.mrf.mxu0
    %1354 = vdwg.mxu0
    %1355 = vrot.lane.b32.xlu0 %v329, 104
    %v1356 = vpop.permute.xlu0 %1355
    %v1358 = vsel %vm332, %v1306, 0
    %v1361 = vsel %vm465, %v1356, 0
    %1363 = vmatprep.subr.bf16.mxu0 0
    %1364 = vmatpush1.bf16.msra.mxu0 0
    %1365 = vmatprep.subr.bf16.mxu0 0
    %1366 = vmatpush1.bf16.msra.mxu0 0
    %1367 = vmatprep.subr.bf16.mxu0 0
    %1368 = vmatpush1.bf16.msra.mxu0 0
    %1369 = vmatprep.subr.bf16.mxu0 0
    %1370 = vmatpush1.bf16.msra.mxu0 0
    %1371 = vmatprep.subr.bf16.mxu0 0
    %1372 = vmatpush1.bf16.msra.mxu0 0
    %1373 = vmatprep.subr.bf16.mxu0 0
    %1374 = vmatpush1.bf16.msra.mxu0 0
    %1375 = vmatprep.subr.bf16.mxu0 0
    %1376 = vmatpush1.bf16.msra.mxu0 0
    %1377 = vmatprep.subr.bf16.mxu0 0
    %1378 = vmatpush1.bf16.msra.mxu0 %v1361
    %1379 = vmatprep.subr.bf16.mxu0 0
    %1380 = vmatpush2.bf16.msra.mxu0 0
    %1381 = vmatprep.subr.bf16.mxu0 0
    %1382 = vmatpush2.bf16.msra.mxu0 0
    %1383 = vmatprep.subr.bf16.mxu0 0
    %1384 = vmatpush2.bf16.msra.mxu0 0
    %1385 = vmatprep.subr.bf16.mxu0 0
    %1386 = vmatpush2.bf16.msra.mxu0 0
    %1387 = vmatprep.subr.bf16.mxu0 0
    %1388 = vmatpush2.bf16.msra.mxu0 0
    %1389 = vmatprep.subr.bf16.mxu0 0
    %1390 = vmatpush2.bf16.msra.mxu0 0
    %1391 = vmatprep.subr.bf16.mxu0 0
    %1392 = vmatpush2.bf16.msra.mxu0 0
    %1393 = vmatprep.subr.bf16.mxu0 0
    %1394 = vmatpush2.bf16.msra.mxu0 0
    %1395 = vmatprep.mubr.bf16.mxu0 0
    %1396 = vmatmul.mubr.bf16.gmra.mxu0 %v1358
    %v1397 = vpop.f32.mrf.mxu0
    %v1398 = vadd.f32 0.0, %v1397
    %v1399 = vpop.f32.mrf.mxu0
    %v1400 = vpop.f32.mrf.mxu0
    %v1401 = vpop.f32.mrf.mxu0
    %1402 = vdwg.mxu0
    %v1403 = vadd.f32 %v1295, %v1350
    %v1404 = vadd.f32 %v1296, %v1398
    %v1405 = vrcp.pop %v1303
    %v1406 = vrcp.pop %v1304
    %v1407 = vmul.f32 %v1403, %v1405
    %v1408 = vmul.f32 %v1404, %v1406
    %v1409 = vpack.c.bf16 %v1408, %v1407
    %v1411 = vsel %vm332, %v1409, 0
    %v1414 = vsel %vm465, %v314, 0
    %1416 = vmatprep.subr.bf16.mxu0 0
    %1417 = vmatpush1.bf16.msra.mxu0 0
    %1418 = vmatprep.subr.bf16.mxu0 0
    %1419 = vmatpush1.bf16.msra.mxu0 0
    %1420 = vmatprep.subr.bf16.mxu0 0
    %1421 = vmatpush1.bf16.msra.mxu0 0
    %1422 = vmatprep.subr.bf16.mxu0 0
    %1423 = vmatpush1.bf16.msra.mxu0 0
    %1424 = vmatprep.subr.bf16.mxu0 0
    %1425 = vmatpush1.bf16.msra.mxu0 0
    %1426 = vmatprep.subr.bf16.mxu0 0
    %1427 = vmatpush1.bf16.msra.mxu0 0
    %1428 = vmatprep.subr.bf16.mxu0 0
    %1429 = vmatpush1.bf16.msra.mxu0 0
    %1430 = vmatprep.subr.bf16.mxu0 0
    %1431 = vmatpush1.bf16.msra.mxu0 %v1414
    %1432 = vmatprep.subr.bf16.mxu0 0
    %1433 = vmatpush2.bf16.msra.mxu0 0
    %1434 = vmatprep.subr.bf16.mxu0 0
    %1435 = vmatpush2.bf16.msra.mxu0 0
    %1436 = vmatprep.subr.bf16.mxu0 0
    %1437 = vmatpush2.bf16.msra.mxu0 0
    %1438 = vmatprep.subr.bf16.mxu0 0
    %1439 = vmatpush2.bf16.msra.mxu0 0
    %1440 = vmatprep.subr.bf16.mxu0 0
    %1441 = vmatpush2.bf16.msra.mxu0 0
    %1442 = vmatprep.subr.bf16.mxu0 0
    %1443 = vmatpush2.bf16.msra.mxu0 0
    %1444 = vmatprep.subr.bf16.mxu0 0
    %1445 = vmatpush2.bf16.msra.mxu0 0
    %1446 = vmatprep.subr.bf16.mxu0 0
    %1447 = vmatpush2.bf16.msra.mxu0 0
    %1448 = vmatprep.mubr.bf16.mxu0 0
    %1449 = vmatmul.mubr.bf16.gmra.mxu0 %v1411
    %v1450 = vpop.f32.mrf.mxu0
    %v1451 = vadd.f32 0.0, %v1450
    %v1452 = vpop.f32.mrf.mxu0
    %v1453 = vpop.f32.mrf.mxu0
    %v1454 = vadd.f32 0.0, %v1453
    %v1455 = vpop.f32.mrf.mxu0
    %1456 = vdwg.mxu0
    %v1457 = vadd.f32 %v1173, %v1451
    %v1458 = vadd.f32 %v1174, %v1454
    %v1459 = vadd.f32 %v83, %v1457
    %v1460 = vadd.f32 %v84, %v1458
    %v1461 = vld [vmem:[%s8] sm:$0x1]
    %v1463 = vlaneseq
    %v1464 = vshrl.u32 %v1463, 7
    %v1465 = vsub.s32 0, %v1464
    %v1466 = vrot.slane %v1461, %v1465
    %v1468 = vadd.f32 %v1459, %v1466
    %v1469 = vadd.f32 %v1460, %v1466
    %v1470 = vld [vmem:[%s9] sm:$0x1]
    %v1471 = vld [vmem:[%s10] sm:$0x1]
    %v1472 = vsel %vm89, %v1468, 0.0
    %1473 = vadd.xlane.f32.xlu0 %v1472
    %v1474 = vpop.xlane.xlu0 %1473
    %v1475 = vsel %vm89, %v1469, 0.0
    %1476 = vadd.xlane.f32.xlu0 %v1475
    %v1477 = vpop.xlane.xlu0 %1476
    %v1478 = vmul.f32 %v1474, %v96
    %v1479 = vmul.f32 %v1477, %v96
    %v1480 = vsub.f32 %v1468, %v1478
    %v1481 = vsub.f32 %v1469, %v1479
    %v1482 = vmul.f32 %v1480, %v1480
    %v1483 = vmul.f32 %v1481, %v1481
    %v1484 = vsel %vm89, %v1482, 0.0
    %1485 = vadd.xlane.f32.xlu0 %v1484
    %v1486 = vpop.xlane.xlu0 %1485
    %v1487 = vsel %vm89, %v1483, 0.0
    %1488 = vadd.xlane.f32.xlu0 %v1487
    %v1489 = vpop.xlane.xlu0 %1488
    %v1490 = vmul.f32 %v1486, %v96
    %v1491 = vmul.f32 %v1489, %v96
    %v1492 = vadd.f32 %v1490, 1e-05
    %v1493 = vadd.f32 %v1491, 1e-05
    %v1494 = vrsqrt.pop %v1492
    %v1495 = vrsqrt.pop %v1493
    %v1496 = vmul.f32 %v1480, %v1494
    %v1497 = vmul.f32 %v1481, %v1495
    %v1499 = vlaneseq
    %v1500 = vshrl.u32 %v1499, 7
    %v1501 = vsub.s32 0, %v1500
    %v1502 = vrot.slane %v1470, %v1501
    %v1504 = vmul.f32 %v1496, %v1502
    %v1505 = vmul.f32 %v1497, %v1502
    %v1507 = vlaneseq
    %v1508 = vshrl.u32 %v1507, 7
    %v1509 = vsub.s32 0, %v1508
    %v1510 = vrot.slane %v1471, %v1509
    %v1512 = vadd.f32 %v1504, %v1510
    %v1513 = vadd.f32 %v1505, %v1510
    %v1514 = vpack.c.bf16 %v1513, %v1512
    %v1515 = vld [vmem:[%s11] sm:$0xf]
    %v1516 = vld [vmem:[%s11 + $0x4] sm:$0xf]
    %v1517 = vld [vmem:[%s11 + $0x8] sm:$0xf]
    %v1518 = vld [vmem:[%s11 + $0xc] sm:$0xf]
    %v1519 = vld [vmem:[%s12] sm:$0x1]
    %v1521 = vlaneseq
    %v1522 = vshrl.u32 %v1521, 7
    %v1523 = vsub.s32 0, %v1522
    %v1524 = vrot.slane %v1519, %v1523
    %v1530 = vunpack.c.l.b16 %v1515
    %v1531 = vunpack.c.l.b16 %v1516
    %v1532 = vunpack.c.l.b16 %v1517
    %v1533 = vunpack.c.l.b16 %v1518
    %v1534 = vpack.c.b16 %v1531, %v1530
    %v1535 = vpack.c.b16 %v1533, %v1532
    %v1539 = vsel %vm89, %v1514, 0
    %1541 = vmatprep.subr.bf16.mxu0 0
    %1542 = vmatpush1.bf16.msra.mxu0 0
    %1543 = vmatprep.subr.bf16.mxu0 0
    %1544 = vmatpush1.bf16.msra.mxu0 0
    %1545 = vmatprep.subr.bf16.mxu0 0
    %1546 = vmatpush1.bf16.msra.mxu0 0
    %1547 = vmatprep.subr.bf16.mxu0 0
    %1548 = vmatpush1.bf16.msra.mxu0 0
    %1549 = vmatprep.subr.bf16.mxu0 0
    %1550 = vmatpush1.bf16.msra.mxu0 0
    %1551 = vmatprep.subr.bf16.mxu0 0
    %1552 = vmatpush1.bf16.msra.mxu0 0
    %1553 = vmatprep.subr.bf16.mxu0 0
    %1554 = vmatpush1.bf16.msra.mxu0 %v1535
    %1555 = vmatprep.subr.bf16.mxu0 0
    %1556 = vmatpush1.bf16.msra.mxu0 %v1534
    %1557 = vmatprep.subr.bf16.mxu0 0
    %1558 = vmatpush2.bf16.msra.mxu0 0
    %1559 = vmatprep.subr.bf16.mxu0 0
    %1560 = vmatpush2.bf16.msra.mxu0 0
    %1561 = vmatprep.subr.bf16.mxu0 0
    %1562 = vmatpush2.bf16.msra.mxu0 0
    %1563 = vmatprep.subr.bf16.mxu0 0
    %1564 = vmatpush2.bf16.msra.mxu0 0
    %1565 = vmatprep.subr.bf16.mxu0 0
    %1566 = vmatpush2.bf16.msra.mxu0 0
    %1567 = vmatprep.subr.bf16.mxu0 0
    %1568 = vmatpush2.bf16.msra.mxu0 0
    %1569 = vmatprep.subr.bf16.mxu0 0
    %1570 = vmatpush2.bf16.msra.mxu0 0
    %1571 = vmatprep.subr.bf16.mxu0 0
    %1572 = vmatpush2.bf16.msra.mxu0 0
    %1573 = vmatprep.mubr.bf16.mxu0 0
    %1574 = vmatmul.mubr.bf16.gmra.mxu0 %v1539
    %v1575 = vpop.f32.mrf.mxu0
    %v1576 = vadd.f32 %v1524, %v1575
    %v1577 = vpop.f32.mrf.mxu0
    %v1578 = vpop.f32.mrf.mxu0
    %v1579 = vadd.f32 %v1524, %v1578
    %v1580 = vpop.f32.mrf.mxu0
    %1581 = vdwg.mxu0
    %v1582 = vadd.f32 %v1576, %v85
    %v1583 = vadd.f32 %v1579, %v86
    %v1584 = vtanh.pop %v1582
    %v1585 = vtanh.pop %v1583
    %v1586 = vpack.c.bf16 %v1585, %v1584
    %v1587 = vld [vmem:[%s13] sm:$0xf]
    %v1588 = vld [vmem:[%s13 + $0x4] sm:$0xf]
    %v1589 = vld [vmem:[%s13 + $0x8] sm:$0xf]
    %v1590 = vld [vmem:[%s13 + $0xc] sm:$0xf]
    %v1591 = vld [vmem:[%s13 + $0x10] sm:$0xf]
    %v1592 = vld [vmem:[%s13 + $0x14] sm:$0xf]
    %v1593 = vld [vmem:[%s13 + $0x18] sm:$0xf]
    %v1594 = vld [vmem:[%s13 + $0x1c] sm:$0xf]
    %v1595 = vld [vmem:[%s13 + $0x20] sm:$0xf]
    %v1596 = vld [vmem:[%s13 + $0x24] sm:$0xf]
    %v1597 = vld [vmem:[%s13 + $0x28] sm:$0xf]
    %v1598 = vld [vmem:[%s13 + $0x2c] sm:$0xf]
    %v1599 = vld [vmem:[%s13 + $0x30] sm:$0xf]
    %v1600 = vld [vmem:[%s13 + $0x34] sm:$0xf]
    %v1601 = vld [vmem:[%s13 + $0x38] sm:$0xf]
    %v1602 = vld [vmem:[%s13 + $0x3c] sm:$0xf]
    %v1603 = vld [vmem:[%s14] sm:$0x1]
    %v1605 = vlaneseq
    %v1606 = vshrl.u32 %v1605, 7
    %v1607 = vsub.s32 0, %v1606
    %v1608 = vrot.slane %v1603, %v1607
    %v1626 = vunpack.c.l.b16 %v1587
    %v1627 = vunpack.c.l.b16 %v1588
    %v1628 = vunpack.c.l.b16 %v1589
    %v1629 = vunpack.c.l.b16 %v1590
    %v1630 = vunpack.c.l.b16 %v1591
    %v1631 = vunpack.c.l.b16 %v1592
    %v1632 = vunpack.c.l.b16 %v1593
    %v1633 = vunpack.c.l.b16 %v1594
    %v1634 = vunpack.c.l.b16 %v1595
    %v1635 = vunpack.c.l.b16 %v1596
    %v1636 = vunpack.c.l.b16 %v1597
    %v1637 = vunpack.c.l.b16 %v1598
    %v1638 = vunpack.c.l.b16 %v1599
    %v1639 = vunpack.c.l.b16 %v1600
    %v1640 = vunpack.c.l.b16 %v1601
    %v1641 = vunpack.c.l.b16 %v1602
    %v1642 = vpack.c.b16 %v1627, %v1626
    %v1643 = vpack.c.b16 %v1629, %v1628
    %v1644 = vpack.c.b16 %v1631, %v1630
    %v1645 = vpack.c.b16 %v1633, %v1632
    %v1646 = vpack.c.b16 %v1635, %v1634
    %v1647 = vpack.c.b16 %v1637, %v1636
    %v1648 = vpack.c.b16 %v1639, %v1638
    %v1649 = vpack.c.b16 %v1641, %v1640
    %1658 = vmatprep.subr.bf16.mxu0 0
    %1659 = vmatpush1.bf16.msra.mxu0 %v1649
    %1660 = vmatprep.subr.bf16.mxu0 0
    %1661 = vmatpush1.bf16.msra.mxu0 %v1648
    %1662 = vmatprep.subr.bf16.mxu0 0
    %1663 = vmatpush1.bf16.msra.mxu0 %v1647
    %1664 = vmatprep.subr.bf16.mxu0 0
    %1665 = vmatpush1.bf16.msra.mxu0 %v1646
    %1666 = vmatprep.subr.bf16.mxu0 0
    %1667 = vmatpush1.bf16.msra.mxu0 %v1645
    %1668 = vmatprep.subr.bf16.mxu0 0
    %1669 = vmatpush1.bf16.msra.mxu0 %v1644
    %1670 = vmatprep.subr.bf16.mxu0 0
    %1671 = vmatpush1.bf16.msra.mxu0 %v1643
    %1672 = vmatprep.subr.bf16.mxu0 0
    %1673 = vmatpush1.bf16.msra.mxu0 %v1642
    %1674 = vmatprep.subr.bf16.mxu0 0
    %1675 = vmatpush2.bf16.msra.mxu0 0
    %1676 = vmatprep.subr.bf16.mxu0 0
    %1677 = vmatpush2.bf16.msra.mxu0 0
    %1678 = vmatprep.subr.bf16.mxu0 0
    %1679 = vmatpush2.bf16.msra.mxu0 0
    %1680 = vmatprep.subr.bf16.mxu0 0
    %1681 = vmatpush2.bf16.msra.mxu0 0
    %1682 = vmatprep.subr.bf16.mxu0 0
    %1683 = vmatpush2.bf16.msra.mxu0 0
    %1684 = vmatprep.subr.bf16.mxu0 0
    %1685 = vmatpush2.bf16.msra.mxu0 0
    %1686 = vmatprep.subr.bf16.mxu0 0
    %1687 = vmatpush2.bf16.msra.mxu0 0
    %1688 = vmatprep.subr.bf16.mxu0 0
    %1689 = vmatpush2.bf16.msra.mxu0 0
    %1690 = vmatprep.mubr.bf16.mxu0 0
    %1691 = vmatmul.mubr.bf16.gmra.mxu0 %v1586
    %v1692 = vpop.f32.mrf.mxu0
    %v1693 = vadd.f32 %v1608, %v1692
    %v1694 = vpop.f32.mrf.mxu0
    %v1695 = vpop.f32.mrf.mxu0
    %v1696 = vadd.f32 %v1608, %v1695
    %v1697 = vpop.f32.mrf.mxu0
    %1698 = vdwg.mxu0
    %v1699 = vadd.f32 %v1468, %v1693
    %v1700 = vadd.f32 %v1469, %v1696
    %1701 = vst.msk [vmem:[#allocation7] sm:$0xff] %vm89, %v1699
    %1702 = vst.msk [vmem:[#allocation7 + $0x8] sm:$0xff] %vm89, %v1700
    %1703 = vst [vmem:[#allocation8] sm:$0xff] %v1584
    %1704 = vst [vmem:[#allocation8 + $0x8] sm:$0xff] %v1585
    // Predicated region
    $region70: #{tpu_custom_call.1} parent=1 // pred_check
      _
    $region71: #{tpu_custom_call.1} parent=1 // pred_check_branch
      %1706 = sbr.rel (0) target = $region73
    $region72: #{tpu_custom_call.1} parent=1 // pred_region
      %s1708 = ssub.s32 256, 256
      %1709 = vsyncadd [#allocation4], %s1708
      %s1710 = sshll.u32 [#allocation7], 4
      %s1711 = int_to_ptr.vmem [resolvable:$true] %s1710
      %1716 = dma.vmem_to_hbm [thread:$0]  %s1711, 256, %s15, [#allocation4], 128, 128, 8
    $region73: #{tpu_custom_call.1} parent=1 // pred_fallthru
      _
    // Predicated region
    $region74: #{tpu_custom_call.1} parent=1 // pred_check
      _
    $region75: #{tpu_custom_call.1} parent=1 // pred_check_branch
      %1718 = sbr.rel (0) target = $region77
    $region76: #{tpu_custom_call.1} parent=1 // pred_region
      %s1720 = ssub.s32 256, 256
      %1721 = vsyncadd [#allocation9], %s1720
      %s1722 = sshll.u32 [#allocation8], 4
      %s1723 = int_to_ptr.vmem [resolvable:$true] %s1722
      %1728 = dma.vmem_to_hbm [thread:$0]  %s1723, 256, %s16, [#allocation9], 128, 128, 8
    $region77: #{tpu_custom_call.1} parent=1 // pred_fallthru
      _
    // Predicated region
    $region78: #{tpu_custom_call.1} parent=1 // pred_check
      _
    $region79: #{tpu_custom_call.1} parent=1 // pred_check_branch
      %1730 = sbr.rel (0) target = $region81
    $region80: #{tpu_custom_call.1} parent=1 // pred_region
      %1731 = dma.done [#allocation4], 256
    $region81: #{tpu_custom_call.1} parent=1 // pred_fallthru
      _
    // Predicated region
    $region82: #{tpu_custom_call.1} parent=1 // pred_check
      _
    $region83: #{tpu_custom_call.1} parent=1 // pred_check_branch
      %1733 = sbr.rel (0) target = $region85
    $region84: #{tpu_custom_call.1} parent=1 // pred_region
      %1734 = dma.done [#allocation9], 256
    $region85: #{tpu_custom_call.1} parent=1 // pred_fallthru
      _
    %1735 = vsyncpa [#allocation3], 1
    %1736 = vsyncpa [#allocation6], 1
    %1737 = vsyncpa [#allocation4], 1
    %1738 = vsyncpa [#allocation9], 1

// kernel: tpu_custom_call.1
$region0: #{tpu_custom_call.1}
  #allocation0 [shape = 'u32[]', space=smem, size = 0x4, offset = 0x4, fixed_abs, tag = 'smem constant byte address 0x4 - core index']
  #allocation1 [shape = 'u32[144,128]{1,0:T(1,128)}', space=vmem, size = 0x12000, scoped, tag = 'internal scratch']
  %s0 = inlined_call_operand.hbm [shape: f32[2,8,32], index: 0, kind: input, shape index: {}, may-alias: {0,15}]
  %s1 = inlined_call_operand.hbm [shape: f32[2,8,128], index: 1, kind: input, shape index: {}, may-alias: {1,16}]
  %s2 = inlined_call_operand.vmem [shape: f32[1,32], index: 2, kind: input, shape index: {}]
  %s3 = inlined_call_operand.vmem [shape: f32[1,32], index: 3, kind: input, shape index: {}]
  %s4 = inlined_call_operand.vmem [shape: bf16[32,32], index: 4, kind: input, shape index: {}]
  %s5 = inlined_call_operand.vmem [shape: bf16[32,32], index: 5, kind: input, shape index: {}]
  %s6 = inlined_call_operand.vmem [shape: bf16[32,32], index: 6, kind: input, shape index: {}]
  %s7 = inlined_call_operand.vmem [shape: bf16[32,32], index: 7, kind: input, shape index: {}]
  %s8 = inlined_call_operand.vmem [shape: f32[1,32], index: 8, kind: input, shape index: {}]
  %s9 = inlined_call_operand.vmem [shape: f32[1,32], index: 9, kind: input, shape index: {}]
  %s10 = inlined_call_operand.vmem [shape: f32[1,32], index: 10, kind: input, shape index: {}]
  %s11 = inlined_call_operand.vmem [shape: bf16[32,128], index: 11, kind: input, shape index: {}]
  %s12 = inlined_call_operand.vmem [shape: f32[1,128], index: 12, kind: input, shape index: {}]
  %s13 = inlined_call_operand.vmem [shape: bf16[128,32], index: 13, kind: input, shape index: {}]
  %s14 = inlined_call_operand.vmem [shape: f32[1,32], index: 14, kind: input, shape index: {}]
  %s15 = inlined_call_operand.hbm [shape: f32[2,8,32], index: 15, kind: output, shape index: {0}, may-alias: {0,15}]
  %s16 = inlined_call_operand.hbm [shape: f32[2,8,128], index: 16, kind: output, shape index: {1}, may-alias: {1,16}]
  %17 = xla_tuple %s15, %s16
  %s18 = sld [smem:[#allocation0]]
  $region86: #{tpu_custom_call.1} parent=0
    _
  %s20 = ssub.s32 1, %s18
  %s21 = scalar_select 0, %s20, %s18
  $region1: #{tpu_custom_call.1} parent=0
    #allocation2 [shape = 'u8[8192]{0}', space=vmem, size = 0x2000, scoped, tag = 'input window, operand 0, single buffered']
    #allocation3 [shape = 's32[1]{0}', space=sflag, size = 0x4, scoped, tag = 'scoped memory for tpu_custom_call.1']
    #allocation4 [shape = 's32[1]{0}', space=sflag, size = 0x4, scoped, tag = 'scoped memory for tpu_custom_call.1']
    #allocation5 [shape = 'u8[8192]{0}', space=vmem, size = 0x2000, scoped, tag = 'input window, operand 1, single buffered']
    #allocation6 [shape = 's32[1]{0}', space=sflag, size = 0x4, scoped, tag = 'scoped memory for tpu_custom_call.1']
    #allocation7 [shape = 'u8[8192]{0}', space=vmem, size = 0x2000, scoped, tag = 'output window, operand 0, single buffered']
    #allocation8 [shape = 'u8[8192]{0}', space=vmem, size = 0x2000, scoped, tag = 'output window, operand 1, single buffered']
    #allocation9 [shape = 's32[1]{0}', space=sflag, size = 0x4, scoped, tag = 'scoped memory for tpu_custom_call.1']
    %22 = vsyncpa [#allocation3], 0
    %23 = vsyncpa [#allocation6], 0
    %24 = vsyncpa [#allocation4], 0
    %25 = vsyncpa [#allocation9], 0
    // Predicated region
    $region2: #{tpu_custom_call.1} parent=1 // pred_check
      _
    $region3: #{tpu_custom_call.1} parent=1 // pred_check_branch
      %27 = sbr.rel (0) target = $region5
    $region4: #{tpu_custom_call.1} parent=1 // pred_region
      %s29 = ssub.s32 256, 256
      %30 = vsyncadd [#allocation3], %s29
      %s31 = sshll.u32 [#allocation2], 4
      %s32 = int_to_ptr.vmem [resolvable:$true] %s31
      %37 = dma.hbm_to_vmem [thread:$0]  %s0, 256, %s32, [#allocation3], 128, 128, 8
    $region5: #{tpu_custom_call.1} parent=1 // pred_fallthru
      _
    // Predicated region
    $region6: #{tpu_custom_call.1} parent=1 // pred_check
      _
    $region7: #{tpu_custom_call.1} parent=1 // pred_check_branch
      %39 = sbr.rel (0) target = $region9
    $region8: #{tpu_custom_call.1} parent=1 // pred_region
      %s41 = ssub.s32 256, 256
      %42 = vsyncadd [#allocation6], %s41
      %s43 = sshll.u32 [#allocation5], 4
      %s44 = int_to_ptr.vmem [resolvable:$true] %s43
      %49 = dma.hbm_to_vmem [thread:$0]  %s1, 256, %s44, [#allocation6], 128, 128, 8
    $region9: #{tpu_custom_call.1} parent=1 // pred_fallthru
      _
    // Predicated region
    $region10: #{tpu_custom_call.1} parent=1 // pred_check
      _
    $region11: #{tpu_custom_call.1} parent=1 // pred_check_branch
      %51 = sbr.rel (0) target = $region13
    $region12: #{tpu_custom_call.1} parent=1 // pred_region
      _
    $region13: #{tpu_custom_call.1} parent=1 // pred_fallthru
      _
    // Predicated region
    $region14: #{tpu_custom_call.1} parent=1 // pred_check
      _
    $region15: #{tpu_custom_call.1} parent=1 // pred_check_branch
      %53 = sbr.rel (0) target = $region17
    $region16: #{tpu_custom_call.1} parent=1 // pred_region
      _
    $region17: #{tpu_custom_call.1} parent=1 // pred_fallthru
      _
    // Predicated region
    $region18: #{tpu_custom_call.1} parent=1 // pred_check
      _
    $region19: #{tpu_custom_call.1} parent=1 // pred_check_branch
      %55 = sbr.rel (0) target = $region21
    $region20: #{tpu_custom_call.1} parent=1 // pred_region
      _
    $region21: #{tpu_custom_call.1} parent=1 // pred_fallthru
      _
    // Predicated region
    $region22: #{tpu_custom_call.1} parent=1 // pred_check
      _
    $region23: #{tpu_custom_call.1} parent=1 // pred_check_branch
      %57 = sbr.rel (0) target = $region25
    $region24: #{tpu_custom_call.1} parent=1 // pred_region
      _
    $region25: #{tpu_custom_call.1} parent=1 // pred_fallthru
      _
    // Predicated region
    $region26: #{tpu_custom_call.1} parent=1 // pred_check
      _
    $region27: #{tpu_custom_call.1} parent=1 // pred_check_branch
      %59 = sbr.rel (0) target = $region29
    $region28: #{tpu_custom_call.1} parent=1 // pred_region
      _
    $region29: #{tpu_custom_call.1} parent=1 // pred_fallthru
      _
    // Predicated region
    $region30: #{tpu_custom_call.1} parent=1 // pred_check
      _
    $region31: #{tpu_custom_call.1} parent=1 // pred_check_branch
      %61 = sbr.rel (0) target = $region33
    $region32: #{tpu_custom_call.1} parent=1 // pred_region
      _
    $region33: #{tpu_custom_call.1} parent=1 // pred_fallthru
      _
    // Predicated region
    $region34: #{tpu_custom_call.1} parent=1 // pred_check
      _
    $region35: #{tpu_custom_call.1} parent=1 // pred_check_branch
      %63 = sbr.rel (0) target = $region37
    $region36: #{tpu_custom_call.1} parent=1 // pred_region
      _
    $region37: #{tpu_custom_call.1} parent=1 // pred_fallthru
      _
    // Predicated region
    $region38: #{tpu_custom_call.1} parent=1 // pred_check
      _
    $region39: #{tpu_custom_call.1} parent=1 // pred_check_branch
      %65 = sbr.rel (0) target = $region41
    $region40: #{tpu_custom_call.1} parent=1 // pred_region
      _
    $region41: #{tpu_custom_call.1} parent=1 // pred_fallthru
      _
    // Predicated region
    $region42: #{tpu_custom_call.1} parent=1 // pred_check
      _
    $region43: #{tpu_custom_call.1} parent=1 // pred_check_branch
      %67 = sbr.rel (0) target = $region45
    $region44: #{tpu_custom_call.1} parent=1 // pred_region
      _
    $region45: #{tpu_custom_call.1} parent=1 // pred_fallthru
      _
    // Predicated region
    $region46: #{tpu_custom_call.1} parent=1 // pred_check
      _
    $region47: #{tpu_custom_call.1} parent=1 // pred_check_branch
      %69 = sbr.rel (0) target = $region49
    $region48: #{tpu_custom_call.1} parent=1 // pred_region
      _
    $region49: #{tpu_custom_call.1} parent=1 // pred_fallthru
      _
    // Predicated region
    $region50: #{tpu_custom_call.1} parent=1 // pred_check
      _
    $region51: #{tpu_custom_call.1} parent=1 // pred_check_branch
      %71 = sbr.rel (0) target = $region53
    $region52: #{tpu_custom_call.1} parent=1 // pred_region
      _
    $region53: #{tpu_custom_call.1} parent=1 // pred_fallthru
      _
    // Predicated region
    $region54: #{tpu_custom_call.1} parent=1 // pred_check
      _
    $region55: #{tpu_custom_call.1} parent=1 // pred_check_branch
      %73 = sbr.rel (0) target = $region57
    $region56: #{tpu_custom_call.1} parent=1 // pred_region
      _
    $region57: #{tpu_custom_call.1} parent=1 // pred_fallthru
      _
    // Predicated region
    $region58: #{tpu_custom_call.1} parent=1 // pred_check
      _
    $region59: #{tpu_custom_call.1} parent=1 // pred_check_branch
      %75 = sbr.rel (0) target = $region61
    $region60: #{tpu_custom_call.1} parent=1 // pred_region
      _
    $region61: #{tpu_custom_call.1} parent=1 // pred_fallthru
      _
    // Predicated region
    $region62: #{tpu_custom_call.1} parent=1 // pred_check
      _
    $region63: #{tpu_custom_call.1} parent=1 // pred_check_branch
      %77 = sbr.rel (0) target = $region65
    $region64: #{tpu_custom_call.1} parent=1 // pred_region
      %78 = dma.done [#allocation3], 256
    $region65: #{tpu_custom_call.1} parent=1 // pred_fallthru
      _
    // Predicated region
    $region66: #{tpu_custom_call.1} parent=1 // pred_check
      _
    $region67: #{tpu_custom_call.1} parent=1 // pred_check_branch
      %80 = sbr.rel (0) target = $region69
    $region68: #{tpu_custom_call.1} parent=1 // pred_region
      %81 = dma.done [#allocation6], 256
    $region69: #{tpu_custom_call.1} parent=1 // pred_fallthru
      _
    %v83 = vld [vmem:[#allocation2] sm:$0xff]
    %v84 = vld [vmem:[#allocation2 + $0x8] sm:$0xff]
    %v85 = vld [vmem:[#allocation5] sm:$0xff]
    %v86 = vld [vmem:[#allocation5 + $0x8] sm:$0xff]
    %v87 = vld [vmem:[%s2] sm:$0x1]
    %v88 = vld [vmem:[%s3] sm:$0x1]
    %vm89 = vcmask 261120
    %v90 = vsel %vm89, %v83, 0.0
    %91 = vadd.xlane.f32.xlu0 %v90
    %v92 = vpop.xlane.xlu0 %91
    %v93 = vsel %vm89, %v84, 0.0
    %94 = vadd.xlane.f32.xlu0 %v93
    %v95 = vpop.xlane.xlu0 %94
    %v96 = vrcp.pop 32.0
    %v97 = vmul.f32 %v92, %v96
    %v98 = vmul.f32 %v95, %v96
    %v99 = vsub.f32 %v83, %v97
    %v100 = vsub.f32 %v84, %v98
    %v101 = vmul.f32 %v99, %v99
    %v102 = vmul.f32 %v100, %v100
    %v103 = vsel %vm89, %v101, 0.0
    %104 = vadd.xlane.f32.xlu0 %v103
    %v105 = vpop.xlane.xlu0 %104
    %v106 = vsel %vm89, %v102, 0.0
    %107 = vadd.xlane.f32.xlu0 %v106
    %v108 = vpop.xlane.xlu0 %107
    %v109 = vmul.f32 %v105, %v96
    %v110 = vmul.f32 %v108, %v96
    %v111 = vadd.f32 %v109, 1e-05
    %v112 = vadd.f32 %v110, 1e-05
    %v113 = vrsqrt.pop %v111
    %v114 = vrsqrt.pop %v112
    %v115 = vmul.f32 %v99, %v113
    %v116 = vmul.f32 %v100, %v114
    %v118 = vlaneseq
    %v119 = vshrl.u32 %v118, 7
    %v120 = vsub.s32 0, %v119
    %v121 = vrot.slane %v87, %v120
    %v123 = vmul.f32 %v115, %v121
    %v124 = vmul.f32 %v116, %v121
    %v126 = vlaneseq
    %v127 = vshrl.u32 %v126, 7
    %v128 = vsub.s32 0, %v127
    %v129 = vrot.slane %v88, %v128
    %v131 = vadd.f32 %v123, %v129
    %v132 = vadd.f32 %v124, %v129
    %v133 = vpack.c.bf16 %v132, %v131
    %v134 = vld [vmem:[%s4] sm:$0xf]
    %v135 = vld [vmem:[%s4 + $0x4] sm:$0xf]
    %v136 = vld [vmem:[%s4 + $0x8] sm:$0xf]
    %v137 = vld [vmem:[%s4 + $0xc] sm:$0xf]
    %v142 = vunpack.c.l.b16 %v134
    %v143 = vunpack.c.l.b16 %v135
    %v144 = vunpack.c.l.b16 %v136
    %v145 = vunpack.c.l.b16 %v137
    %v146 = vpack.c.b16 %v143, %v142
    %v147 = vpack.c.b16 %v145, %v144
    %v151 = vsel %vm89, %v133, 0
    %153 = vmatprep.subr.bf16.mxu0 0
    %154 = vmatpush1.bf16.msra.mxu0 0
    %155 = vmatprep.subr.bf16.mxu0 0
    %156 = vmatpush1.bf16.msra.mxu0 0
    %157 = vmatprep.subr.bf16.mxu0 0
    %158 = vmatpush1.bf16.msra.mxu0 0
    %159 = vmatprep.subr.bf16.mxu0 0
    %160 = vmatpush1.bf16.msra.mxu0 0
    %161 = vmatprep.subr.bf16.mxu0 0
    %162 = vmatpush1.bf16.msra.mxu0 0
    %163 = vmatprep.subr.bf16.mxu0 0
    %164 = vmatpush1.bf16.msra.mxu0 0
    %165 = vmatprep.subr.bf16.mxu0 0
    %166 = vmatpush1.bf16.msra.mxu0 %v147
    %167 = vmatprep.subr.bf16.mxu0 0
    %168 = vmatpush1.bf16.msra.mxu0 %v146
    %169 = vmatprep.subr.bf16.mxu0 0
    %170 = vmatpush2.bf16.msra.mxu0 0
    %171 = vmatprep.subr.bf16.mxu0 0
    %172 = vmatpush2.bf16.msra.mxu0 0
    %173 = vmatprep.subr.bf16.mxu0 0
    %174 = vmatpush2.bf16.msra.mxu0 0
    %175 = vmatprep.subr.bf16.mxu0 0
    %176 = vmatpush2.bf16.msra.mxu0 0
    %177 = vmatprep.subr.bf16.mxu0 0
    %178 = vmatpush2.bf16.msra.mxu0 0
    %179 = vmatprep.subr.bf16.mxu0 0
    %180 = vmatpush2.bf16.msra.mxu0 0
    %181 = vmatprep.subr.bf16.mxu0 0
    %182 = vmatpush2.bf16.msra.mxu0 0
    %183 = vmatprep.subr.bf16.mxu0 0
    %184 = vmatpush2.bf16.msra.mxu0 0
    %185 = vmatprep.mubr.bf16.mxu0 0
    %186 = vmatmul.mubr.bf16.gmra.mxu0 %v151
    %v187 = vpop.f32.mrf.mxu0
    %v188 = vadd.f32 0.0, %v187
    %v189 = vpop.f32.mrf.mxu0
    %v190 = vpop.f32.mrf.mxu0
    %v191 = vadd.f32 0.0, %v190
    %v192 = vpop.f32.mrf.mxu0
    %193 = vdwg.mxu0
    %v194 = vpack.c.bf16 %v191, %v188
    %v195 = vld [vmem:[%s5] sm:$0xf]
    %v196 = vld [vmem:[%s5 + $0x4] sm:$0xf]
    %v197 = vld [vmem:[%s5 + $0x8] sm:$0xf]
    %v198 = vld [vmem:[%s5 + $0xc] sm:$0xf]
    %v203 = vunpack.c.l.b16 %v195
    %v204 = vunpack.c.l.b16 %v196
    %v205 = vunpack.c.l.b16 %v197
    %v206 = vunpack.c.l.b16 %v198
    %v207 = vpack.c.b16 %v204, %v203
    %v208 = vpack.c.b16 %v206, %v205
    %211 = vmatprep.subr.bf16.mxu0 0
    %212 = vmatpush1.bf16.msra.mxu0 0
    %213 = vmatprep.subr.bf16.mxu0 0
    %214 = vmatpush1.bf16.msra.mxu0 0
    %215 = vmatprep.subr.bf16.mxu0 0
    %216 = vmatpush1.bf16.msra.mxu0 0
    %217 = vmatprep.subr.bf16.mxu0 0
    %218 = vmatpush1.bf16.msra.mxu0 0
    %219 = vmatprep.subr.bf16.mxu0 0
    %220 = vmatpush1.bf16.msra.mxu0 0
    %221 = vmatprep.subr.bf16.mxu0 0
    %222 = vmatpush1.bf16.msra.mxu0 0
    %223 = vmatprep.subr.bf16.mxu0 0
    %224 = vmatpush1.bf16.msra.mxu0 %v208
    %225 = vmatprep.subr.bf16.mxu0 0
    %226 = vmatpush1.bf16.msra.mxu0 %v207
    %227 = vmatprep.subr.bf16.mxu0 0
    %228 = vmatpush2.bf16.msra.mxu0 0
    %229 = vmatprep.subr.bf16.mxu0 0
    %230 = vmatpush2.bf16.msra.mxu0 0
    %231 = vmatprep.subr.bf16.mxu0 0
    %232 = vmatpush2.bf16.msra.mxu0 0
    %233 = vmatprep.subr.bf16.mxu0 0
    %234 = vmatpush2.bf16.msra.mxu0 0
    %235 = vmatprep.subr.bf16.mxu0 0
    %236 = vmatpush2.bf16.msra.mxu0 0
    %237 = vmatprep.subr.bf16.mxu0 0
    %238 = vmatpush2.bf16.msra.mxu0 0
    %239 = vmatprep.subr.bf16.mxu0 0
    %240 = vmatpush2.bf16.msra.mxu0 0
    %241 = vmatprep.subr.bf16.mxu0 0
    %242 = vmatpush2.bf16.msra.mxu0 0
    %243 = vmatprep.mubr.bf16.mxu0 0
    %244 = vmatmul.mubr.bf16.gmra.mxu0 %v151
    %v245 = vpop.f32.mrf.mxu0
    %v246 = vadd.f32 0.0, %v245
    %v247 = vpop.f32.mrf.mxu0
    %v248 = vpop.f32.mrf.mxu0
    %v249 = vadd.f32 0.0, %v248
    %v250 = vpop.f32.mrf.mxu0
    %251 = vdwg.mxu0
    %v252 = vpack.c.bf16 %v249, %v246
    %v253 = vld [vmem:[%s6] sm:$0xf]
    %v254 = vld [vmem:[%s6 + $0x4] sm:$0xf]
    %v255 = vld [vmem:[%s6 + $0x8] sm:$0xf]
    %v256 = vld [vmem:[%s6 + $0xc] sm:$0xf]
    %v261 = vunpack.c.l.b16 %v253
    %v262 = vunpack.c.l.b16 %v254
    %v263 = vunpack.c.l.b16 %v255
    %v264 = vunpack.c.l.b16 %v256
    %v265 = vpack.c.b16 %v262, %v261
    %v266 = vpack.c.b16 %v264, %v263
    %269 = vmatprep.subr.bf16.mxu0 0
    %270 = vmatpush1.bf16.msra.mxu0 0
    %271 = vmatprep.subr.bf16.mxu0 0
    %272 = vmatpush1.bf16.msra.mxu0 0
    %273 = vmatprep.subr.bf16.mxu0 0
    %274 = vmatpush1.bf16.msra.mxu0 0
    %275 = vmatprep.subr.bf16.mxu0 0
    %276 = vmatpush1.bf16.msra.mxu0 0
    %277 = vmatprep.subr.bf16.mxu0 0
    %278 = vmatpush1.bf16.msra.mxu0 0
    %279 = vmatprep.subr.bf16.mxu0 0
    %280 = vmatpush1.bf16.msra.mxu0 0
    %281 = vmatprep.subr.bf16.mxu0 0
    %282 = vmatpush1.bf16.msra.mxu0 %v266
    %283 = vmatprep.subr.bf16.mxu0 0
    %284 = vmatpush1.bf16.msra.mxu0 %v265
    %285 = vmatprep.subr.bf16.mxu0 0
    %286 = vmatpush2.bf16.msra.mxu0 0
    %287 = vmatprep.subr.bf16.mxu0 0
    %288 = vmatpush2.bf16.msra.mxu0 0
    %289 = vmatprep.subr.bf16.mxu0 0
    %290 = vmatpush2.bf16.msra.mxu0 0
    %291 = vmatprep.subr.bf16.mxu0 0
    %292 = vmatpush2.bf16.msra.mxu0 0
    %293 = vmatprep.subr.bf16.mxu0 0
    %294 = vmatpush2.bf16.msra.mxu0 0
    %295 = vmatprep.subr.bf16.mxu0 0
    %296 = vmatpush2.bf16.msra.mxu0 0
    %297 = vmatprep.subr.bf16.mxu0 0
    %298 = vmatpush2.bf16.msra.mxu0 0
    %299 = vmatprep.subr.bf16.mxu0 0
    %300 = vmatpush2.bf16.msra.mxu0 0
    %301 = vmatprep.mubr.bf16.mxu0 0
    %302 = vmatmul.mubr.bf16.gmra.mxu0 %v151
    %v303 = vpop.f32.mrf.mxu0
    %v304 = vadd.f32 0.0, %v303
    %v305 = vpop.f32.mrf.mxu0
    %v306 = vpop.f32.mrf.mxu0
    %v307 = vadd.f32 0.0, %v306
    %v308 = vpop.f32.mrf.mxu0
    %309 = vdwg.mxu0
    %v310 = vpack.c.bf16 %v307, %v304
    %v311 = vld [vmem:[%s7] sm:$0xf]
    %v312 = vld [vmem:[%s7 + $0x4] sm:$0xf]
    %v313 = vld [vmem:[%s7 + $0x8] sm:$0xf]
    %v314 = vld [vmem:[%s7 + $0xc] sm:$0xf]
    %v316 = vunpack.c.l.b16 %v194
    %v317 = vunpack.c.h.b16 %v194
    %v318 = vpack.c.b16 %v316, %v316
    %v319 = vpack.c.b16 %v317, %v317
    %v321 = vunpack.c.l.b16 %v252
    %v322 = vunpack.c.h.b16 %v252
    %v323 = vpack.c.b16 %v321, %v321
    %v324 = vpack.c.b16 %v322, %v322
    %v326 = vunpack.c.l.b16 %v310
    %v327 = vunpack.c.h.b16 %v310
    %v328 = vpack.c.b16 %v326, %v326
    %v329 = vpack.c.b16 %v327, %v327
    %v330 = vlaneseq
    %v331 = vshrl.u32 %v330, 7
    %vm332 = vcmask 64512
    %v334 = vsel %vm332, %v318, 0
    %v337 = vsel %vm332, %v323, 0
    %339 = vmatprep.subr.bf16.mxu0 0
    %340 = vmatpush1.bf16.xpose.msra.mxu0 0
    %341 = vmatprep.subr.bf16.mxu0 0
    %342 = vmatpush1.bf16.xpose.msra.mxu0 0
    %343 = vmatprep.subr.bf16.mxu0 0
    %344 = vmatpush1.bf16.xpose.msra.mxu0 0
    %345 = vmatprep.subr.bf16.mxu0 0
    %346 = vmatpush1.bf16.xpose.msra.mxu0 0
    %347 = vmatprep.subr.bf16.mxu0 0
    %348 = vmatpush1.bf16.xpose.msra.mxu0 0
    %349 = vmatprep.subr.bf16.mxu0 0
    %350 = vmatpush1.bf16.xpose.msra.mxu0 0
    %351 = vmatprep.subr.bf16.mxu0 0
    %352 = vmatpush1.bf16.xpose.msra.mxu0 0
    %353 = vmatprep.subr.bf16.mxu0 0
    %354 = vmatpush1.bf16.xpose.msra.mxu0 %v337
    %355 = vmatprep.subr.bf16.mxu0 0
    %356 = vmatpush2.bf16.xpose.msra.mxu0 0
    %357 = vmatprep.subr.bf16.mxu0 0
    %358 = vmatpush2.bf16.xpose.msra.mxu0 0
    %359 = vmatprep.subr.bf16.mxu0 0
    %360 = vmatpush2.bf16.xpose.msra.mxu0 0
    %361 = vmatprep.subr.bf16.mxu0 0
    %362 = vmatpush2.bf16.xpose.msra.mxu0 0
    %363 = vmatprep.subr.bf16.mxu0 0
    %364 = vmatpush2.bf16.xpose.msra.mxu0 0
    %365 = vmatprep.subr.bf16.mxu0 0
    %366 = vmatpush2.bf16.xpose.msra.mxu0 0
    %367 = vmatprep.subr.bf16.mxu0 0
    %368 = vmatpush2.bf16.xpose.msra.mxu0 0
    %369 = vmatprep.subr.bf16.mxu0 0
    %370 = vmatpush2.bf16.xpose.msra.mxu0 0
    %371 = vmatprep.mubr.bf16.mxu0 0
    %372 = vmatmul.mubr.bf16.gmra.mxu0 %v334
    %v373 = vpop.f32.mrf.mxu0
    %v374 = vadd.f32 0.0, %v373
    %v375 = vpop.f32.mrf.mxu0
    %v376 = vpop.f32.mrf.mxu0
    %v377 = vpop.f32.mrf.mxu0
    %378 = vdwg.mxu0
    %v380 = vsel %vm332, %v319, 0
    %v383 = vsel %vm332, %v324, 0
    %385 = vmatprep.subr.bf16.mxu0 0
    %386 = vmatpush1.bf16.xpose.msra.mxu0 0
    %387 = vmatprep.subr.bf16.mxu0 0
    %388 = vmatpush1.bf16.xpose.msra.mxu0 0
    %389 = vmatprep.subr.bf16.mxu0 0
    %390 = vmatpush1.bf16.xpose.msra.mxu0 0
    %391 = vmatprep.subr.bf16.mxu0 0
    %392 = vmatpush1.bf16.xpose.msra.mxu0 0
    %393 = vmatprep.subr.bf16.mxu0 0
    %394 = vmatpush1.bf16.xpose.msra.mxu0 0
    %395 = vmatprep.subr.bf16.mxu0 0
    %396 = vmatpush1.bf16.xpose.msra.mxu0 0
    %397 = vmatprep.subr.bf16.mxu0 0
    %398 = vmatpush1.bf16.xpose.msra.mxu0 0
    %399 = vmatprep.subr.bf16.mxu0 0
    %400 = vmatpush1.bf16.xpose.msra.mxu0 %v383
    %401 = vmatprep.subr.bf16.mxu0 0
    %402 = vmatpush2.bf16.xpose.msra.mxu0 0
    %403 = vmatprep.subr.bf16.mxu0 0
    %404 = vmatpush2.bf16.xpose.msra.mxu0 0
    %405 = vmatprep.subr.bf16.mxu0 0
    %406 = vmatpush2.bf16.xpose.msra.mxu0 0
    %407 = vmatprep.subr.bf16.mxu0 0
    %408 = vmatpush2.bf16.xpose.msra.mxu0 0
    %409 = vmatprep.subr.bf16.mxu0 0
    %410 = vmatpush2.bf16.xpose.msra.mxu0 0
    %411 = vmatprep.subr.bf16.mxu0 0
    %412 = vmatpush2.bf16.xpose.msra.mxu0 0
    %413 = vmatprep.subr.bf16.mxu0 0
    %414 = vmatpush2.bf16.xpose.msra.mxu0 0
    %415 = vmatprep.subr.bf16.mxu0 0
    %416 = vmatpush2.bf16.xpose.msra.mxu0 0
    %417 = vmatprep.mubr.bf16.mxu0 0
    %418 = vmatmul.mubr.bf16.gmra.mxu0 %v380
    %v419 = vpop.f32.mrf.mxu0
    %v420 = vadd.f32 0.0, %v419
    %v421 = vpop.f32.mrf.mxu0
    %v422 = vpop.f32.mrf.mxu0
    %v423 = vpop.f32.mrf.mxu0
    %424 = vdwg.mxu0
    %v425 = vlaneseq
    %v426 = vand.u32 %v425, 127
    %vm427 = vcmp.le.s32.totalorder %v426, %v331
    %v428 = vsel %vm427, 1, 0
    %vm429 = vcmp.eq.s32.totalorder %v428, 1
    %v430 = vsel %vm429, %v374, -inf
    %v431 = vsel %vm429, %v420, -inf
    %v432 = vsel %vm332, %v430, -inf
    %433 = vmax.xlane.f32.xlu0 %v432
    %v434 = vpop.xlane.xlu0 %433
    %v435 = vsel %vm332, %v431, -inf
    %436 = vmax.xlane.f32.xlu0 %v435
    %v437 = vpop.xlane.xlu0 %436
    %v438 = vsub.f32 -inf, %v434
    %v439 = vsub.f32 -inf, %v437
    %v440 = vmul.f32 %v438, 1.442695
    %v441 = vpow.pop %v440
    %v442 = vmul.f32 %v439, 1.442695
    %v443 = vpow.pop %v442
    %v444 = vsub.f32 %v430, %v434
    %v445 = vsub.f32 %v431, %v437
    %v446 = vmul.f32 %v444, 1.442695
    %v447 = vpow.pop %v446
    %v448 = vmul.f32 %v445, 1.442695
    %v449 = vpow.pop %v448
    %v450 = vmul.f32 %v441, 0.0
    %v451 = vmul.f32 %v443, 0.0
    %v452 = vsel %vm332, %v447, 0.0
    %453 = vadd.xlane.f32.xlu0 %v452
    %v454 = vpop.xlane.xlu0 %453
    %v455 = vsel %vm332, %v449, 0.0
    %456 = vadd.xlane.f32.xlu0 %v455
    %v457 = vpop.xlane.xlu0 %456
    %v458 = vadd.f32 %v450, %v454
    %v459 = vadd.f32 %v451, %v457
    %v460 = vpack.c.bf16 %v447, %v447
    %v461 = vpack.c.bf16 %v449, %v449
    %v463 = vsel %vm332, %v460, 0
    %vm465 = vcmask 1043456
    %v467 = vsel %vm465, %v328, 0
    %469 = vmatprep.subr.bf16.mxu0 0
    %470 = vmatpush1.bf16.msra.mxu0 0
    %471 = vmatprep.subr.bf16.mxu0 0
    %472 = vmatpush1.bf16.msra.mxu0 0
    %473 = vmatprep.subr.bf16.mxu0 0
    %474 = vmatpush1.bf16.msra.mxu0 0
    %475 = vmatprep.subr.bf16.mxu0 0
    %476 = vmatpush1.bf16.msra.mxu0 0
    %477 = vmatprep.subr.bf16.mxu0 0
    %478 = vmatpush1.bf16.msra.mxu0 0
    %479 = vmatprep.subr.bf16.mxu0 0
    %480 = vmatpush1.bf16.msra.mxu0 0
    %481 = vmatprep.subr.bf16.mxu0 0
    %482 = vmatpush1.bf16.msra.mxu0 0
    %483 = vmatprep.subr.bf16.mxu0 0
    %484 = vmatpush1.bf16.msra.mxu0 %v467
    %485 = vmatprep.subr.bf16.mxu0 0
    %486 = vmatpush2.bf16.msra.mxu0 0
    %487 = vmatprep.subr.bf16.mxu0 0
    %488 = vmatpush2.bf16.msra.mxu0 0
    %489 = vmatprep.subr.bf16.mxu0 0
    %490 = vmatpush2.bf16.msra.mxu0 0
    %491 = vmatprep.subr.bf16.mxu0 0
    %492 = vmatpush2.bf16.msra.mxu0 0
    %493 = vmatprep.subr.bf16.mxu0 0
    %494 = vmatpush2.bf16.msra.mxu0 0
    %495 = vmatprep.subr.bf16.mxu0 0
    %496 = vmatpush2.bf16.msra.mxu0 0
    %497 = vmatprep.subr.bf16.mxu0 0
    %498 = vmatpush2.bf16.msra.mxu0 0
    %499 = vmatprep.subr.bf16.mxu0 0
    %500 = vmatpush2.bf16.msra.mxu0 0
    %501 = vmatprep.mubr.bf16.mxu0 0
    %502 = vmatmul.mubr.bf16.gmra.mxu0 %v463
    %v503 = vpop.f32.mrf.mxu0
    %v504 = vadd.f32 0.0, %v503
    %v505 = vpop.f32.mrf.mxu0
    %v506 = vpop.f32.mrf.mxu0
    %v507 = vpop.f32.mrf.mxu0
    %508 = vdwg.mxu0
    %v510 = vsel %vm332, %v461, 0
    %v513 = vsel %vm465, %v329, 0
    %515 = vmatprep.subr.bf16.mxu0 0
    %516 = vmatpush1.bf16.msra.mxu0 0
    %517 = vmatprep.subr.bf16.mxu0 0
    %518 = vmatpush1.bf16.msra.mxu0 0
    %519 = vmatprep.subr.bf16.mxu0 0
    %520 = vmatpush1.bf16.msra.mxu0 0
    %521 = vmatprep.subr.bf16.mxu0 0
    %522 = vmatpush1.bf16.msra.mxu0 0
    %523 = vmatprep.subr.bf16.mxu0 0
    %524 = vmatpush1.bf16.msra.mxu0 0
    %525 = vmatprep.subr.bf16.mxu0 0
    %526 = vmatpush1.bf16.msra.mxu0 0
    %527 = vmatprep.subr.bf16.mxu0 0
    %528 = vmatpush1.bf16.msra.mxu0 0
    %529 = vmatprep.subr.bf16.mxu0 0
    %530 = vmatpush1.bf16.msra.mxu0 %v513
    %531 = vmatprep.subr.bf16.mxu0 0
    %532 = vmatpush2.bf16.msra.mxu0 0
    %533 = vmatprep.subr.bf16.mxu0 0
    %534 = vmatpush2.bf16.msra.mxu0 0
    %535 = vmatprep.subr.bf16.mxu0 0
    %536 = vmatpush2.bf16.msra.mxu0 0
    %537 = vmatprep.subr.bf16.mxu0 0
    %538 = vmatpush2.bf16.msra.mxu0 0
    %539 = vmatprep.subr.bf16.mxu0 0
    %540 = vmatpush2.bf16.msra.mxu0 0
    %541 = vmatprep.subr.bf16.mxu0 0
    %542 = vmatpush2.bf16.msra.mxu0 0
    %543 = vmatprep.subr.bf16.mxu0 0
    %544 = vmatpush2.bf16.msra.mxu0 0
    %545 = vmatprep.subr.bf16.mxu0 0
    %546 = vmatpush2.bf16.msra.mxu0 0
    %547 = vmatprep.mubr.bf16.mxu0 0
    %548 = vmatmul.mubr.bf16.gmra.mxu0 %v510
    %v549 = vpop.f32.mrf.mxu0
    %v550 = vadd.f32 0.0, %v549
    %v551 = vpop.f32.mrf.mxu0
    %v552 = vpop.f32.mrf.mxu0
    %v553 = vpop.f32.mrf.mxu0
    %554 = vdwg.mxu0
    %v555 = vadd.f32 %v450, %v504
    %v556 = vadd.f32 %v451, %v550
    %v557 = vrcp.pop %v458
    %v558 = vrcp.pop %v459
    %v559 = vmul.f32 %v555, %v557
    %v560 = vmul.f32 %v556, %v558
    %v561 = vpack.c.bf16 %v560, %v559
    %562 = vrot.lane.b32.xlu0 %v318, 120
    %v563 = vpop.permute.xlu0 %562
    %564 = vrot.lane.b32.xlu0 %v323, 120
    %v565 = vpop.permute.xlu0 %564
    %v567 = vsel %vm332, %v563, 0
    %v570 = vsel %vm332, %v565, 0
    %572 = vmatprep.subr.bf16.mxu0 0
    %573 = vmatpush1.bf16.xpose.msra.mxu0 0
    %574 = vmatprep.subr.bf16.mxu0 0
    %575 = vmatpush1.bf16.xpose.msra.mxu0 0
    %576 = vmatprep.subr.bf16.mxu0 0
    %577 = vmatpush1.bf16.xpose.msra.mxu0 0
    %578 = vmatprep.subr.bf16.mxu0 0
    %579 = vmatpush1.bf16.xpose.msra.mxu0 0
    %580 = vmatprep.subr.bf16.mxu0 0
    %581 = vmatpush1.bf16.xpose.msra.mxu0 0
    %582 = vmatprep.subr.bf16.mxu0 0
    %583 = vmatpush1.bf16.xpose.msra.mxu0 0
    %584 = vmatprep.subr.bf16.mxu0 0
    %585 = vmatpush1.bf16.xpose.msra.mxu0 0
    %586 = vmatprep.subr.bf16.mxu0 0
    %587 = vmatpush1.bf16.xpose.msra.mxu0 %v570
    %588 = vmatprep.subr.bf16.mxu0 0
    %589 = vmatpush2.bf16.xpose.msra.mxu0 0
    %590 = vmatprep.subr.bf16.mxu0 0
    %591 = vmatpush2.bf16.xpose.msra.mxu0 0
    %592 = vmatprep.subr.bf16.mxu0 0
    %593 = vmatpush2.bf16.xpose.msra.mxu0 0
    %594 = vmatprep.subr.bf16.mxu0 0
    %595 = vmatpush2.bf16.xpose.msra.mxu0 0
    %596 = vmatprep.subr.bf16.mxu0 0
    %597 = vmatpush2.bf16.xpose.msra.mxu0 0
    %598 = vmatprep.subr.bf16.mxu0 0
    %599 = vmatpush2.bf16.xpose.msra.mxu0 0
    %600 = vmatprep.subr.bf16.mxu0 0
    %601 = vmatpush2.bf16.xpose.msra.mxu0 0
    %602 = vmatprep.subr.bf16.mxu0 0
    %603 = vmatpush2.bf16.xpose.msra.mxu0 0
    %604 = vmatprep.mubr.bf16.mxu0 0
    %605 = vmatmul.mubr.bf16.gmra.mxu0 %v567
    %v606 = vpop.f32.mrf.mxu0
    %v607 = vadd.f32 0.0, %v606
    %v608 = vpop.f32.mrf.mxu0
    %v609 = vpop.f32.mrf.mxu0
    %v610 = vpop.f32.mrf.mxu0
    %611 = vdwg.mxu0
    %612 = vrot.lane.b32.xlu0 %v319, 120
    %v613 = vpop.permute.xlu0 %612
    %614 = vrot.lane.b32.xlu0 %v324, 120
    %v615 = vpop.permute.xlu0 %614
    %v617 = vsel %vm332, %v613, 0
    %v620 = vsel %vm332, %v615, 0
    %622 = vmatprep.subr.bf16.mxu0 0
    %623 = vmatpush1.bf16.xpose.msra.mxu0 0
    %624 = vmatprep.subr.bf16.mxu0 0
    %625 = vmatpush1.bf16.xpose.msra.mxu0 0
    %626 = vmatprep.subr.bf16.mxu0 0
    %627 = vmatpush1.bf16.xpose.msra.mxu0 0
    %628 = vmatprep.subr.bf16.mxu0 0
    %629 = vmatpush1.bf16.xpose.msra.mxu0 0
    %630 = vmatprep.subr.bf16.mxu0 0
    %631 = vmatpush1.bf16.xpose.msra.mxu0 0
    %632 = vmatprep.subr.bf16.mxu0 0
    %633 = vmatpush1.bf16.xpose.msra.mxu0 0
    %634 = vmatprep.subr.bf16.mxu0 0
    %635 = vmatpush1.bf16.xpose.msra.mxu0 0
    %636 = vmatprep.subr.bf16.mxu0 0
    %637 = vmatpush1.bf16.xpose.msra.mxu0 %v620
    %638 = vmatprep.subr.bf16.mxu0 0
    %639 = vmatpush2.bf16.xpose.msra.mxu0 0
    %640 = vmatprep.subr.bf16.mxu0 0
    %641 = vmatpush2.bf16.xpose.msra.mxu0 0
    %642 = vmatprep.subr.bf16.mxu0 0
    %643 = vmatpush2.bf16.xpose.msra.mxu0 0
    %644 = vmatprep.subr.bf16.mxu0 0
    %645 = vmatpush2.bf16.xpose.msra.mxu0 0
    %646 = vmatprep.subr.bf16.mxu0 0
    %647 = vmatpush2.bf16.xpose.msra.mxu0 0
    %648 = vmatprep.subr.bf16.mxu0 0
    %649 = vmatpush2.bf16.xpose.msra.mxu0 0
    %650 = vmatprep.subr.bf16.mxu0 0
    %651 = vmatpush2.bf16.xpose.msra.mxu0 0
    %652 = vmatprep.subr.bf16.mxu0 0
    %653 = vmatpush2.bf16.xpose.msra.mxu0 0
    %654 = vmatprep.mubr.bf16.mxu0 0
    %655 = vmatmul.mubr.bf16.gmra.mxu0 %v617
    %v656 = vpop.f32.mrf.mxu0
    %v657 = vadd.f32 0.0, %v656
    %v658 = vpop.f32.mrf.mxu0
    %v659 = vpop.f32.mrf.mxu0
    %v660 = vpop.f32.mrf.mxu0
    %661 = vdwg.mxu0
    %v662 = vsel %vm429, %v607, -inf
    %v663 = vsel %vm429, %v657, -inf
    %v664 = vsel %vm332, %v662, -inf
    %665 = vmax.xlane.f32.xlu0 %v664
    %v666 = vpop.xlane.xlu0 %665
    %v667 = vsel %vm332, %v663, -inf
    %668 = vmax.xlane.f32.xlu0 %v667
    %v669 = vpop.xlane.xlu0 %668
    %v670 = vsub.f32 -inf, %v666
    %v671 = vsub.f32 -inf, %v669
    %v672 = vmul.f32 %v670, 1.442695
    %v673 = vpow.pop %v672
    %v674 = vmul.f32 %v671, 1.442695
    %v675 = vpow.pop %v674
    %v676 = vsub.f32 %v662, %v666
    %v677 = vsub.f32 %v663, %v669
    %v678 = vmul.f32 %v676, 1.442695
    %v679 = vpow.pop %v678
    %v680 = vmul.f32 %v677, 1.442695
    %v681 = vpow.pop %v680
    %v682 = vmul.f32 %v673, 0.0
    %v683 = vmul.f32 %v675, 0.0
    %v684 = vsel %vm332, %v679, 0.0
    %685 = vadd.xlane.f32.xlu0 %v684
    %v686 = vpop.xlane.xlu0 %685
    %v687 = vsel %vm332, %v681, 0.0
    %688 = vadd.xlane.f32.xlu0 %v687
    %v689 = vpop.xlane.xlu0 %688
    %v690 = vadd.f32 %v682, %v686
    %v691 = vadd.f32 %v683, %v689
    %v692 = vpack.c.bf16 %v679, %v679
    %v693 = vpack.c.bf16 %v681, %v681
    %694 = vrot.lane.b32.xlu0 %v328, 120
    %v695 = vpop.permute.xlu0 %694
    %v697 = vsel %vm332, %v692, 0
    %v700 = vsel %vm465, %v695, 0
    %702 = vmatprep.subr.bf16.mxu0 0
    %703 = vmatpush1.bf16.msra.mxu0 0
    %704 = vmatprep.subr.bf16.mxu0 0
    %705 = vmatpush1.bf16.msra.mxu0 0
    %706 = vmatprep.subr.bf16.mxu0 0
    %707 = vmatpush1.bf16.msra.mxu0 0
    %708 = vmatprep.subr.bf16.mxu0 0
    %709 = vmatpush1.bf16.msra.mxu0 0
    %710 = vmatprep.subr.bf16.mxu0 0
    %711 = vmatpush1.bf16.msra.mxu0 0
    %712 = vmatprep.subr.bf16.mxu0 0
    %713 = vmatpush1.bf16.msra.mxu0 0
    %714 = vmatprep.subr.bf16.mxu0 0
    %715 = vmatpush1.bf16.msra.mxu0 0
    %716 = vmatprep.subr.bf16.mxu0 0
    %717 = vmatpush1.bf16.msra.mxu0 %v700
    %718 = vmatprep.subr.bf16.mxu0 0
    %719 = vmatpush2.bf16.msra.mxu0 0
    %720 = vmatprep.subr.bf16.mxu0 0
    %721 = vmatpush2.bf16.msra.mxu0 0
    %722 = vmatprep.subr.bf16.mxu0 0
    %723 = vmatpush2.bf16.msra.mxu0 0
    %724 = vmatprep.subr.bf16.mxu0 0
    %725 = vmatpush2.bf16.msra.mxu0 0
    %726 = vmatprep.subr.bf16.mxu0 0
    %727 = vmatpush2.bf16.msra.mxu0 0
    %728 = vmatprep.subr.bf16.mxu0 0
    %729 = vmatpush2.bf16.msra.mxu0 0
    %730 = vmatprep.subr.bf16.mxu0 0
    %731 = vmatpush2.bf16.msra.mxu0 0
    %732 = vmatprep.subr.bf16.mxu0 0
    %733 = vmatpush2.bf16.msra.mxu0 0
    %734 = vmatprep.mubr.bf16.mxu0 0
    %735 = vmatmul.mubr.bf16.gmra.mxu0 %v697
    %v736 = vpop.f32.mrf.mxu0
    %v737 = vadd.f32 0.0, %v736
    %v738 = vpop.f32.mrf.mxu0
    %v739 = vpop.f32.mrf.mxu0
    %v740 = vpop.f32.mrf.mxu0
    %741 = vdwg.mxu0
    %742 = vrot.lane.b32.xlu0 %v329, 120
    %v743 = vpop.permute.xlu0 %742
    %v745 = vsel %vm332, %v693, 0
    %v748 = vsel %vm465, %v743, 0
    %750 = vmatprep.subr.bf16.mxu0 0
    %751 = vmatpush1.bf16.msra.mxu0 0
    %752 = vmatprep.subr.bf16.mxu0 0
    %753 = vmatpush1.bf16.msra.mxu0 0
    %754 = vmatprep.subr.bf16.mxu0 0
    %755 = vmatpush1.bf16.msra.mxu0 0
    %756 = vmatprep.subr.bf16.mxu0 0
    %757 = vmatpush1.bf16.msra.mxu0 0
    %758 = vmatprep.subr.bf16.mxu0 0
    %759 = vmatpush1.bf16.msra.mxu0 0
    %760 = vmatprep.subr.bf16.mxu0 0
    %761 = vmatpush1.bf16.msra.mxu0 0
    %762 = vmatprep.subr.bf16.mxu0 0
    %763 = vmatpush1.bf16.msra.mxu0 0
    %764 = vmatprep.subr.bf16.mxu0 0
    %765 = vmatpush1.bf16.msra.mxu0 %v748
    %766 = vmatprep.subr.bf16.mxu0 0
    %767 = vmatpush2.bf16.msra.mxu0 0
    %768 = vmatprep.subr.bf16.mxu0 0
    %769 = vmatpush2.bf16.msra.mxu0 0
    %770 = vmatprep.subr.bf16.mxu0 0
    %771 = vmatpush2.bf16.msra.mxu0 0
    %772 = vmatprep.subr.bf16.mxu0 0
    %773 = vmatpush2.bf16.msra.mxu0 0
    %774 = vmatprep.subr.bf16.mxu0 0
    %775 = vmatpush2.bf16.msra.mxu0 0
    %776 = vmatprep.subr.bf16.mxu0 0
    %777 = vmatpush2.bf16.msra.mxu0 0
    %778 = vmatprep.subr.bf16.mxu0 0
    %779 = vmatpush2.bf16.msra.mxu0 0
    %780 = vmatprep.subr.bf16.mxu0 0
    %781 = vmatpush2.bf16.msra.mxu0 0
    %782 = vmatprep.mubr.bf16.mxu0 0
    %783 = vmatmul.mubr.bf16.gmra.mxu0 %v745
    %v784 = vpop.f32.mrf.mxu0
    %v785 = vadd.f32 0.0, %v784
    %v786 = vpop.f32.mrf.mxu0
    %v787 = vpop.f32.mrf.mxu0
    %v788 = vpop.f32.mrf.mxu0
    %789 = vdwg.mxu0
    %v790 = vadd.f32 %v682, %v737
    %v791 = vadd.f32 %v683, %v785
    %v792 = vrcp.pop %v690
    %v793 = vrcp.pop %v691
    %v794 = vmul.f32 %v790, %v792
    %v795 = vmul.f32 %v791, %v793
    %v796 = vpack.c.bf16 %v795, %v794
    %v798 = vsel %vm332, %v796, 0
    %v801 = vsel %vm465, %v312, 0
    %803 = vmatprep.subr.bf16.mxu0 0
    %804 = vmatpush1.bf16.msra.mxu0 0
    %805 = vmatprep.subr.bf16.mxu0 0
    %806 = vmatpush1.bf16.msra.mxu0 0
    %807 = vmatprep.subr.bf16.mxu0 0
    %808 = vmatpush1.bf16.msra.mxu0 0
    %809 = vmatprep.subr.bf16.mxu0 0
    %810 = vmatpush1.bf16.msra.mxu0 0
    %811 = vmatprep.subr.bf16.mxu0 0
    %812 = vmatpush1.bf16.msra.mxu0 0
    %813 = vmatprep.subr.bf16.mxu0 0
    %814 = vmatpush1.bf16.msra.mxu0 0
    %815 = vmatprep.subr.bf16.mxu0 0
    %816 = vmatpush1.bf16.msra.mxu0 0
    %817 = vmatprep.subr.bf16.mxu0 0
    %818 = vmatpush1.bf16.msra.mxu0 %v801
    %819 = vmatprep.subr.bf16.mxu0 0
    %820 = vmatpush2.bf16.msra.mxu0 0
    %821 = vmatprep.subr.bf16.mxu0 0
    %822 = vmatpush2.bf16.msra.mxu0 0
    %823 = vmatprep.subr.bf16.mxu0 0
    %824 = vmatpush2.bf16.msra.mxu0 0
    %825 = vmatprep.subr.bf16.mxu0 0
    %826 = vmatpush2.bf16.msra.mxu0 0
    %827 = vmatprep.subr.bf16.mxu0 0
    %828 = vmatpush2.bf16.msra.mxu0 0
    %829 = vmatprep.subr.bf16.mxu0 0
    %830 = vmatpush2.bf16.msra.mxu0 0
    %831 = vmatprep.subr.bf16.mxu0 0
    %832 = vmatpush2.bf16.msra.mxu0 0
    %833 = vmatprep.subr.bf16.mxu0 0
    %834 = vmatpush2.bf16.msra.mxu0 0
    %835 = vmatprep.mubr.bf16.mxu0 0
    %836 = vmatmul.mubr.bf16.gmra.mxu0 %v798
    %v837 = vpop.f32.mrf.mxu0
    %v838 = vadd.f32 0.0, %v837
    %v839 = vpop.f32.mrf.mxu0
    %v840 = vpop.f32.mrf.mxu0
    %v841 = vadd.f32 0.0, %v840
    %v842 = vpop.f32.mrf.mxu0
    %843 = vdwg.mxu0
    %v845 = vsel %vm332, %v561, 0
    %v848 = vsel %vm465, %v311, 0
    %850 = vmatprep.subr.bf16.mxu0 0
    %851 = vmatpush1.bf16.msra.mxu0 0
    %852 = vmatprep.subr.bf16.mxu0 0
    %853 = vmatpush1.bf16.msra.mxu0 0
    %854 = vmatprep.subr.bf16.mxu0 0
    %855 = vmatpush1.bf16.msra.mxu0 0
    %856 = vmatprep.subr.bf16.mxu0 0
    %857 = vmatpush1.bf16.msra.mxu0 0
    %858 = vmatprep.subr.bf16.mxu0 0
    %859 = vmatpush1.bf16.msra.mxu0 0
    %860 = vmatprep.subr.bf16.mxu0 0
    %861 = vmatpush1.bf16.msra.mxu0 0
    %862 = vmatprep.subr.bf16.mxu0 0
    %863 = vmatpush1.bf16.msra.mxu0 0
    %864 = vmatprep.subr.bf16.mxu0 0
    %865 = vmatpush1.bf16.msra.mxu0 %v848
    %866 = vmatprep.subr.bf16.mxu0 0
    %867 = vmatpush2.bf16.msra.mxu0 0
    %868 = vmatprep.subr.bf16.mxu0 0
    %869 = vmatpush2.bf16.msra.mxu0 0
    %870 = vmatprep.subr.bf16.mxu0 0
    %871 = vmatpush2.bf16.msra.mxu0 0
    %872 = vmatprep.subr.bf16.mxu0 0
    %873 = vmatpush2.bf16.msra.mxu0 0
    %874 = vmatprep.subr.bf16.mxu0 0
    %875 = vmatpush2.bf16.msra.mxu0 0
    %876 = vmatprep.subr.bf16.mxu0 0
    %877 = vmatpush2.bf16.msra.mxu0 0
    %878 = vmatprep.subr.bf16.mxu0 0
    %879 = vmatpush2.bf16.msra.mxu0 0
    %880 = vmatprep.subr.bf16.mxu0 0
    %881 = vmatpush2.bf16.msra.mxu0 0
    %882 = vmatprep.mubr.bf16.mxu0 0
    %883 = vmatmul.mubr.bf16.gmra.mxu0 %v845
    %v884 = vpop.f32.mrf.mxu0
    %v885 = vadd.f32 %v838, %v884
    %v886 = vpop.f32.mrf.mxu0
    %v887 = vpop.f32.mrf.mxu0
    %v888 = vadd.f32 %v841, %v887
    %v889 = vpop.f32.mrf.mxu0
    %890 = vdwg.mxu0
    %891 = vrot.lane.b32.xlu0 %v318, 112
    %v892 = vpop.permute.xlu0 %891
    %893 = vrot.lane.b32.xlu0 %v323, 112
    %v894 = vpop.permute.xlu0 %893
    %v896 = vsel %vm332, %v892, 0
    %v899 = vsel %vm332, %v894, 0
    %901 = vmatprep.subr.bf16.mxu0 0
    %902 = vmatpush1.bf16.xpose.msra.mxu0 0
    %903 = vmatprep.subr.bf16.mxu0 0
    %904 = vmatpush1.bf16.xpose.msra.mxu0 0
    %905 = vmatprep.subr.bf16.mxu0 0
    %906 = vmatpush1.bf16.xpose.msra.mxu0 0
    %907 = vmatprep.subr.bf16.mxu0 0
    %908 = vmatpush1.bf16.xpose.msra.mxu0 0
    %909 = vmatprep.subr.bf16.mxu0 0
    %910 = vmatpush1.bf16.xpose.msra.mxu0 0
    %911 = vmatprep.subr.bf16.mxu0 0
    %912 = vmatpush1.bf16.xpose.msra.mxu0 0
    %913 = vmatprep.subr.bf16.mxu0 0
    %914 = vmatpush1.bf16.xpose.msra.mxu0 0
    %915 = vmatprep.subr.bf16.mxu0 0
    %916 = vmatpush1.bf16.xpose.msra.mxu0 %v899
    %917 = vmatprep.subr.bf16.mxu0 0
    %918 = vmatpush2.bf16.xpose.msra.mxu0 0
    %919 = vmatprep.subr.bf16.mxu0 0
    %920 = vmatpush2.bf16.xpose.msra.mxu0 0
    %921 = vmatprep.subr.bf16.mxu0 0
    %922 = vmatpush2.bf16.xpose.msra.mxu0 0
    %923 = vmatprep.subr.bf16.mxu0 0
    %924 = vmatpush2.bf16.xpose.msra.mxu0 0
    %925 = vmatprep.subr.bf16.mxu0 0
    %926 = vmatpush2.bf16.xpose.msra.mxu0 0
    %927 = vmatprep.subr.bf16.mxu0 0
    %928 = vmatpush2.bf16.xpose.msra.mxu0 0
    %929 = vmatprep.subr.bf16.mxu0 0
    %930 = vmatpush2.bf16.xpose.msra.mxu0 0
    %931 = vmatprep.subr.bf16.mxu0 0
    %932 = vmatpush2.bf16.xpose.msra.mxu0 0
    %933 = vmatprep.mubr.bf16.mxu0 0
    %934 = vmatmul.mubr.bf16.gmra.mxu0 %v896
    %v935 = vpop.f32.mrf.mxu0
    %v936 = vadd.f32 0.0, %v935
    %v937 = vpop.f32.mrf.mxu0
    %v938 = vpop.f32.mrf.mxu0
    %v939 = vpop.f32.mrf.mxu0
    %940 = vdwg.mxu0
    %941 = vrot.lane.b32.xlu0 %v319, 112
    %v942 = vpop.permute.xlu0 %941
    %943 = vrot.lane.b32.xlu0 %v324, 112
    %v944 = vpop.permute.xlu0 %943
    %v946 = vsel %vm332, %v942, 0
    %v949 = vsel %vm332, %v944, 0
    %951 = vmatprep.subr.bf16.mxu0 0
    %952 = vmatpush1.bf16.xpose.msra.mxu0 0
    %953 = vmatprep.subr.bf16.mxu0 0
    %954 = vmatpush1.bf16.xpose.msra.mxu0 0
    %955 = vmatprep.subr.bf16.mxu0 0
    %956 = vmatpush1.bf16.xpose.msra.mxu0 0
    %957 = vmatprep.subr.bf16.mxu0 0
    %958 = vmatpush1.bf16.xpose.msra.mxu0 0
    %959 = vmatprep.subr.bf16.mxu0 0
    %960 = vmatpush1.bf16.xpose.msra.mxu0 0
    %961 = vmatprep.subr.bf16.mxu0 0
    %962 = vmatpush1.bf16.xpose.msra.mxu0 0
    %963 = vmatprep.subr.bf16.mxu0 0
    %964 = vmatpush1.bf16.xpose.msra.mxu0 0
    %965 = vmatprep.subr.bf16.mxu0 0
    %966 = vmatpush1.bf16.xpose.msra.mxu0 %v949
    %967 = vmatprep.subr.bf16.mxu0 0
    %968 = vmatpush2.bf16.xpose.msra.mxu0 0
    %969 = vmatprep.subr.bf16.mxu0 0
    %970 = vmatpush2.bf16.xpose.msra.mxu0 0
    %971 = vmatprep.subr.bf16.mxu0 0
    %972 = vmatpush2.bf16.xpose.msra.mxu0 0
    %973 = vmatprep.subr.bf16.mxu0 0
    %974 = vmatpush2.bf16.xpose.msra.mxu0 0
    %975 = vmatprep.subr.bf16.mxu0 0
    %976 = vmatpush2.bf16.xpose.msra.mxu0 0
    %977 = vmatprep.subr.bf16.mxu0 0
    %978 = vmatpush2.bf16.xpose.msra.mxu0 0
    %979 = vmatprep.subr.bf16.mxu0 0
    %980 = vmatpush2.bf16.xpose.msra.mxu0 0
    %981 = vmatprep.subr.bf16.mxu0 0
    %982 = vmatpush2.bf16.xpose.msra.mxu0 0
    %983 = vmatprep.mubr.bf16.mxu0 0
    %984 = vmatmul.mubr.bf16.gmra.mxu0 %v946
    %v985 = vpop.f32.mrf.mxu0
    %v986 = vadd.f32 0.0, %v985
    %v987 = vpop.f32.mrf.mxu0
    %v988 = vpop.f32.mrf.mxu0
    %v989 = vpop.f32.mrf.mxu0
    %990 = vdwg.mxu0
    %v991 = vsel %vm429, %v936, -inf
    %v992 = vsel %vm429, %v986, -inf
    %v993 = vsel %vm332, %v991, -inf
    %994 = vmax.xlane.f32.xlu0 %v993
    %v995 = vpop.xlane.xlu0 %994
    %v996 = vsel %vm332, %v992, -inf
    %997 = vmax.xlane.f32.xlu0 %v996
    %v998 = vpop.xlane.xlu0 %997
    %v999 = vsub.f32 -inf, %v995
    %v1000 = vsub.f32 -inf, %v998
    %v1001 = vmul.f32 %v999, 1.442695
    %v1002 = vpow.pop %v1001
    %v1003 = vmul.f32 %v1000, 1.442695
    %v1004 = vpow.pop %v1003
    %v1005 = vsub.f32 %v991, %v995
    %v1006 = vsub.f32 %v992, %v998
    %v1007 = vmul.f32 %v1005, 1.442695
    %v1008 = vpow.pop %v1007
    %v1009 = vmul.f32 %v1006, 1.442695
    %v1010 = vpow.pop %v1009
    %v1011 = vmul.f32 %v1002, 0.0
    %v1012 = vmul.f32 %v1004, 0.0
    %v1013 = vsel %vm332, %v1008, 0.0
    %1014 = vadd.xlane.f32.xlu0 %v1013
    %v1015 = vpop.xlane.xlu0 %1014
    %v1016 = vsel %vm332, %v1010, 0.0
    %1017 = vadd.xlane.f32.xlu0 %v1016
    %v1018 = vpop.xlane.xlu0 %1017
    %v1019 = vadd.f32 %v1011, %v1015
    %v1020 = vadd.f32 %v1012, %v1018
    %v1021 = vpack.c.bf16 %v1008, %v1008
    %v1022 = vpack.c.bf16 %v1010, %v1010
    %1023 = vrot.lane.b32.xlu0 %v328, 112
    %v1024 = vpop.permute.xlu0 %1023
    %v1026 = vsel %vm332, %v1021, 0
    %v1029 = vsel %vm465, %v1024, 0
    %1031 = vmatprep.subr.bf16.mxu0 0
    %1032 = vmatpush1.bf16.msra.mxu0 0
    %1033 = vmatprep.subr.bf16.mxu0 0
    %1034 = vmatpush1.bf16.msra.mxu0 0
    %1035 = vmatprep.subr.bf16.mxu0 0
    %1036 = vmatpush1.bf16.msra.mxu0 0
    %1037 = vmatprep.subr.bf16.mxu0 0
    %1038 = vmatpush1.bf16.msra.mxu0 0
    %1039 = vmatprep.subr.bf16.mxu0 0
    %1040 = vmatpush1.bf16.msra.mxu0 0
    %1041 = vmatprep.subr.bf16.mxu0 0
    %1042 = vmatpush1.bf16.msra.mxu0 0
    %1043 = vmatprep.subr.bf16.mxu0 0
    %1044 = vmatpush1.bf16.msra.mxu0 0
    %1045 = vmatprep.subr.bf16.mxu0 0
    %1046 = vmatpush1.bf16.msra.mxu0 %v1029
    %1047 = vmatprep.subr.bf16.mxu0 0
    %1048 = vmatpush2.bf16.msra.mxu0 0
    %1049 = vmatprep.subr.bf16.mxu0 0
    %1050 = vmatpush2.bf16.msra.mxu0 0
    %1051 = vmatprep.subr.bf16.mxu0 0
    %1052 = vmatpush2.bf16.msra.mxu0 0
    %1053 = vmatprep.subr.bf16.mxu0 0
    %1054 = vmatpush2.bf16.msra.mxu0 0
    %1055 = vmatprep.subr.bf16.mxu0 0
    %1056 = vmatpush2.bf16.msra.mxu0 0
    %1057 = vmatprep.subr.bf16.mxu0 0
    %1058 = vmatpush2.bf16.msra.mxu0 0
    %1059 = vmatprep.subr.bf16.mxu0 0
    %1060 = vmatpush2.bf16.msra.mxu0 0
    %1061 = vmatprep.subr.bf16.mxu0 0
    %1062 = vmatpush2.bf16.msra.mxu0 0
    %1063 = vmatprep.mubr.bf16.mxu0 0
    %1064 = vmatmul.mubr.bf16.gmra.mxu0 %v1026
    %v1065 = vpop.f32.mrf.mxu0
    %v1066 = vadd.f32 0.0, %v1065
    %v1067 = vpop.f32.mrf.mxu0
    %v1068 = vpop.f32.mrf.mxu0
    %v1069 = vpop.f32.mrf.mxu0
    %1070 = vdwg.mxu0
    %1071 = vrot.lane.b32.xlu0 %v329, 112
    %v1072 = vpop.permute.xlu0 %1071
    %v1074 = vsel %vm332, %v1022, 0
    %v1077 = vsel %vm465, %v1072, 0
    %1079 = vmatprep.subr.bf16.mxu0 0
    %1080 = vmatpush1.bf16.msra.mxu0 0
    %1081 = vmatprep.subr.bf16.mxu0 0
    %1082 = vmatpush1.bf16.msra.mxu0 0
    %1083 = vmatprep.subr.bf16.mxu0 0
    %1084 = vmatpush1.bf16.msra.mxu0 0
    %1085 = vmatprep.subr.bf16.mxu0 0
    %1086 = vmatpush1.bf16.msra.mxu0 0
    %1087 = vmatprep.subr.bf16.mxu0 0
    %1088 = vmatpush1.bf16.msra.mxu0 0
    %1089 = vmatprep.subr.bf16.mxu0 0
    %1090 = vmatpush1.bf16.msra.mxu0 0
    %1091 = vmatprep.subr.bf16.mxu0 0
    %1092 = vmatpush1.bf16.msra.mxu0 0
    %1093 = vmatprep.subr.bf16.mxu0 0
    %1094 = vmatpush1.bf16.msra.mxu0 %v1077
    %1095 = vmatprep.subr.bf16.mxu0 0
    %1096 = vmatpush2.bf16.msra.mxu0 0
    %1097 = vmatprep.subr.bf16.mxu0 0
    %1098 = vmatpush2.bf16.msra.mxu0 0
    %1099 = vmatprep.subr.bf16.mxu0 0
    %1100 = vmatpush2.bf16.msra.mxu0 0
    %1101 = vmatprep.subr.bf16.mxu0 0
    %1102 = vmatpush2.bf16.msra.mxu0 0
    %1103 = vmatprep.subr.bf16.mxu0 0
    %1104 = vmatpush2.bf16.msra.mxu0 0
    %1105 = vmatprep.subr.bf16.mxu0 0
    %1106 = vmatpush2.bf16.msra.mxu0 0
    %1107 = vmatprep.subr.bf16.mxu0 0
    %1108 = vmatpush2.bf16.msra.mxu0 0
    %1109 = vmatprep.subr.bf16.mxu0 0
    %1110 = vmatpush2.bf16.msra.mxu0 0
    %1111 = vmatprep.mubr.bf16.mxu0 0
    %1112 = vmatmul.mubr.bf16.gmra.mxu0 %v1074
    %v1113 = vpop.f32.mrf.mxu0
    %v1114 = vadd.f32 0.0, %v1113
    %v1115 = vpop.f32.mrf.mxu0
    %v1116 = vpop.f32.mrf.mxu0
    %v1117 = vpop.f32.mrf.mxu0
    %1118 = vdwg.mxu0
    %v1119 = vadd.f32 %v1011, %v1066
    %v1120 = vadd.f32 %v1012, %v1114
    %v1121 = vrcp.pop %v1019
    %v1122 = vrcp.pop %v1020
    %v1123 = vmul.f32 %v1119, %v1121
    %v1124 = vmul.f32 %v1120, %v1122
    %v1125 = vpack.c.bf16 %v1124, %v1123
    %v1127 = vsel %vm332, %v1125, 0
    %v1130 = vsel %vm465, %v313, 0
    %1132 = vmatprep.subr.bf16.mxu0 0
    %1133 = vmatpush1.bf16.msra.mxu0 0
    %1134 = vmatprep.subr.bf16.mxu0 0
    %1135 = vmatpush1.bf16.msra.mxu0 0
    %1136 = vmatprep.subr.bf16.mxu0 0
    %1137 = vmatpush1.bf16.msra.mxu0 0
    %1138 = vmatprep.subr.bf16.mxu0 0
    %1139 = vmatpush1.bf16.msra.mxu0 0
    %1140 = vmatprep.subr.bf16.mxu0 0
    %1141 = vmatpush1.bf16.msra.mxu0 0
    %1142 = vmatprep.subr.bf16.mxu0 0
    %1143 = vmatpush1.bf16.msra.mxu0 0
    %1144 = vmatprep.subr.bf16.mxu0 0
    %1145 = vmatpush1.bf16.msra.mxu0 0
    %1146 = vmatprep.subr.bf16.mxu0 0
    %1147 = vmatpush1.bf16.msra.mxu0 %v1130
    %1148 = vmatprep.subr.bf16.mxu0 0
    %1149 = vmatpush2.bf16.msra.mxu0 0
    %1150 = vmatprep.subr.bf16.mxu0 0
    %1151 = vmatpush2.bf16.msra.mxu0 0
    %1152 = vmatprep.subr.bf16.mxu0 0
    %1153 = vmatpush2.bf16.msra.mxu0 0
    %1154 = vmatprep.subr.bf16.mxu0 0
    %1155 = vmatpush2.bf16.msra.mxu0 0
    %1156 = vmatprep.subr.bf16.mxu0 0
    %1157 = vmatpush2.bf16.msra.mxu0 0
    %1158 = vmatprep.subr.bf16.mxu0 0
    %1159 = vmatpush2.bf16.msra.mxu0 0
    %1160 = vmatprep.subr.bf16.mxu0 0
    %1161 = vmatpush2.bf16.msra.mxu0 0
    %1162 = vmatprep.subr.bf16.mxu0 0
    %1163 = vmatpush2.bf16.msra.mxu0 0
    %1164 = vmatprep.mubr.bf16.mxu0 0
    %1165 = vmatmul.mubr.bf16.gmra.mxu0 %v1127
    %v1166 = vpop.f32.mrf.mxu0
    %v1167 = vadd.f32 0.0, %v1166
    %v1168 = vpop.f32.mrf.mxu0
    %v1169 = vpop.f32.mrf.mxu0
    %v1170 = vadd.f32 0.0, %v1169
    %v1171 = vpop.f32.mrf.mxu0
    %1172 = vdwg.mxu0
    %v1173 = vadd.f32 %v885, %v1167
    %v1174 = vadd.f32 %v888, %v1170
    %1175 = vrot.lane.b32.xlu0 %v318, 104
    %v1176 = vpop.permute.xlu0 %1175
    %1177 = vrot.lane.b32.xlu0 %v323, 104
    %v1178 = vpop.permute.xlu0 %1177
    %v1180 = vsel %vm332, %v1176, 0
    %v1183 = vsel %vm332, %v1178, 0
    %1185 = vmatprep.subr.bf16.mxu0 0
    %1186 = vmatpush1.bf16.xpose.msra.mxu0 0
    %1187 = vmatprep.subr.bf16.mxu0 0
    %1188 = vmatpush1.bf16.xpose.msra.mxu0 0
    %1189 = vmatprep.subr.bf16.mxu0 0
    %1190 = vmatpush1.bf16.xpose.msra.mxu0 0
    %1191 = vmatprep.subr.bf16.mxu0 0
    %1192 = vmatpush1.bf16.xpose.msra.mxu0 0
    %1193 = vmatprep.subr.bf16.mxu0 0
    %1194 = vmatpush1.bf16.xpose.msra.mxu0 0
    %1195 = vmatprep.subr.bf16.mxu0 0
    %1196 = vmatpush1.bf16.xpose.msra.mxu0 0
    %1197 = vmatprep.subr.bf16.mxu0 0
    %1198 = vmatpush1.bf16.xpose.msra.mxu0 0
    %1199 = vmatprep.subr.bf16.mxu0 0
    %1200 = vmatpush1.bf16.xpose.msra.mxu0 %v1183
    %1201 = vmatprep.subr.bf16.mxu0 0
    %1202 = vmatpush2.bf16.xpose.msra.mxu0 0
    %1203 = vmatprep.subr.bf16.mxu0 0
    %1204 = vmatpush2.bf16.xpose.msra.mxu0 0
    %1205 = vmatprep.subr.bf16.mxu0 0
    %1206 = vmatpush2.bf16.xpose.msra.mxu0 0
    %1207 = vmatprep.subr.bf16.mxu0 0
    %1208 = vmatpush2.bf16.xpose.msra.mxu0 0
    %1209 = vmatprep.subr.bf16.mxu0 0
    %1210 = vmatpush2.bf16.xpose.msra.mxu0 0
    %1211 = vmatprep.subr.bf16.mxu0 0
    %1212 = vmatpush2.bf16.xpose.msra.mxu0 0
    %1213 = vmatprep.subr.bf16.mxu0 0
    %1214 = vmatpush2.bf16.xpose.msra.mxu0 0
    %1215 = vmatprep.subr.bf16.mxu0 0
    %1216 = vmatpush2.bf16.xpose.msra.mxu0 0
    %1217 = vmatprep.mubr.bf16.mxu0 0
    %1218 = vmatmul.mubr.bf16.gmra.mxu0 %v1180
    %v1219 = vpop.f32.mrf.mxu0
    %v1220 = vadd.f32 0.0, %v1219
    %v1221 = vpop.f32.mrf.mxu0
    %v1222 = vpop.f32.mrf.mxu0
    %v1223 = vpop.f32.mrf.mxu0
    %1224 = vdwg.mxu0
    %1225 = vrot.lane.b32.xlu0 %v319, 104
    %v1226 = vpop.permute.xlu0 %1225
    %1227 = vrot.lane.b32.xlu0 %v324, 104
    %v1228 = vpop.permute.xlu0 %1227
    %v1230 = vsel %vm332, %v1226, 0
    %v1233 = vsel %vm332, %v1228, 0
    %1235 = vmatprep.subr.bf16.mxu0 0
    %1236 = vmatpush1.bf16.xpose.msra.mxu0 0
    %1237 = vmatprep.subr.bf16.mxu0 0
    %1238 = vmatpush1.bf16.xpose.msra.mxu0 0
    %1239 = vmatprep.subr.bf16.mxu0 0
    %1240 = vmatpush1.bf16.xpose.msra.mxu0 0
    %1241 = vmatprep.subr.bf16.mxu0 0
    %1242 = vmatpush1.bf16.xpose.msra.mxu0 0
    %1243 = vmatprep.subr.bf16.mxu0 0
    %1244 = vmatpush1.bf16.xpose.msra.mxu0 0
    %1245 = vmatprep.subr.bf16.mxu0 0
    %1246 = vmatpush1.bf16.xpose.msra.mxu0 0
    %1247 = vmatprep.subr.bf16.mxu0 0
    %1248 = vmatpush1.bf16.xpose.msra.mxu0 0
    %1249 = vmatprep.subr.bf16.mxu0 0
    %1250 = vmatpush1.bf16.xpose.msra.mxu0 %v1233
    %1251 = vmatprep.subr.bf16.mxu0 0
    %1252 = vmatpush2.bf16.xpose.msra.mxu0 0
    %1253 = vmatprep.subr.bf16.mxu0 0
    %1254 = vmatpush2.bf16.xpose.msra.mxu0 0
    %1255 = vmatprep.subr.bf16.mxu0 0
    %1256 = vmatpush2.bf16.xpose.msra.mxu0 0
    %1257 = vmatprep.subr.bf16.mxu0 0
    %1258 = vmatpush2.bf16.xpose.msra.mxu0 0
    %1259 = vmatprep.subr.bf16.mxu0 0
    %1260 = vmatpush2.bf16.xpose.msra.mxu0 0
    %1261 = vmatprep.subr.bf16.mxu0 0
    %1262 = vmatpush2.bf16.xpose.msra.mxu0 0
    %1263 = vmatprep.subr.bf16.mxu0 0
    %1264 = vmatpush2.bf16.xpose.msra.mxu0 0
    %1265 = vmatprep.subr.bf16.mxu0 0
    %1266 = vmatpush2.bf16.xpose.msra.mxu0 0
    %1267 = vmatprep.mubr.bf16.mxu0 0
    %1268 = vmatmul.mubr.bf16.gmra.mxu0 %v1230
    %v1269 = vpop.f32.mrf.mxu0
    %v1270 = vadd.f32 0.0, %v1269
    %v1271 = vpop.f32.mrf.mxu0
    %v1272 = vpop.f32.mrf.mxu0
    %v1273 = vpop.f32.mrf.mxu0
    %1274 = vdwg.mxu0
    %v1275 = vsel %vm429, %v1220, -inf
    %v1276 = vsel %vm429, %v1270, -inf
    %v1277 = vsel %vm332, %v1275, -inf
    %1278 = vmax.xlane.f32.xlu0 %v1277
    %v1279 = vpop.xlane.xlu0 %1278
    %v1280 = vsel %vm332, %v1276, -inf
    %1281 = vmax.xlane.f32.xlu0 %v1280
    %v1282 = vpop.xlane.xlu0 %1281
    %v1283 = vsub.f32 -inf, %v1279
    %v1284 = vsub.f32 -inf, %v1282
    %v1285 = vmul.f32 %v1283, 1.442695
    %v1286 = vpow.pop %v1285
    %v1287 = vmul.f32 %v1284, 1.442695
    %v1288 = vpow.pop %v1287
    %v1289 = vsub.f32 %v1275, %v1279
    %v1290 = vsub.f32 %v1276, %v1282
    %v1291 = vmul.f32 %v1289, 1.442695
    %v1292 = vpow.pop %v1291
    %v1293 = vmul.f32 %v1290, 1.442695
    %v1294 = vpow.pop %v1293
    %v1295 = vmul.f32 %v1286, 0.0
    %v1296 = vmul.f32 %v1288, 0.0
    %v1297 = vsel %vm332, %v1292, 0.0
    %1298 = vadd.xlane.f32.xlu0 %v1297
    %v1299 = vpop.xlane.xlu0 %1298
    %v1300 = vsel %vm332, %v1294, 0.0
    %1301 = vadd.xlane.f32.xlu0 %v1300
    %v1302 = vpop.xlane.xlu0 %1301
    %v1303 = vadd.f32 %v1295, %v1299
    %v1304 = vadd.f32 %v1296, %v1302
    %v1305 = vpack.c.bf16 %v1292, %v1292
    %v1306 = vpack.c.bf16 %v1294, %v1294
    %1307 = vrot.lane.b32.xlu0 %v328, 104
    %v1308 = vpop.permute.xlu0 %1307
    %v1310 = vsel %vm332, %v1305, 0
    %v1313 = vsel %vm465, %v1308, 0
    %1315 = vmatprep.subr.bf16.mxu0 0
    %1316 = vmatpush1.bf16.msra.mxu0 0
    %1317 = vmatprep.subr.bf16.mxu0 0
    %1318 = vmatpush1.bf16.msra.mxu0 0
    %1319 = vmatprep.subr.bf16.mxu0 0
    %1320 = vmatpush1.bf16.msra.mxu0 0
    %1321 = vmatprep.subr.bf16.mxu0 0
    %1322 = vmatpush1.bf16.msra.mxu0 0
    %1323 = vmatprep.subr.bf16.mxu0 0
    %1324 = vmatpush1.bf16.msra.mxu0 0
    %1325 = vmatprep.subr.bf16.mxu0 0
    %1326 = vmatpush1.bf16.msra.mxu0 0
    %1327 = vmatprep.subr.bf16.mxu0 0
    %1328 = vmatpush1.bf16.msra.mxu0 0
    %1329 = vmatprep.subr.bf16.mxu0 0
    %1330 = vmatpush1.bf16.msra.mxu0 %v1313
    %1331 = vmatprep.subr.bf16.mxu0 0
    %1332 = vmatpush2.bf16.msra.mxu0 0
    %1333 = vmatprep.subr.bf16.mxu0 0
    %1334 = vmatpush2.bf16.msra.mxu0 0
    %1335 = vmatprep.subr.bf16.mxu0 0
    %1336 = vmatpush2.bf16.msra.mxu0 0
    %1337 = vmatprep.subr.bf16.mxu0 0
    %1338 = vmatpush2.bf16.msra.mxu0 0
    %1339 = vmatprep.subr.bf16.mxu0 0
    %1340 = vmatpush2.bf16.msra.mxu0 0
    %1341 = vmatprep.subr.bf16.mxu0 0
    %1342 = vmatpush2.bf16.msra.mxu0 0
    %1343 = vmatprep.subr.bf16.mxu0 0
    %1344 = vmatpush2.bf16.msra.mxu0 0
    %1345 = vmatprep.subr.bf16.mxu0 0
    %1346 = vmatpush2.bf16.msra.mxu0 0
    %1347 = vmatprep.mubr.bf16.mxu0 0
    %1348 = vmatmul.mubr.bf16.gmra.mxu0 %v1310
    %v1349 = vpop.f32.mrf.mxu0
    %v1350 = vadd.f32 0.0, %v1349
    %v1351 = vpop.f32.mrf.mxu0
    %v1352 = vpop.f32.mrf.mxu0
    %v1353 = vpop.f32.mrf.mxu0
    %1354 = vdwg.mxu0
    %1355 = vrot.lane.b32.xlu0 %v329, 104
    %v1356 = vpop.permute.xlu0 %1355
    %v1358 = vsel %vm332, %v1306, 0
    %v1361 = vsel %vm465, %v1356, 0
    %1363 = vmatprep.subr.bf16.mxu0 0
    %1364 = vmatpush1.bf16.msra.mxu0 0
    %1365 = vmatprep.subr.bf16.mxu0 0
    %1366 = vmatpush1.bf16.msra.mxu0 0
    %1367 = vmatprep.subr.bf16.mxu0 0
    %1368 = vmatpush1.bf16.msra.mxu0 0
    %1369 = vmatprep.subr.bf16.mxu0 0
    %1370 = vmatpush1.bf16.msra.mxu0 0
    %1371 = vmatprep.subr.bf16.mxu0 0
    %1372 = vmatpush1.bf16.msra.mxu0 0
    %1373 = vmatprep.subr.bf16.mxu0 0
    %1374 = vmatpush1.bf16.msra.mxu0 0
    %1375 = vmatprep.subr.bf16.mxu0 0
    %1376 = vmatpush1.bf16.msra.mxu0 0
    %1377 = vmatprep.subr.bf16.mxu0 0
    %1378 = vmatpush1.bf16.msra.mxu0 %v1361
    %1379 = vmatprep.subr.bf16.mxu0 0
    %1380 = vmatpush2.bf16.msra.mxu0 0
    %1381 = vmatprep.subr.bf16.mxu0 0
    %1382 = vmatpush2.bf16.msra.mxu0 0
    %1383 = vmatprep.subr.bf16.mxu0 0
    %1384 = vmatpush2.bf16.msra.mxu0 0
    %1385 = vmatprep.subr.bf16.mxu0 0
    %1386 = vmatpush2.bf16.msra.mxu0 0
    %1387 = vmatprep.subr.bf16.mxu0 0
    %1388 = vmatpush2.bf16.msra.mxu0 0
    %1389 = vmatprep.subr.bf16.mxu0 0
    %1390 = vmatpush2.bf16.msra.mxu0 0
    %1391 = vmatprep.subr.bf16.mxu0 0
    %1392 = vmatpush2.bf16.msra.mxu0 0
    %1393 = vmatprep.subr.bf16.mxu0 0
    %1394 = vmatpush2.bf16.msra.mxu0 0
    %1395 = vmatprep.mubr.bf16.mxu0 0
    %1396 = vmatmul.mubr.bf16.gmra.mxu0 %v1358
    %v1397 = vpop.f32.mrf.mxu0
    %v1398 = vadd.f32 0.0, %v1397
    %v1399 = vpop.f32.mrf.mxu0
    %v1400 = vpop.f32.mrf.mxu0
    %v1401 = vpop.f32.mrf.mxu0
    %1402 = vdwg.mxu0
    %v1403 = vadd.f32 %v1295, %v1350
    %v1404 = vadd.f32 %v1296, %v1398
    %v1405 = vrcp.pop %v1303
    %v1406 = vrcp.pop %v1304
    %v1407 = vmul.f32 %v1403, %v1405
    %v1408 = vmul.f32 %v1404, %v1406
    %v1409 = vpack.c.bf16 %v1408, %v1407
    %v1411 = vsel %vm332, %v1409, 0
    %v1414 = vsel %vm465, %v314, 0
    %1416 = vmatprep.subr.bf16.mxu0 0
    %1417 = vmatpush1.bf16.msra.mxu0 0
    %1418 = vmatprep.subr.bf16.mxu0 0
    %1419 = vmatpush1.bf16.msra.mxu0 0
    %1420 = vmatprep.subr.bf16.mxu0 0
    %1421 = vmatpush1.bf16.msra.mxu0 0
    %1422 = vmatprep.subr.bf16.mxu0 0
    %1423 = vmatpush1.bf16.msra.mxu0 0
    %1424 = vmatprep.subr.bf16.mxu0 0
    %1425 = vmatpush1.bf16.msra.mxu0 0
    %1426 = vmatprep.subr.bf16.mxu0 0
    %1427 = vmatpush1.bf16.msra.mxu0 0
    %1428 = vmatprep.subr.bf16.mxu0 0
    %1429 = vmatpush1.bf16.msra.mxu0 0
    %1430 = vmatprep.subr.bf16.mxu0 0
    %1431 = vmatpush1.bf16.msra.mxu0 %v1414
    %1432 = vmatprep.subr.bf16.mxu0 0
    %1433 = vmatpush2.bf16.msra.mxu0 0
    %1434 = vmatprep.subr.bf16.mxu0 0
    %1435 = vmatpush2.bf16.msra.mxu0 0
    %1436 = vmatprep.subr.bf16.mxu0 0
    %1437 = vmatpush2.bf16.msra.mxu0 0
    %1438 = vmatprep.subr.bf16.mxu0 0
    %1439 = vmatpush2.bf16.msra.mxu0 0
    %1440 = vmatprep.subr.bf16.mxu0 0
    %1441 = vmatpush2.bf16.msra.mxu0 0
    %1442 = vmatprep.subr.bf16.mxu0 0
    %1443 = vmatpush2.bf16.msra.mxu0 0
    %1444 = vmatprep.subr.bf16.mxu0 0
    %1445 = vmatpush2.bf16.msra.mxu0 0
    %1446 = vmatprep.subr.bf16.mxu0 0
    %1447 = vmatpush2.bf16.msra.mxu0 0
    %1448 = vmatprep.mubr.bf16.mxu0 0
    %1449 = vmatmul.mubr.bf16.gmra.mxu0 %v1411
    %v1450 = vpop.f32.mrf.mxu0
    %v1451 = vadd.f32 0.0, %v1450
    %v1452 = vpop.f32.mrf.mxu0
    %v1453 = vpop.f32.mrf.mxu0
    %v1454 = vadd.f32 0.0, %v1453
    %v1455 = vpop.f32.mrf.mxu0
    %1456 = vdwg.mxu0
    %v1457 = vadd.f32 %v1173, %v1451
    %v1458 = vadd.f32 %v1174, %v1454
    %v1459 = vadd.f32 %v83, %v1457
    %v1460 = vadd.f32 %v84, %v1458
    %v1461 = vld [vmem:[%s8] sm:$0x1]
    %v1463 = vlaneseq
    %v1464 = vshrl.u32 %v1463, 7
    %v1465 = vsub.s32 0, %v1464
    %v1466 = vrot.slane %v1461, %v1465
    %v1468 = vadd.f32 %v1459, %v1466
    %v1469 = vadd.f32 %v1460, %v1466
    %v1470 = vld [vmem:[%s9] sm:$0x1]
    %v1471 = vld [vmem:[%s10] sm:$0x1]
    %v1472 = vsel %vm89, %v1468, 0.0
    %1473 = vadd.xlane.f32.xlu0 %v1472
    %v1474 = vpop.xlane.xlu0 %1473
    %v1475 = vsel %vm89, %v1469, 0.0
    %1476 = vadd.xlane.f32.xlu0 %v1475
    %v1477 = vpop.xlane.xlu0 %1476
    %v1478 = vmul.f32 %v1474, %v96
    %v1479 = vmul.f32 %v1477, %v96
    %v1480 = vsub.f32 %v1468, %v1478
    %v1481 = vsub.f32 %v1469, %v1479
    %v1482 = vmul.f32 %v1480, %v1480
    %v1483 = vmul.f32 %v1481, %v1481
    %v1484 = vsel %vm89, %v1482, 0.0
    %1485 = vadd.xlane.f32.xlu0 %v1484
    %v1486 = vpop.xlane.xlu0 %1485
    %v1487 = vsel %vm89, %v1483, 0.0
    %1488 = vadd.xlane.f32.xlu0 %v1487
    %v1489 = vpop.xlane.xlu0 %1488
    %v1490 = vmul.f32 %v1486, %v96
    %v1491 = vmul.f32 %v1489, %v96
    %v1492 = vadd.f32 %v1490, 1e-05
    %v1493 = vadd.f32 %v1491, 1e-05
    %v1494 = vrsqrt.pop %v1492
    %v1495 = vrsqrt.pop %v1493
    %v1496 = vmul.f32 %v1480, %v1494
    %v1497 = vmul.f32 %v1481, %v1495
    %v1499 = vlaneseq
    %v1500 = vshrl.u32 %v1499, 7
    %v1501 = vsub.s32 0, %v1500
    %v1502 = vrot.slane %v1470, %v1501
    %v1504 = vmul.f32 %v1496, %v1502
    %v1505 = vmul.f32 %v1497, %v1502
    %v1507 = vlaneseq
    %v1508 = vshrl.u32 %v1507, 7
    %v1509 = vsub.s32 0, %v1508
    %v1510 = vrot.slane %v1471, %v1509
    %v1512 = vadd.f32 %v1504, %v1510
    %v1513 = vadd.f32 %v1505, %v1510
    %v1514 = vpack.c.bf16 %v1513, %v1512
    %v1515 = vld [vmem:[%s11] sm:$0xf]
    %v1516 = vld [vmem:[%s11 + $0x4] sm:$0xf]
    %v1517 = vld [vmem:[%s11 + $0x8] sm:$0xf]
    %v1518 = vld [vmem:[%s11 + $0xc] sm:$0xf]
    %v1519 = vld [vmem:[%s12] sm:$0x1]
    %v1521 = vlaneseq
    %v1522 = vshrl.u32 %v1521, 7
    %v1523 = vsub.s32 0, %v1522
    %v1524 = vrot.slane %v1519, %v1523
    %v1530 = vunpack.c.l.b16 %v1515
    %v1531 = vunpack.c.l.b16 %v1516
    %v1532 = vunpack.c.l.b16 %v1517
    %v1533 = vunpack.c.l.b16 %v1518
    %v1534 = vpack.c.b16 %v1531, %v1530
    %v1535 = vpack.c.b16 %v1533, %v1532
    %v1539 = vsel %vm89, %v1514, 0
    %1541 = vmatprep.subr.bf16.mxu0 0
    %1542 = vmatpush1.bf16.msra.mxu0 0
    %1543 = vmatprep.subr.bf16.mxu0 0
    %1544 = vmatpush1.bf16.msra.mxu0 0
    %1545 = vmatprep.subr.bf16.mxu0 0
    %1546 = vmatpush1.bf16.msra.mxu0 0
    %1547 = vmatprep.subr.bf16.mxu0 0
    %1548 = vmatpush1.bf16.msra.mxu0 0
    %1549 = vmatprep.subr.bf16.mxu0 0
    %1550 = vmatpush1.bf16.msra.mxu0 0
    %1551 = vmatprep.subr.bf16.mxu0 0
    %1552 = vmatpush1.bf16.msra.mxu0 0
    %1553 = vmatprep.subr.bf16.mxu0 0
    %1554 = vmatpush1.bf16.msra.mxu0 %v1535
    %1555 = vmatprep.subr.bf16.mxu0 0
    %1556 = vmatpush1.bf16.msra.mxu0 %v1534
    %1557 = vmatprep.subr.bf16.mxu0 0
    %1558 = vmatpush2.bf16.msra.mxu0 0
    %1559 = vmatprep.subr.bf16.mxu0 0
    %1560 = vmatpush2.bf16.msra.mxu0 0
    %1561 = vmatprep.subr.bf16.mxu0 0
    %1562 = vmatpush2.bf16.msra.mxu0 0
    %1563 = vmatprep.subr.bf16.mxu0 0
    %1564 = vmatpush2.bf16.msra.mxu0 0
    %1565 = vmatprep.subr.bf16.mxu0 0
    %1566 = vmatpush2.bf16.msra.mxu0 0
    %1567 = vmatprep.subr.bf16.mxu0 0
    %1568 = vmatpush2.bf16.msra.mxu0 0
    %1569 = vmatprep.subr.bf16.mxu0 0
    %1570 = vmatpush2.bf16.msra.mxu0 0
    %1571 = vmatprep.subr.bf16.mxu0 0
    %1572 = vmatpush2.bf16.msra.mxu0 0
    %1573 = vmatprep.mubr.bf16.mxu0 0
    %1574 = vmatmul.mubr.bf16.gmra.mxu0 %v1539
    %v1575 = vpop.f32.mrf.mxu0
    %v1576 = vadd.f32 %v1524, %v1575
    %v1577 = vpop.f32.mrf.mxu0
    %v1578 = vpop.f32.mrf.mxu0
    %v1579 = vadd.f32 %v1524, %v1578
    %v1580 = vpop.f32.mrf.mxu0
    %1581 = vdwg.mxu0
    %v1582 = vadd.f32 %v1576, %v85
    %v1583 = vadd.f32 %v1579, %v86
    %v1584 = vtanh.pop %v1582
    %v1585 = vtanh.pop %v1583
    %v1586 = vpack.c.bf16 %v1585, %v1584
    %v1587 = vld [vmem:[%s13] sm:$0xf]
    %v1588 = vld [vmem:[%s13 + $0x4] sm:$0xf]
    %v1589 = vld [vmem:[%s13 + $0x8] sm:$0xf]
    %v1590 = vld [vmem:[%s13 + $0xc] sm:$0xf]
    %v1591 = vld [vmem:[%s13 + $0x10] sm:$0xf]
    %v1592 = vld [vmem:[%s13 + $0x14] sm:$0xf]
    %v1593 = vld [vmem:[%s13 + $0x18] sm:$0xf]
    %v1594 = vld [vmem:[%s13 + $0x1c] sm:$0xf]
    %v1595 = vld [vmem:[%s13 + $0x20] sm:$0xf]
    %v1596 = vld [vmem:[%s13 + $0x24] sm:$0xf]
    %v1597 = vld [vmem:[%s13 + $0x28] sm:$0xf]
    %v1598 = vld [vmem:[%s13 + $0x2c] sm:$0xf]
    %v1599 = vld [vmem:[%s13 + $0x30] sm:$0xf]
    %v1600 = vld [vmem:[%s13 + $0x34] sm:$0xf]
    %v1601 = vld [vmem:[%s13 + $0x38] sm:$0xf]
    %v1602 = vld [vmem:[%s13 + $0x3c] sm:$0xf]
    %v1603 = vld [vmem:[%s14] sm:$0x1]
    %v1605 = vlaneseq
    %v1606 = vshrl.u32 %v1605, 7
    %v1607 = vsub.s32 0, %v1606
    %v1608 = vrot.slane %v1603, %v1607
    %v1626 = vunpack.c.l.b16 %v1587
    %v1627 = vunpack.c.l.b16 %v1588
    %v1628 = vunpack.c.l.b16 %v1589
    %v1629 = vunpack.c.l.b16 %v1590
    %v1630 = vunpack.c.l.b16 %v1591
    %v1631 = vunpack.c.l.b16 %v1592
    %v1632 = vunpack.c.l.b16 %v1593
    %v1633 = vunpack.c.l.b16 %v1594
    %v1634 = vunpack.c.l.b16 %v1595
    %v1635 = vunpack.c.l.b16 %v1596
    %v1636 = vunpack.c.l.b16 %v1597
    %v1637 = vunpack.c.l.b16 %v1598
    %v1638 = vunpack.c.l.b16 %v1599
    %v1639 = vunpack.c.l.b16 %v1600
    %v1640 = vunpack.c.l.b16 %v1601
    %v1641 = vunpack.c.l.b16 %v1602
    %v1642 = vpack.c.b16 %v1627, %v1626
    %v1643 = vpack.c.b16 %v1629, %v1628
    %v1644 = vpack.c.b16 %v1631, %v1630
    %v1645 = vpack.c.b16 %v1633, %v1632
    %v1646 = vpack.c.b16 %v1635, %v1634
    %v1647 = vpack.c.b16 %v1637, %v1636
    %v1648 = vpack.c.b16 %v1639, %v1638
    %v1649 = vpack.c.b16 %v1641, %v1640
    %1658 = vmatprep.subr.bf16.mxu0 0
    %1659 = vmatpush1.bf16.msra.mxu0 %v1649
    %1660 = vmatprep.subr.bf16.mxu0 0
    %1661 = vmatpush1.bf16.msra.mxu0 %v1648
    %1662 = vmatprep.subr.bf16.mxu0 0
    %1663 = vmatpush1.bf16.msra.mxu0 %v1647
    %1664 = vmatprep.subr.bf16.mxu0 0
    %1665 = vmatpush1.bf16.msra.mxu0 %v1646
    %1666 = vmatprep.subr.bf16.mxu0 0
    %1667 = vmatpush1.bf16.msra.mxu0 %v1645
    %1668 = vmatprep.subr.bf16.mxu0 0
    %1669 = vmatpush1.bf16.msra.mxu0 %v1644
    %1670 = vmatprep.subr.bf16.mxu0 0
    %1671 = vmatpush1.bf16.msra.mxu0 %v1643
    %1672 = vmatprep.subr.bf16.mxu0 0
    %1673 = vmatpush1.bf16.msra.mxu0 %v1642
    %1674 = vmatprep.subr.bf16.mxu0 0
    %1675 = vmatpush2.bf16.msra.mxu0 0
    %1676 = vmatprep.subr.bf16.mxu0 0
    %1677 = vmatpush2.bf16.msra.mxu0 0
    %1678 = vmatprep.subr.bf16.mxu0 0
    %1679 = vmatpush2.bf16.msra.mxu0 0
    %1680 = vmatprep.subr.bf16.mxu0 0
    %1681 = vmatpush2.bf16.msra.mxu0 0
    %1682 = vmatprep.subr.bf16.mxu0 0
    %1683 = vmatpush2.bf16.msra.mxu0 0
    %1684 = vmatprep.subr.bf16.mxu0 0
    %1685 = vmatpush2.bf16.msra.mxu0 0
    %1686 = vmatprep.subr.bf16.mxu0 0
    %1687 = vmatpush2.bf16.msra.mxu0 0
    %1688 = vmatprep.subr.bf16.mxu0 0
    %1689 = vmatpush2.bf16.msra.mxu0 0
    %1690 = vmatprep.mubr.bf16.mxu0 0
    %1691 = vmatmul.mubr.bf16.gmra.mxu0 %v1586
    %v1692 = vpop.f32.mrf.mxu0
    %v1693 = vadd.f32 %v1608, %v1692
    %v1694 = vpop.f32.mrf.mxu0
    %v1695 = vpop.f32.mrf.mxu0
    %v1696 = vadd.f32 %v1608, %v1695
    %v1697 = vpop.f32.mrf.mxu0
    %1698 = vdwg.mxu0
    %v1699 = vadd.f32 %v1468, %v1693
    %v1700 = vadd.f32 %v1469, %v1696
    %1701 = vst.msk [vmem:[#allocation7] sm:$0xff] %vm89, %v1699
    %1702 = vst.msk [vmem:[#allocation7 + $0x8] sm:$0xff] %vm89, %v1700
    %1703 = vst [vmem:[#allocation8] sm:$0xff] %v1584
    %1704 = vst [vmem:[#allocation8 + $0x8] sm:$0xff] %v1585
    // Predicated region
    $region70: #{tpu_custom_call.1} parent=1 // pred_check
      _
    $region71: #{tpu_custom_call.1} parent=1 // pred_check_branch
      %1706 = sbr.rel (0) target = $region73
    $region72: #{tpu_custom_call.1} parent=1 // pred_region
      %s1708 = ssub.s32 256, 256
      %1709 = vsyncadd [#allocation4], %s1708
      %s1710 = sshll.u32 [#allocation7], 4
      %s1711 = int_to_ptr.vmem [resolvable:$true] %s1710
      %1716 = dma.vmem_to_hbm [thread:$0]  %s1711, 256, %s15, [#allocation4], 128, 128, 8
    $region73: #{tpu_custom_call.1} parent=1 // pred_fallthru
      _
    // Predicated region
    $region74: #{tpu_custom_call.1} parent=1 // pred_check
      _
    $region75: #{tpu_custom_call.1} parent=1 // pred_check_branch
      %1718 = sbr.rel (0) target = $region77
    $region76: #{tpu_custom_call.1} parent=1 // pred_region
      %s1720 = ssub.s32 256, 256
      %1721 = vsyncadd [#allocation9], %s1720
      %s1722 = sshll.u32 [#allocation8], 4
      %s1723 = int_to_ptr.vmem [resolvable:$true] %s1722
      %1728 = dma.vmem_to_hbm [thread:$0]  %s1723, 256, %s16, [#allocation9], 128, 128, 8
    $region77: #{tpu_custom_call.1} parent=1 // pred_fallthru
      _
    // Predicated region
    $region78: #{tpu_custom_call.1} parent=1 // pred_check
      _
    $region79: #{tpu_custom_call.1} parent=1 // pred_check_branch
      %1730 = sbr.rel (0) target = $region81
    $region80: #{tpu_custom_call.1} parent=1 // pred_region
      %1731 = dma.done [#allocation4], 256
    $region81: #{tpu_custom_call.1} parent=1 // pred_fallthru
      _
    // Predicated region
    $region82: #{tpu_custom_call.1} parent=1 // pred_check
      _
    $region83: #{tpu_custom_call.1} parent=1 // pred_check_branch
      %1733 = sbr.rel (0) target = $region85
    $region84: #{tpu_custom_call.1} parent=1 // pred_region
      %1734 = dma.done [#allocation9], 256
    $region85: #{tpu_custom_call.1} parent=1 // pred_fallthru
      _
    %1735 = vsyncpa [#allocation3], 1
    %1736 = vsyncpa [#allocation6], 1
    %1737 = vsyncpa [#allocation4], 1
    %1738 = vsyncpa [#allocation9], 1

</llo_original>
